<compile_context>
chip_gen: v7x
topology: tpu7x:2x2x1
jax: 0.10.0
libtpu: 0.0.40
codegen_flags: <defaults>
</compile_context>

<pallas_src>
import functools

import jax
import jax.numpy as jnp
from jax import lax
from jax.experimental import pallas as pl
from jax.experimental.pallas import tpu as pltpu

LANE = 128      # lane width  (last dim)
SUBLANE = 8     # sublane width (second-to-last dim)


def _round_up(x, m):
    return (x + m - 1) // m * m


# ----------------------------- Pallas kernel ------------------------------ #

def _lstm_layer_kernel(x_ref, wih_ref, whh_ref, b_ref,
                       out_ref, hN_ref, cN_ref,
                       xp_scr, h_scr, c_scr):
    """One time-chunk of one LSTM layer (grid axis 0 = time chunks).

    x_ref:   [Tc, Bp, Dp]    padded input chunk
    wih_ref: [Dp, 4*Hp]      input->gates weight, gate order (i,f,o,g), padded
    whh_ref: [Hp, 4*Hp]      hidden->gates weight, same packing
    b_ref:   [1, 4*Hp]       fused bias (b_ih + b_hh), same packing
    out_ref: [Tc, Bp, Hp]    per-step hidden states (input to next layer)
    hN_ref, cN_ref: [Bp, Hp] final states (value after the last chunk is final)
    xp_scr:  [Tc, Bp, 4*Hp]  precomputed input projections for this chunk
    h_scr, c_scr: [Bp, Hp]   recurrence carry across grid steps
    """
    tc, bp, dp = x_ref.shape
    hp = h_scr.shape[-1]

    @pl.when(pl.program_id(0) == 0)
    def _():
        h_scr[...] = jnp.zeros_like(h_scr)
        c_scr[...] = jnp.zeros_like(c_scr)

    # Hoisted input projection: one big MXU matmul for the whole chunk,
    # bias folded in.  Only h @ W_hh remains inside the serial recurrence.
    x2d = x_ref[...].reshape(tc * bp, dp)
    xp = jnp.dot(x2d, wih_ref[...], preferred_element_type=jnp.float32) + b_ref[...]
    xp_scr[...] = xp.reshape(tc, bp, 4 * hp)

    def step(t, carry):
        h, c = carry
        gates = xp_scr[t] + jnp.dot(h, whh_ref[...],
                                    preferred_element_type=jnp.float32)
        # Gate layout (i, f, o, g): one sigmoid over the first 3*Hp lanes,
        # one tanh over the last Hp lanes -- all slices 128-lane aligned.
        sig = jax.nn.sigmoid(gates[:, :3 * hp])
        g_g = jnp.tanh(gates[:, 3 * hp:])
        i_g = sig[:, 0 * hp:1 * hp]
        f_g = sig[:, 1 * hp:2 * hp]
        o_g = sig[:, 2 * hp:3 * hp]
        c = f_g * c + i_g * g_g
        h = o_g * jnp.tanh(c)
        out_ref[t] = h
        return h, c

    h, c = lax.fori_loop(0, tc, step, (h_scr[...], c_scr[...]), unroll=True)
    h_scr[...] = h
    c_scr[...] = c
    hN_ref[...] = h
    cN_ref[...] = c


def lstm_layer_pallas(x_seq, w_ih_p, w_hh_p, b_p, *, time_chunk=32):
    """Run one LSTM layer. Inputs are already padded / gate-repacked.

    x_seq:  [T, Bp, Dp] float32
    w_ih_p: [Dp, 4*Hp], w_hh_p: [Hp, 4*Hp], b_p: [1, 4*Hp]
    Returns (out [T, Bp, Hp], h_n [Bp, Hp], c_n [Bp, Hp]).
    """
    T, Bp, Dp = x_seq.shape
    Hp = w_hh_p.shape[0]

    # Largest divisor of T not exceeding time_chunk (keeps the grid exact).
    tc = max(d for d in range(1, min(time_chunk, T) + 1) if T % d == 0)
    grid = (T // tc,)

    out_shapes = (
        jax.ShapeDtypeStruct((T, Bp, Hp), jnp.float32),   # per-step outputs
        jax.ShapeDtypeStruct((Bp, Hp), jnp.float32),      # final hidden
        jax.ShapeDtypeStruct((Bp, Hp), jnp.float32),      # final cell
    )
    return pl.pallas_call(
        _lstm_layer_kernel,
        out_shape=out_shapes,
        grid_spec=pltpu.PrefetchScalarGridSpec(
            num_scalar_prefetch=0,
            grid=grid,
            in_specs=[
                pl.BlockSpec((tc, Bp, Dp), lambda t: (t, 0, 0)),
                pl.BlockSpec((Dp, 4 * Hp), lambda t: (0, 0)),
                pl.BlockSpec((Hp, 4 * Hp), lambda t: (0, 0)),
                pl.BlockSpec((1, 4 * Hp), lambda t: (0, 0)),
            ],
            out_specs=(
                pl.BlockSpec((tc, Bp, Hp), lambda t: (t, 0, 0)),
                pl.BlockSpec((Bp, Hp), lambda t: (0, 0)),
                pl.BlockSpec((Bp, Hp), lambda t: (0, 0)),
            ),
            scratch_shapes=[
                pltpu.VMEM((tc, Bp, 4 * Hp), jnp.float32),   # x-projection chunk
                pltpu.VMEM((Bp, Hp), jnp.float32),           # h carry
                pltpu.VMEM((Bp, Hp), jnp.float32),           # c carry
            ],
        ),
        compiler_params=pltpu.CompilerParams(
            dimension_semantics=("arbitrary",),              # time is sequential
            vmem_limit_bytes=32 * 1024 * 1024,               # safe on v5e/v6e/v7x
        ),
    )(x_seq, w_ih_p, w_hh_p, b_p)


# --------------------------- weight packing glue --------------------------- #

def _pack_gates(m, h, h_pad):
    """[..., 4H] in PyTorch (i,f,g,o) order -> [..., 4*h_pad] in (i,f,o,g),
    each gate block zero-padded from h to h_pad columns."""
    i = m[..., 0 * h:1 * h]
    f = m[..., 1 * h:2 * h]
    g = m[..., 2 * h:3 * h]
    o = m[..., 3 * h:4 * h]
    pad = [(0, 0)] * (m.ndim - 1) + [(0, h_pad - h)]
    return jnp.concatenate(
        [jnp.pad(i, pad), jnp.pad(f, pad), jnp.pad(o, pad), jnp.pad(g, pad)],
        axis=-1)


def pack_layer_params(lp, d_in, d_pad, h, h_pad):
    """Produce padded, gate-reordered kernel weights from PyTorch-style params."""
    w_ih_p = _pack_gates(lp["w_ih"], h, h_pad)                  # [d_in, 4*h_pad]
    w_ih_p = jnp.pad(w_ih_p, ((0, d_pad - d_in), (0, 0)))       # [d_pad, 4*h_pad]
    w_hh_p = _pack_gates(lp["w_hh"], h, h_pad)                  # [h, 4*h_pad]
    w_hh_p = jnp.pad(w_hh_p, ((0, h_pad - h), (0, 0)))          # [h_pad, 4*h_pad]
    b = (lp["b_ih"] + lp["b_hh"]).reshape(1, 4 * h)
    b_p = _pack_gates(b, h, h_pad)                              # [1, 4*h_pad]
    return w_ih_p, w_hh_p, b_p


# ------------------------------ Encoder glue ------------------------------ #

def init_encoder_params(key, input_dim, emb_dim, hid_dim, n_layers):
    """Deterministic parameter init; shapes mirror nn.Embedding / nn.LSTM
    (weights kept transposed: w_ih [d_in, 4H], w_hh [H, 4H], gate order i,f,g,o)."""
    params = {}
    key, k_emb = jax.random.split(key)
    params["embedding"] = 0.1 * jax.random.normal(
        k_emb, (input_dim, emb_dim), dtype=jnp.float32)

    layers = []
    for layer in range(n_layers):
        d_in = emb_dim if layer == 0 else hid_dim
        key, k1, k2, k3, k4 = jax.random.split(key, 5)
        layers.append({
            "w_ih": 0.1 * jax.random.normal(k1, (d_in, 4 * hid_dim), jnp.float32),
            "w_hh": 0.1 * jax.random.normal(k2, (hid_dim, 4 * hid_dim), jnp.float32),
            "b_ih": 0.1 * jax.random.normal(k3, (4 * hid_dim,), jnp.float32),
            "b_hh": 0.1 * jax.random.normal(k4, (4 * hid_dim,), jnp.float32),
        })
    params["layers"] = layers
    return params


def encoder_forward(params, src, *, time_chunk=32):
    """src: [T, B] int32 token ids -> (hidden, cell), each [n_layers, B, H]."""
    emb = params["embedding"]
    layers = params["layers"]
    emb_dim = emb.shape[1]
    H = layers[0]["w_hh"].shape[0]

    T, B = src.shape
    Bp = _round_up(B, SUBLANE)
    Hp = _round_up(H, LANE)
    Dp0 = _round_up(emb_dim, LANE)

    embedded = emb[src]                                   # [T, B, emb] (glue gather)
    # TODO(synk): dropout == identity (eval mode).
    x = jnp.pad(embedded, ((0, 0), (0, Bp - B), (0, Dp0 - emb_dim)))

    h_finals, c_finals = [], []
    for li, lp in enumerate(layers):
        d_in = emb_dim if li == 0 else H
        d_pad = Dp0 if li == 0 else Hp
        w_ih_p, w_hh_p, b_p = pack_layer_params(lp, d_in, d_pad, H, Hp)
        x, h_n, c_n = lstm_layer_pallas(x, w_ih_p, w_hh_p, b_p,
                                        time_chunk=time_chunk)
        h_finals.append(h_n[:B, :H])
        c_finals.append(c_n[:B, :H])
    return jnp.stack(h_finals, axis=0), jnp.stack(c_finals, axis=0)


# --------------------------- pure-JAX reference ---------------------------- #

def encoder_reference(params, src):
    embedded = params["embedding"][src]
    x = embedded
    T, B, _ = x.shape
    H = params["layers"][0]["w_hh"].shape[0]
    h_finals, c_finals = [], []
    for lp in params["layers"]:
        b = lp["b_ih"] + lp["b_hh"]
        h = jnp.zeros((B, H), jnp.float32)
        c = jnp.zeros((B, H), jnp.float32)
        outs = []
        for t in range(T):
            gates = x[t] @ lp["w_ih"] + h @ lp["w_hh"] + b
            i_g = jax.nn.sigmoid(gates[:, 0 * H:1 * H])
            f_g = jax.nn.sigmoid(gates[:, 1 * H:2 * H])
            g_g = jnp.tanh(gates[:, 2 * H:3 * H])
            o_g = jax.nn.sigmoid(gates[:, 3 * H:4 * H])
            c = f_g * c + i_g * g_g
            h = o_g * jnp.tanh(c)
            outs.append(h)
        x = jnp.stack(outs, axis=0)
        h_finals.append(h)
        c_finals.append(c)
    return jnp.stack(h_finals, 0), jnp.stack(c_finals, 0)


# ---------------------------------- main ----------------------------------- #

if __name__ == "__main__":
    input_dim = 50      # vocab size
    emb_dim = 32
    hid_dim = 32
    n_layers = 2
    seq_len = 8
    batch = 2

    key = jax.random.PRNGKey(0)
    key, k_src = jax.random.split(key)
    src = jax.random.randint(k_src, (seq_len, batch), 0, input_dim, dtype=jnp.int32)

    params = init_encoder_params(key, input_dim, emb_dim, hid_dim, n_layers)

    fwd = jax.jit(functools.partial(encoder_forward, time_chunk=4))
    hidden, cell = fwd(params, src)
    jax.block_until_ready((hidden, cell))

    # Sanity check against pure-JAX reference.
    h_ref, c_ref = encoder_reference(params, src)
    assert hidden.shape == (n_layers, batch, hid_dim)
    assert cell.shape == (n_layers, batch, hid_dim)
    assert jnp.allclose(hidden, h_ref, rtol=1e-4, atol=1e-4)
    assert jnp.allclose(cell, c_ref, rtol=1e-4, atol=1e-4)

    print("KERNEL_OK")
</pallas_src>

<mosaic_0001>
module attributes {stable_mosaic.version = 11 : i64} {
  func.func @_lstm_layer_kernel(%arg0: i32, %arg1: memref<4x8x128xf32, #tpu.memory_space<vmem>>, %arg2: memref<128x512xf32, #tpu.memory_space<vmem>>, %arg3: memref<128x512xf32, #tpu.memory_space<vmem>>, %arg4: memref<1x512xf32, #tpu.memory_space<vmem>>, %arg5: memref<4x8x128xf32, #tpu.memory_space<vmem>>, %arg6: memref<8x128xf32, #tpu.memory_space<vmem>>, %arg7: memref<8x128xf32, #tpu.memory_space<vmem>>, %arg8: memref<4x8x512xf32, #tpu.memory_space<vmem>>, %arg9: memref<8x128xf32, #tpu.memory_space<vmem>>, %arg10: memref<8x128xf32, #tpu.memory_space<vmem>>) attributes {dimension_semantics = [#tpu.dimension_semantics<arbitrary>], iteration_bounds = array<i64: 2>, scalar_prefetch = 0 : i64, scratch_operands = 3 : i64, tpu.core_type = #tpu.core_type<tc>, window_params = [{transform_indices = @transform_0, window_bounds = array<i64: 4, 8, 128>}, {pipeline_mode = #tpu.pipeline_mode<synchronous>, transform_indices = @transform_1, window_bounds = array<i64: 128, 512>}, {pipeline_mode = #tpu.pipeline_mode<synchronous>, transform_indices = @transform_2, window_bounds = array<i64: 128, 512>}, {pipeline_mode = #tpu.pipeline_mode<synchronous>, transform_indices = @transform_3, window_bounds = array<i64: 1, 512>}, {transform_indices = @transform_4, window_bounds = array<i64: 4, 8, 128>}, {pipeline_mode = #tpu.pipeline_mode<synchronous>, transform_indices = @transform_5, window_bounds = array<i64: 8, 128>}, {pipeline_mode = #tpu.pipeline_mode<synchronous>, transform_indices = @transform_6, window_bounds = array<i64: 8, 128>}]} {
    %c0_i32 = arith.constant 0 : i32
    %0 = arith.cmpi eq, %arg0, %c0_i32 : i32
    %1 = arith.extui %0 : i1 to i32
    %c0_i32_0 = arith.constant 0 : i32
    %2 = arith.cmpi ne, %1, %c0_i32_0 : i32
    scf.if %2 {
      %cst_55 = arith.constant 0.000000e+00 : f32
      %122 = vector.broadcast %cst_55 : f32 to vector<8x128xf32>
      %c0_56 = arith.constant 0 : index
      %c0_57 = arith.constant 0 : index
      %123 = vector.load %arg9[%c0_56, %c0_57] : memref<8x128xf32, #tpu.memory_space<vmem>>, vector<8x128xf32>
      tpu.vector_store %arg9[%c0_56, %c0_57], %122 {strides = array<i32>} : memref<8x128xf32, #tpu.memory_space<vmem>>, vector<8x128xf32>,
      %cst_58 = arith.constant 0.000000e+00 : f32
      %124 = vector.broadcast %cst_58 : f32 to vector<8x128xf32>
      %c0_59 = arith.constant 0 : index
      %c0_60 = arith.constant 0 : index
      %125 = vector.load %arg10[%c0_59, %c0_60] : memref<8x128xf32, #tpu.memory_space<vmem>>, vector<8x128xf32>
      tpu.vector_store %arg10[%c0_59, %c0_60], %124 {strides = array<i32>} : memref<8x128xf32, #tpu.memory_space<vmem>>, vector<8x128xf32>,
    } else {
    }
    %c0 = arith.constant 0 : index
    %c0_1 = arith.constant 0 : index
    %c0_2 = arith.constant 0 : index
    %3 = vector.load %arg1[%c0, %c0_1, %c0_2] : memref<4x8x128xf32, #tpu.memory_space<vmem>>, vector<4x8x128xf32>
    %4 = vector.shape_cast %3 : vector<4x8x128xf32> to vector<32x128xf32>
    %c0_3 = arith.constant 0 : index
    %c0_4 = arith.constant 0 : index
    %5 = vector.load %arg2[%c0_3, %c0_4] : memref<128x512xf32, #tpu.memory_space<vmem>>, vector<128x512xf32>
    %cst = arith.constant dense<0.000000e+00> : vector<32x512xf32>
    %6 = tpu.matmul %4, %5, %cst {dimension_numbers = #tpu.dot_dimension_numbers<[1], [0], [0], [1], [0, 0, 1, 1], [], []>} : vector<32x128xf32>, vector<128x512xf32>, vector<32x512xf32> -> vector<32x512xf32>
    %c0_5 = arith.constant 0 : index
    %c0_6 = arith.constant 0 : index
    %7 = vector.load %arg4[%c0_5, %c0_6] : memref<1x512xf32, #tpu.memory_space<vmem>>, vector<1x512xf32>
    %8 = vector.broadcast %7 : vector<1x512xf32> to vector<32x512xf32>
    %9 = arith.addf %6, %8 : vector<32x512xf32>
    %10 = vector.shape_cast %9 : vector<32x512xf32> to vector<4x8x512xf32>
    %c0_7 = arith.constant 0 : index
    %c0_8 = arith.constant 0 : index
    %c0_9 = arith.constant 0 : index
    %11 = vector.load %arg8[%c0_7, %c0_8, %c0_9] : memref<4x8x512xf32, #tpu.memory_space<vmem>>, vector<4x8x512xf32>
    tpu.vector_store %arg8[%c0_7, %c0_8, %c0_9], %10 {strides = array<i32>} : memref<4x8x512xf32, #tpu.memory_space<vmem>>, vector<4x8x512xf32>,
    %c0_10 = arith.constant 0 : index
    %c0_11 = arith.constant 0 : index
    %12 = vector.load %arg9[%c0_10, %c0_11] : memref<8x128xf32, #tpu.memory_space<vmem>>, vector<8x128xf32>
    %c0_12 = arith.constant 0 : index
    %c0_13 = arith.constant 0 : index
    %13 = vector.load %arg10[%c0_12, %c0_13] : memref<8x128xf32, #tpu.memory_space<vmem>>, vector<8x128xf32>
    %c0_i32_14 = arith.constant 0 : i32
    %14 = arith.index_cast %c0_i32_14 : i32 to index
    %c0_15 = arith.constant 0 : index
    %c0_16 = arith.constant 0 : index
    %15 = vector.load %arg8[%14, %c0_15, %c0_16] : memref<4x8x512xf32, #tpu.memory_space<vmem>>, vector<1x8x512xf32>
    %16 = vector.shape_cast %15 : vector<1x8x512xf32> to vector<8x512xf32>
    %c0_17 = arith.constant 0 : index
    %c0_18 = arith.constant 0 : index
    %17 = vector.load %arg3[%c0_17, %c0_18] : memref<128x512xf32, #tpu.memory_space<vmem>>, vector<128x512xf32>
    %cst_19 = arith.constant dense<0.000000e+00> : vector<8x512xf32>
    %18 = tpu.matmul %12, %17, %cst_19 {dimension_numbers = #tpu.dot_dimension_numbers<[1], [0], [0], [1], [0, 0, 1, 1], [], []>} : vector<8x128xf32>, vector<128x512xf32>, vector<8x512xf32> -> vector<8x512xf32>
    %19 = arith.addf %16, %18 : vector<8x512xf32>
    %20 = vector.extract_strided_slice %19 {offsets = [0, 0], sizes = [8, 384], strides = [1, 1]} : vector<8x512xf32> to vector<8x384xf32>
    %21 = arith.negf %20 : vector<8x384xf32>
    %22 = math.exp %21 : vector<8x384xf32>
    %cst_20 = arith.constant 1.000000e+00 : f32
    %23 = vector.broadcast %cst_20 : f32 to vector<8x384xf32>
    %24 = arith.addf %23, %22 : vector<8x384xf32>
    %25 = arith.divf %23, %24 : vector<8x384xf32>
    %26 = vector.extract_strided_slice %19 {offsets = [0, 384], sizes = [8, 128], strides = [1, 1]} : vector<8x512xf32> to vector<8x128xf32>
    %27 = math.tanh %26 : vector<8x128xf32>
    %28 = vector.extract_strided_slice %25 {offsets = [0, 0], sizes = [8, 128], strides = [1, 1]} : vector<8x384xf32> to vector<8x128xf32>
    %29 = vector.extract_strided_slice %25 {offsets = [0, 128], sizes = [8, 128], strides = [1, 1]} : vector<8x384xf32> to vector<8x128xf32>
    %30 = vector.extract_strided_slice %25 {offsets = [0, 256], sizes = [8, 128], strides = [1, 1]} : vector<8x384xf32> to vector<8x128xf32>
    %31 = arith.mulf %29, %13 : vector<8x128xf32>
    %32 = arith.mulf %28, %27 : vector<8x128xf32>
    %33 = arith.addf %31, %32 : vector<8x128xf32>
    %34 = math.tanh %33 : vector<8x128xf32>
    %35 = arith.mulf %30, %34 : vector<8x128xf32>
    %36 = arith.index_cast %c0_i32_14 : i32 to index
    %c0_21 = arith.constant 0 : index
    %c0_22 = arith.constant 0 : index
    %37 = vector.load %arg5[%36, %c0_21, %c0_22] : memref<4x8x128xf32, #tpu.memory_space<vmem>>, vector<1x8x128xf32>
    %38 = vector.shape_cast %37 : vector<1x8x128xf32> to vector<8x128xf32>
    %39 = vector.shape_cast %35 : vector<8x128xf32> to vector<1x8x128xf32>
    tpu.vector_store %arg5[%36, %c0_21, %c0_22], %39 {strides = array<i32>} : memref<4x8x128xf32, #tpu.memory_space<vmem>>, vector<1x8x128xf32>,
    %c1_i32 = arith.constant 1 : i32
    %40 = arith.index_cast %c1_i32 : i32 to index
    %c0_23 = arith.constant 0 : index
    %c0_24 = arith.constant 0 : index
    %41 = vector.load %arg8[%40, %c0_23, %c0_24] : memref<4x8x512xf32, #tpu.memory_space<vmem>>, vector<1x8x512xf32>
    %42 = vector.shape_cast %41 : vector<1x8x512xf32> to vector<8x512xf32>
    %c0_25 = arith.constant 0 : index
    %c0_26 = arith.constant 0 : index
    %43 = vector.load %arg3[%c0_25, %c0_26] : memref<128x512xf32, #tpu.memory_space<vmem>>, vector<128x512xf32>
    %cst_27 = arith.constant dense<0.000000e+00> : vector<8x512xf32>
    %44 = tpu.matmul %35, %43, %cst_27 {dimension_numbers = #tpu.dot_dimension_numbers<[1], [0], [0], [1], [0, 0, 1, 1], [], []>} : vector<8x128xf32>, vector<128x512xf32>, vector<8x512xf32> -> vector<8x512xf32>
    %45 = arith.addf %42, %44 : vector<8x512xf32>
    %46 = vector.extract_strided_slice %45 {offsets = [0, 0], sizes = [8, 384], strides = [1, 1]} : vector<8x512xf32> to vector<8x384xf32>
    %47 = arith.negf %46 : vector<8x384xf32>
    %48 = math.exp %47 : vector<8x384xf32>
    %cst_28 = arith.constant 1.000000e+00 : f32
    %49 = vector.broadcast %cst_28 : f32 to vector<8x384xf32>
    %50 = arith.addf %49, %48 : vector<8x384xf32>
    %51 = arith.divf %49, %50 : vector<8x384xf32>
    %52 = vector.extract_strided_slice %45 {offsets = [0, 384], sizes = [8, 128], strides = [1, 1]} : vector<8x512xf32> to vector<8x128xf32>
    %53 = math.tanh %52 : vector<8x128xf32>
    %54 = vector.extract_strided_slice %51 {offsets = [0, 0], sizes = [8, 128], strides = [1, 1]} : vector<8x384xf32> to vector<8x128xf32>
    %55 = vector.extract_strided_slice %51 {offsets = [0, 128], sizes = [8, 128], strides = [1, 1]} : vector<8x384xf32> to vector<8x128xf32>
    %56 = vector.extract_strided_slice %51 {offsets = [0, 256], sizes = [8, 128], strides = [1, 1]} : vector<8x384xf32> to vector<8x128xf32>
    %57 = arith.mulf %55, %33 : vector<8x128xf32>
    %58 = arith.mulf %54, %53 : vector<8x128xf32>
    %59 = arith.addf %57, %58 : vector<8x128xf32>
    %60 = math.tanh %59 : vector<8x128xf32>
    %61 = arith.mulf %56, %60 : vector<8x128xf32>
    %62 = arith.index_cast %c1_i32 : i32 to index
    %c0_29 = arith.constant 0 : index
    %c0_30 = arith.constant 0 : index
    %63 = vector.load %arg5[%62, %c0_29, %c0_30] : memref<4x8x128xf32, #tpu.memory_space<vmem>>, vector<1x8x128xf32>
    %64 = vector.shape_cast %63 : vector<1x8x128xf32> to vector<8x128xf32>
    %65 = vector.shape_cast %61 : vector<8x128xf32> to vector<1x8x128xf32>
    tpu.vector_store %arg5[%62, %c0_29, %c0_30], %65 {strides = array<i32>} : memref<4x8x128xf32, #tpu.memory_space<vmem>>, vector<1x8x128xf32>,
    %c2_i32 = arith.constant 2 : i32
    %66 = arith.index_cast %c2_i32 : i32 to index
    %c0_31 = arith.constant 0 : index
    %c0_32 = arith.constant 0 : index
    %67 = vector.load %arg8[%66, %c0_31, %c0_32] : memref<4x8x512xf32, #tpu.memory_space<vmem>>, vector<1x8x512xf32>
    %68 = vector.shape_cast %67 : vector<1x8x512xf32> to vector<8x512xf32>
    %c0_33 = arith.constant 0 : index
    %c0_34 = arith.constant 0 : index
    %69 = vector.load %arg3[%c0_33, %c0_34] : memref<128x512xf32, #tpu.memory_space<vmem>>, vector<128x512xf32>
    %cst_35 = arith.constant dense<0.000000e+00> : vector<8x512xf32>
    %70 = tpu.matmul %61, %69, %cst_35 {dimension_numbers = #tpu.dot_dimension_numbers<[1], [0], [0], [1], [0, 0, 1, 1], [], []>} : vector<8x128xf32>, vector<128x512xf32>, vector<8x512xf32> -> vector<8x512xf32>
    %71 = arith.addf %68, %70 : vector<8x512xf32>
    %72 = vector.extract_strided_slice %71 {offsets = [0, 0], sizes = [8, 384], strides = [1, 1]} : vector<8x512xf32> to vector<8x384xf32>
    %73 = arith.negf %72 : vector<8x384xf32>
    %74 = math.exp %73 : vector<8x384xf32>
    %cst_36 = arith.constant 1.000000e+00 : f32
    %75 = vector.broadcast %cst_36 : f32 to vector<8x384xf32>
    %76 = arith.addf %75, %74 : vector<8x384xf32>
    %77 = arith.divf %75, %76 : vector<8x384xf32>
    %78 = vector.extract_strided_slice %71 {offsets = [0, 384], sizes = [8, 128], strides = [1, 1]} : vector<8x512xf32> to vector<8x128xf32>
    %79 = math.tanh %78 : vector<8x128xf32>
    %80 = vector.extract_strided_slice %77 {offsets = [0, 0], sizes = [8, 128], strides = [1, 1]} : vector<8x384xf32> to vector<8x128xf32>
    %81 = vector.extract_strided_slice %77 {offsets = [0, 128], sizes = [8, 128], strides = [1, 1]} : vector<8x384xf32> to vector<8x128xf32>
    %82 = vector.extract_strided_slice %77 {offsets = [0, 256], sizes = [8, 128], strides = [1, 1]} : vector<8x384xf32> to vector<8x128xf32>
    %83 = arith.mulf %81, %59 : vector<8x128xf32>
    %84 = arith.mulf %80, %79 : vector<8x128xf32>
    %85 = arith.addf %83, %84 : vector<8x128xf32>
    %86 = math.tanh %85 : vector<8x128xf32>
    %87 = arith.mulf %82, %86 : vector<8x128xf32>
    %88 = arith.index_cast %c2_i32 : i32 to index
    %c0_37 = arith.constant 0 : index
    %c0_38 = arith.constant 0 : index
    %89 = vector.load %arg5[%88, %c0_37, %c0_38] : memref<4x8x128xf32, #tpu.memory_space<vmem>>, vector<1x8x128xf32>
    %90 = vector.shape_cast %89 : vector<1x8x128xf32> to vector<8x128xf32>
    %91 = vector.shape_cast %87 : vector<8x128xf32> to vector<1x8x128xf32>
    tpu.vector_store %arg5[%88, %c0_37, %c0_38], %91 {strides = array<i32>} : memref<4x8x128xf32, #tpu.memory_space<vmem>>, vector<1x8x128xf32>,
    %c3_i32 = arith.constant 3 : i32
    %92 = arith.index_cast %c3_i32 : i32 to index
    %c0_39 = arith.constant 0 : index
    %c0_40 = arith.constant 0 : index
    %93 = vector.load %arg8[%92, %c0_39, %c0_40] : memref<4x8x512xf32, #tpu.memory_space<vmem>>, vector<1x8x512xf32>
    %94 = vector.shape_cast %93 : vector<1x8x512xf32> to vector<8x512xf32>
    %c0_41 = arith.constant 0 : index
    %c0_42 = arith.constant 0 : index
    %95 = vector.load %arg3[%c0_41, %c0_42] : memref<128x512xf32, #tpu.memory_space<vmem>>, vector<128x512xf32>
    %cst_43 = arith.constant dense<0.000000e+00> : vector<8x512xf32>
    %96 = tpu.matmul %87, %95, %cst_43 {dimension_numbers = #tpu.dot_dimension_numbers<[1], [0], [0], [1], [0, 0, 1, 1], [], []>} : vector<8x128xf32>, vector<128x512xf32>, vector<8x512xf32> -> vector<8x512xf32>
    %97 = arith.addf %94, %96 : vector<8x512xf32>
    %98 = vector.extract_strided_slice %97 {offsets = [0, 0], sizes = [8, 384], strides = [1, 1]} : vector<8x512xf32> to vector<8x384xf32>
    %99 = arith.negf %98 : vector<8x384xf32>
    %100 = math.exp %99 : vector<8x384xf32>
    %cst_44 = arith.constant 1.000000e+00 : f32
    %101 = vector.broadcast %cst_44 : f32 to vector<8x384xf32>
    %102 = arith.addf %101, %100 : vector<8x384xf32>
    %103 = arith.divf %101, %102 : vector<8x384xf32>
    %104 = vector.extract_strided_slice %97 {offsets = [0, 384], sizes = [8, 128], strides = [1, 1]} : vector<8x512xf32> to vector<8x128xf32>
    %105 = math.tanh %104 : vector<8x128xf32>
    %106 = vector.extract_strided_slice %103 {offsets = [0, 0], sizes = [8, 128], strides = [1, 1]} : vector<8x384xf32> to vector<8x128xf32>
    %107 = vector.extract_strided_slice %103 {offsets = [0, 128], sizes = [8, 128], strides = [1, 1]} : vector<8x384xf32> to vector<8x128xf32>
    %108 = vector.extract_strided_slice %103 {offsets = [0, 256], sizes = [8, 128], strides = [1, 1]} : vector<8x384xf32> to vector<8x128xf32>
    %109 = arith.mulf %107, %85 : vector<8x128xf32>
    %110 = arith.mulf %106, %105 : vector<8x128xf32>
    %111 = arith.addf %109, %110 : vector<8x128xf32>
    %112 = math.tanh %111 : vector<8x128xf32>
    %113 = arith.mulf %108, %112 : vector<8x128xf32>
    %114 = arith.index_cast %c3_i32 : i32 to index
    %c0_45 = arith.constant 0 : index
    %c0_46 = arith.constant 0 : index
    %115 = vector.load %arg5[%114, %c0_45, %c0_46] : memref<4x8x128xf32, #tpu.memory_space<vmem>>, vector<1x8x128xf32>
    %116 = vector.shape_cast %115 : vector<1x8x128xf32> to vector<8x128xf32>
    %117 = vector.shape_cast %113 : vector<8x128xf32> to vector<1x8x128xf32>
    tpu.vector_store %arg5[%114, %c0_45, %c0_46], %117 {strides = array<i32>} : memref<4x8x128xf32, #tpu.memory_space<vmem>>, vector<1x8x128xf32>,
    %c4_i32 = arith.constant 4 : i32
    %c0_47 = arith.constant 0 : index
    %c0_48 = arith.constant 0 : index
    %118 = vector.load %arg9[%c0_47, %c0_48] : memref<8x128xf32, #tpu.memory_space<vmem>>, vector<8x128xf32>
    tpu.vector_store %arg9[%c0_47, %c0_48], %113 {strides = array<i32>} : memref<8x128xf32, #tpu.memory_space<vmem>>, vector<8x128xf32>,
    %c0_49 = arith.constant 0 : index
    %c0_50 = arith.constant 0 : index
    %119 = vector.load %arg10[%c0_49, %c0_50] : memref<8x128xf32, #tpu.memory_space<vmem>>, vector<8x128xf32>
    tpu.vector_store %arg10[%c0_49, %c0_50], %111 {strides = array<i32>} : memref<8x128xf32, #tpu.memory_space<vmem>>, vector<8x128xf32>,
    %c0_51 = arith.constant 0 : index
    %c0_52 = arith.constant 0 : index
    %120 = vector.load %arg6[%c0_51, %c0_52] : memref<8x128xf32, #tpu.memory_space<vmem>>, vector<8x128xf32>
    tpu.vector_store %arg6[%c0_51, %c0_52], %113 {strides = array<i32>} : memref<8x128xf32, #tpu.memory_space<vmem>>, vector<8x128xf32>,
    %c0_53 = arith.constant 0 : index
    %c0_54 = arith.constant 0 : index
    %121 = vector.load %arg7[%c0_53, %c0_54] : memref<8x128xf32, #tpu.memory_space<vmem>>, vector<8x128xf32>
    tpu.vector_store %arg7[%c0_53, %c0_54], %111 {strides = array<i32>} : memref<8x128xf32, #tpu.memory_space<vmem>>, vector<8x128xf32>,
    return
  }
  func.func @transform_0(%arg0: i32) -> (i32, i32, i32) {
    %c0_i32 = arith.constant 0 : i32
    %c0_i32_0 = arith.constant 0 : i32
    %c0_i32_1 = arith.constant 0 : i32
    return %arg0, %c0_i32, %c0_i32_0 : i32, i32, i32
  }
  func.func @transform_1(%arg0: i32) -> (i32, i32) {
    %c0_i32 = arith.constant 0 : i32
    %c0_i32_0 = arith.constant 0 : i32
    %c0_i32_1 = arith.constant 0 : i32
    return %c0_i32, %c0_i32_0 : i32, i32
  }
  func.func @transform_2(%arg0: i32) -> (i32, i32) {
    %c0_i32 = arith.constant 0 : i32
    %c0_i32_0 = arith.constant 0 : i32
    %c0_i32_1 = arith.constant 0 : i32
    return %c0_i32, %c0_i32_0 : i32, i32
  }
  func.func @transform_3(%arg0: i32) -> (i32, i32) {
    %c0_i32 = arith.constant 0 : i32
    %c0_i32_0 = arith.constant 0 : i32
    %c0_i32_1 = arith.constant 0 : i32
    return %c0_i32, %c0_i32_0 : i32, i32
  }
  func.func @transform_4(%arg0: i32) -> (i32, i32, i32) {
    %c0_i32 = arith.constant 0 : i32
    %c0_i32_0 = arith.constant 0 : i32
    %c0_i32_1 = arith.constant 0 : i32
    return %arg0, %c0_i32, %c0_i32_0 : i32, i32, i32
  }
  func.func @transform_5(%arg0: i32) -> (i32, i32) {
    %c0_i32 = arith.constant 0 : i32
    %c0_i32_0 = arith.constant 0 : i32
    %c0_i32_1 = arith.constant 0 : i32
    return %c0_i32, %c0_i32_0 : i32, i32
  }
  func.func @transform_6(%arg0: i32) -> (i32, i32) {
    %c0_i32 = arith.constant 0 : i32
    %c0_i32_0 = arith.constant 0 : i32
    %c0_i32_1 = arith.constant 0 : i32
    return %c0_i32, %c0_i32_0 : i32, i32
  }
}

module attributes {stable_mosaic.version = 11 : i64} {
  func.func @_lstm_layer_kernel(%arg0: i32, %arg1: memref<4x8x128xf32, #tpu.memory_space<vmem>>, %arg2: memref<128x512xf32, #tpu.memory_space<vmem>>, %arg3: memref<128x512xf32, #tpu.memory_space<vmem>>, %arg4: memref<1x512xf32, #tpu.memory_space<vmem>>, %arg5: memref<4x8x128xf32, #tpu.memory_space<vmem>>, %arg6: memref<8x128xf32, #tpu.memory_space<vmem>>, %arg7: memref<8x128xf32, #tpu.memory_space<vmem>>, %arg8: memref<4x8x512xf32, #tpu.memory_space<vmem>>, %arg9: memref<8x128xf32, #tpu.memory_space<vmem>>, %arg10: memref<8x128xf32, #tpu.memory_space<vmem>>) attributes {dimension_semantics = [#tpu.dimension_semantics<arbitrary>], iteration_bounds = array<i64: 2>, scalar_prefetch = 0 : i64, scratch_operands = 3 : i64, tpu.core_type = #tpu.core_type<tc>, window_params = [{transform_indices = @transform_0, window_bounds = array<i64: 4, 8, 128>}, {pipeline_mode = #tpu.pipeline_mode<synchronous>, transform_indices = @transform_1, window_bounds = array<i64: 128, 512>}, {pipeline_mode = #tpu.pipeline_mode<synchronous>, transform_indices = @transform_2, window_bounds = array<i64: 128, 512>}, {pipeline_mode = #tpu.pipeline_mode<synchronous>, transform_indices = @transform_3, window_bounds = array<i64: 1, 512>}, {transform_indices = @transform_4, window_bounds = array<i64: 4, 8, 128>}, {pipeline_mode = #tpu.pipeline_mode<synchronous>, transform_indices = @transform_5, window_bounds = array<i64: 8, 128>}, {pipeline_mode = #tpu.pipeline_mode<synchronous>, transform_indices = @transform_6, window_bounds = array<i64: 8, 128>}]} {
    %c0_i32 = arith.constant 0 : i32
    %0 = arith.cmpi eq, %arg0, %c0_i32 : i32
    %1 = arith.extui %0 : i1 to i32
    %c0_i32_0 = arith.constant 0 : i32
    %2 = arith.cmpi ne, %1, %c0_i32_0 : i32
    scf.if %2 {
      %cst_55 = arith.constant 0.000000e+00 : f32
      %122 = vector.broadcast %cst_55 : f32 to vector<8x128xf32>
      %c0_56 = arith.constant 0 : index
      %c0_57 = arith.constant 0 : index
      %123 = vector.load %arg9[%c0_56, %c0_57] : memref<8x128xf32, #tpu.memory_space<vmem>>, vector<8x128xf32>
      tpu.vector_store %arg9[%c0_56, %c0_57], %122 {strides = array<i32>} : memref<8x128xf32, #tpu.memory_space<vmem>>, vector<8x128xf32>,
      %cst_58 = arith.constant 0.000000e+00 : f32
      %124 = vector.broadcast %cst_58 : f32 to vector<8x128xf32>
      %c0_59 = arith.constant 0 : index
      %c0_60 = arith.constant 0 : index
      %125 = vector.load %arg10[%c0_59, %c0_60] : memref<8x128xf32, #tpu.memory_space<vmem>>, vector<8x128xf32>
      tpu.vector_store %arg10[%c0_59, %c0_60], %124 {strides = array<i32>} : memref<8x128xf32, #tpu.memory_space<vmem>>, vector<8x128xf32>,
    } else {
    }
    %c0 = arith.constant 0 : index
    %c0_1 = arith.constant 0 : index
    %c0_2 = arith.constant 0 : index
    %3 = vector.load %arg1[%c0, %c0_1, %c0_2] : memref<4x8x128xf32, #tpu.memory_space<vmem>>, vector<4x8x128xf32>
    %4 = vector.shape_cast %3 : vector<4x8x128xf32> to vector<32x128xf32>
    %c0_3 = arith.constant 0 : index
    %c0_4 = arith.constant 0 : index
    %5 = vector.load %arg2[%c0_3, %c0_4] : memref<128x512xf32, #tpu.memory_space<vmem>>, vector<128x512xf32>
    %cst = arith.constant dense<0.000000e+00> : vector<32x512xf32>
    %6 = tpu.matmul %4, %5, %cst {dimension_numbers = #tpu.dot_dimension_numbers<[1], [0], [0], [1], [0, 0, 1, 1], [], []>} : vector<32x128xf32>, vector<128x512xf32>, vector<32x512xf32> -> vector<32x512xf32>
    %c0_5 = arith.constant 0 : index
    %c0_6 = arith.constant 0 : index
    %7 = vector.load %arg4[%c0_5, %c0_6] : memref<1x512xf32, #tpu.memory_space<vmem>>, vector<1x512xf32>
    %8 = vector.broadcast %7 : vector<1x512xf32> to vector<32x512xf32>
    %9 = arith.addf %6, %8 : vector<32x512xf32>
    %10 = vector.shape_cast %9 : vector<32x512xf32> to vector<4x8x512xf32>
    %c0_7 = arith.constant 0 : index
    %c0_8 = arith.constant 0 : index
    %c0_9 = arith.constant 0 : index
    %11 = vector.load %arg8[%c0_7, %c0_8, %c0_9] : memref<4x8x512xf32, #tpu.memory_space<vmem>>, vector<4x8x512xf32>
    tpu.vector_store %arg8[%c0_7, %c0_8, %c0_9], %10 {strides = array<i32>} : memref<4x8x512xf32, #tpu.memory_space<vmem>>, vector<4x8x512xf32>,
    %c0_10 = arith.constant 0 : index
    %c0_11 = arith.constant 0 : index
    %12 = vector.load %arg9[%c0_10, %c0_11] : memref<8x128xf32, #tpu.memory_space<vmem>>, vector<8x128xf32>
    %c0_12 = arith.constant 0 : index
    %c0_13 = arith.constant 0 : index
    %13 = vector.load %arg10[%c0_12, %c0_13] : memref<8x128xf32, #tpu.memory_space<vmem>>, vector<8x128xf32>
    %c0_i32_14 = arith.constant 0 : i32
    %14 = arith.index_cast %c0_i32_14 : i32 to index
    %c0_15 = arith.constant 0 : index
    %c0_16 = arith.constant 0 : index
    %15 = vector.load %arg8[%14, %c0_15, %c0_16] : memref<4x8x512xf32, #tpu.memory_space<vmem>>, vector<1x8x512xf32>
    %16 = vector.shape_cast %15 : vector<1x8x512xf32> to vector<8x512xf32>
    %c0_17 = arith.constant 0 : index
    %c0_18 = arith.constant 0 : index
    %17 = vector.load %arg3[%c0_17, %c0_18] : memref<128x512xf32, #tpu.memory_space<vmem>>, vector<128x512xf32>
    %cst_19 = arith.constant dense<0.000000e+00> : vector<8x512xf32>
    %18 = tpu.matmul %12, %17, %cst_19 {dimension_numbers = #tpu.dot_dimension_numbers<[1], [0], [0], [1], [0, 0, 1, 1], [], []>} : vector<8x128xf32>, vector<128x512xf32>, vector<8x512xf32> -> vector<8x512xf32>
    %19 = arith.addf %16, %18 : vector<8x512xf32>
    %20 = vector.extract_strided_slice %19 {offsets = [0, 0], sizes = [8, 384], strides = [1, 1]} : vector<8x512xf32> to vector<8x384xf32>
    %21 = arith.negf %20 : vector<8x384xf32>
    %22 = math.exp %21 : vector<8x384xf32>
    %cst_20 = arith.constant 1.000000e+00 : f32
    %23 = vector.broadcast %cst_20 : f32 to vector<8x384xf32>
    %24 = arith.addf %23, %22 : vector<8x384xf32>
    %25 = arith.divf %23, %24 : vector<8x384xf32>
    %26 = vector.extract_strided_slice %19 {offsets = [0, 384], sizes = [8, 128], strides = [1, 1]} : vector<8x512xf32> to vector<8x128xf32>
    %27 = math.tanh %26 : vector<8x128xf32>
    %28 = vector.extract_strided_slice %25 {offsets = [0, 0], sizes = [8, 128], strides = [1, 1]} : vector<8x384xf32> to vector<8x128xf32>
    %29 = vector.extract_strided_slice %25 {offsets = [0, 128], sizes = [8, 128], strides = [1, 1]} : vector<8x384xf32> to vector<8x128xf32>
    %30 = vector.extract_strided_slice %25 {offsets = [0, 256], sizes = [8, 128], strides = [1, 1]} : vector<8x384xf32> to vector<8x128xf32>
    %31 = arith.mulf %29, %13 : vector<8x128xf32>
    %32 = arith.mulf %28, %27 : vector<8x128xf32>
    %33 = arith.addf %31, %32 : vector<8x128xf32>
    %34 = math.tanh %33 : vector<8x128xf32>
    %35 = arith.mulf %30, %34 : vector<8x128xf32>
    %36 = arith.index_cast %c0_i32_14 : i32 to index
    %c0_21 = arith.constant 0 : index
    %c0_22 = arith.constant 0 : index
    %37 = vector.load %arg5[%36, %c0_21, %c0_22] : memref<4x8x128xf32, #tpu.memory_space<vmem>>, vector<1x8x128xf32>
    %38 = vector.shape_cast %37 : vector<1x8x128xf32> to vector<8x128xf32>
    %39 = vector.shape_cast %35 : vector<8x128xf32> to vector<1x8x128xf32>
    tpu.vector_store %arg5[%36, %c0_21, %c0_22], %39 {strides = array<i32>} : memref<4x8x128xf32, #tpu.memory_space<vmem>>, vector<1x8x128xf32>,
    %c1_i32 = arith.constant 1 : i32
    %40 = arith.index_cast %c1_i32 : i32 to index
    %c0_23 = arith.constant 0 : index
    %c0_24 = arith.constant 0 : index
    %41 = vector.load %arg8[%40, %c0_23, %c0_24] : memref<4x8x512xf32, #tpu.memory_space<vmem>>, vector<1x8x512xf32>
    %42 = vector.shape_cast %41 : vector<1x8x512xf32> to vector<8x512xf32>
    %c0_25 = arith.constant 0 : index
    %c0_26 = arith.constant 0 : index
    %43 = vector.load %arg3[%c0_25, %c0_26] : memref<128x512xf32, #tpu.memory_space<vmem>>, vector<128x512xf32>
    %cst_27 = arith.constant dense<0.000000e+00> : vector<8x512xf32>
    %44 = tpu.matmul %35, %43, %cst_27 {dimension_numbers = #tpu.dot_dimension_numbers<[1], [0], [0], [1], [0, 0, 1, 1], [], []>} : vector<8x128xf32>, vector<128x512xf32>, vector<8x512xf32> -> vector<8x512xf32>
    %45 = arith.addf %42, %44 : vector<8x512xf32>
    %46 = vector.extract_strided_slice %45 {offsets = [0, 0], sizes = [8, 384], strides = [1, 1]} : vector<8x512xf32> to vector<8x384xf32>
    %47 = arith.negf %46 : vector<8x384xf32>
    %48 = math.exp %47 : vector<8x384xf32>
    %cst_28 = arith.constant 1.000000e+00 : f32
    %49 = vector.broadcast %cst_28 : f32 to vector<8x384xf32>
    %50 = arith.addf %49, %48 : vector<8x384xf32>
    %51 = arith.divf %49, %50 : vector<8x384xf32>
    %52 = vector.extract_strided_slice %45 {offsets = [0, 384], sizes = [8, 128], strides = [1, 1]} : vector<8x512xf32> to vector<8x128xf32>
    %53 = math.tanh %52 : vector<8x128xf32>
    %54 = vector.extract_strided_slice %51 {offsets = [0, 0], sizes = [8, 128], strides = [1, 1]} : vector<8x384xf32> to vector<8x128xf32>
    %55 = vector.extract_strided_slice %51 {offsets = [0, 128], sizes = [8, 128], strides = [1, 1]} : vector<8x384xf32> to vector<8x128xf32>
    %56 = vector.extract_strided_slice %51 {offsets = [0, 256], sizes = [8, 128], strides = [1, 1]} : vector<8x384xf32> to vector<8x128xf32>
    %57 = arith.mulf %55, %33 : vector<8x128xf32>
    %58 = arith.mulf %54, %53 : vector<8x128xf32>
    %59 = arith.addf %57, %58 : vector<8x128xf32>
    %60 = math.tanh %59 : vector<8x128xf32>
    %61 = arith.mulf %56, %60 : vector<8x128xf32>
    %62 = arith.index_cast %c1_i32 : i32 to index
    %c0_29 = arith.constant 0 : index
    %c0_30 = arith.constant 0 : index
    %63 = vector.load %arg5[%62, %c0_29, %c0_30] : memref<4x8x128xf32, #tpu.memory_space<vmem>>, vector<1x8x128xf32>
    %64 = vector.shape_cast %63 : vector<1x8x128xf32> to vector<8x128xf32>
    %65 = vector.shape_cast %61 : vector<8x128xf32> to vector<1x8x128xf32>
    tpu.vector_store %arg5[%62, %c0_29, %c0_30], %65 {strides = array<i32>} : memref<4x8x128xf32, #tpu.memory_space<vmem>>, vector<1x8x128xf32>,
    %c2_i32 = arith.constant 2 : i32
    %66 = arith.index_cast %c2_i32 : i32 to index
    %c0_31 = arith.constant 0 : index
    %c0_32 = arith.constant 0 : index
    %67 = vector.load %arg8[%66, %c0_31, %c0_32] : memref<4x8x512xf32, #tpu.memory_space<vmem>>, vector<1x8x512xf32>
    %68 = vector.shape_cast %67 : vector<1x8x512xf32> to vector<8x512xf32>
    %c0_33 = arith.constant 0 : index
    %c0_34 = arith.constant 0 : index
    %69 = vector.load %arg3[%c0_33, %c0_34] : memref<128x512xf32, #tpu.memory_space<vmem>>, vector<128x512xf32>
    %cst_35 = arith.constant dense<0.000000e+00> : vector<8x512xf32>
    %70 = tpu.matmul %61, %69, %cst_35 {dimension_numbers = #tpu.dot_dimension_numbers<[1], [0], [0], [1], [0, 0, 1, 1], [], []>} : vector<8x128xf32>, vector<128x512xf32>, vector<8x512xf32> -> vector<8x512xf32>
    %71 = arith.addf %68, %70 : vector<8x512xf32>
    %72 = vector.extract_strided_slice %71 {offsets = [0, 0], sizes = [8, 384], strides = [1, 1]} : vector<8x512xf32> to vector<8x384xf32>
    %73 = arith.negf %72 : vector<8x384xf32>
    %74 = math.exp %73 : vector<8x384xf32>
    %cst_36 = arith.constant 1.000000e+00 : f32
    %75 = vector.broadcast %cst_36 : f32 to vector<8x384xf32>
    %76 = arith.addf %75, %74 : vector<8x384xf32>
    %77 = arith.divf %75, %76 : vector<8x384xf32>
    %78 = vector.extract_strided_slice %71 {offsets = [0, 384], sizes = [8, 128], strides = [1, 1]} : vector<8x512xf32> to vector<8x128xf32>
    %79 = math.tanh %78 : vector<8x128xf32>
    %80 = vector.extract_strided_slice %77 {offsets = [0, 0], sizes = [8, 128], strides = [1, 1]} : vector<8x384xf32> to vector<8x128xf32>
    %81 = vector.extract_strided_slice %77 {offsets = [0, 128], sizes = [8, 128], strides = [1, 1]} : vector<8x384xf32> to vector<8x128xf32>
    %82 = vector.extract_strided_slice %77 {offsets = [0, 256], sizes = [8, 128], strides = [1, 1]} : vector<8x384xf32> to vector<8x128xf32>
    %83 = arith.mulf %81, %59 : vector<8x128xf32>
    %84 = arith.mulf %80, %79 : vector<8x128xf32>
    %85 = arith.addf %83, %84 : vector<8x128xf32>
    %86 = math.tanh %85 : vector<8x128xf32>
    %87 = arith.mulf %82, %86 : vector<8x128xf32>
    %88 = arith.index_cast %c2_i32 : i32 to index
    %c0_37 = arith.constant 0 : index
    %c0_38 = arith.constant 0 : index
    %89 = vector.load %arg5[%88, %c0_37, %c0_38] : memref<4x8x128xf32, #tpu.memory_space<vmem>>, vector<1x8x128xf32>
    %90 = vector.shape_cast %89 : vector<1x8x128xf32> to vector<8x128xf32>
    %91 = vector.shape_cast %87 : vector<8x128xf32> to vector<1x8x128xf32>
    tpu.vector_store %arg5[%88, %c0_37, %c0_38], %91 {strides = array<i32>} : memref<4x8x128xf32, #tpu.memory_space<vmem>>, vector<1x8x128xf32>,
    %c3_i32 = arith.constant 3 : i32
    %92 = arith.index_cast %c3_i32 : i32 to index
    %c0_39 = arith.constant 0 : index
    %c0_40 = arith.constant 0 : index
    %93 = vector.load %arg8[%92, %c0_39, %c0_40] : memref<4x8x512xf32, #tpu.memory_space<vmem>>, vector<1x8x512xf32>
    %94 = vector.shape_cast %93 : vector<1x8x512xf32> to vector<8x512xf32>
    %c0_41 = arith.constant 0 : index
    %c0_42 = arith.constant 0 : index
    %95 = vector.load %arg3[%c0_41, %c0_42] : memref<128x512xf32, #tpu.memory_space<vmem>>, vector<128x512xf32>
    %cst_43 = arith.constant dense<0.000000e+00> : vector<8x512xf32>
    %96 = tpu.matmul %87, %95, %cst_43 {dimension_numbers = #tpu.dot_dimension_numbers<[1], [0], [0], [1], [0, 0, 1, 1], [], []>} : vector<8x128xf32>, vector<128x512xf32>, vector<8x512xf32> -> vector<8x512xf32>
    %97 = arith.addf %94, %96 : vector<8x512xf32>
    %98 = vector.extract_strided_slice %97 {offsets = [0, 0], sizes = [8, 384], strides = [1, 1]} : vector<8x512xf32> to vector<8x384xf32>
    %99 = arith.negf %98 : vector<8x384xf32>
    %100 = math.exp %99 : vector<8x384xf32>
    %cst_44 = arith.constant 1.000000e+00 : f32
    %101 = vector.broadcast %cst_44 : f32 to vector<8x384xf32>
    %102 = arith.addf %101, %100 : vector<8x384xf32>
    %103 = arith.divf %101, %102 : vector<8x384xf32>
    %104 = vector.extract_strided_slice %97 {offsets = [0, 384], sizes = [8, 128], strides = [1, 1]} : vector<8x512xf32> to vector<8x128xf32>
    %105 = math.tanh %104 : vector<8x128xf32>
    %106 = vector.extract_strided_slice %103 {offsets = [0, 0], sizes = [8, 128], strides = [1, 1]} : vector<8x384xf32> to vector<8x128xf32>
    %107 = vector.extract_strided_slice %103 {offsets = [0, 128], sizes = [8, 128], strides = [1, 1]} : vector<8x384xf32> to vector<8x128xf32>
    %108 = vector.extract_strided_slice %103 {offsets = [0, 256], sizes = [8, 128], strides = [1, 1]} : vector<8x384xf32> to vector<8x128xf32>
    %109 = arith.mulf %107, %85 : vector<8x128xf32>
    %110 = arith.mulf %106, %105 : vector<8x128xf32>
    %111 = arith.addf %109, %110 : vector<8x128xf32>
    %112 = math.tanh %111 : vector<8x128xf32>
    %113 = arith.mulf %108, %112 : vector<8x128xf32>
    %114 = arith.index_cast %c3_i32 : i32 to index
    %c0_45 = arith.constant 0 : index
    %c0_46 = arith.constant 0 : index
    %115 = vector.load %arg5[%114, %c0_45, %c0_46] : memref<4x8x128xf32, #tpu.memory_space<vmem>>, vector<1x8x128xf32>
    %116 = vector.shape_cast %115 : vector<1x8x128xf32> to vector<8x128xf32>
    %117 = vector.shape_cast %113 : vector<8x128xf32> to vector<1x8x128xf32>
    tpu.vector_store %arg5[%114, %c0_45, %c0_46], %117 {strides = array<i32>} : memref<4x8x128xf32, #tpu.memory_space<vmem>>, vector<1x8x128xf32>,
    %c4_i32 = arith.constant 4 : i32
    %c0_47 = arith.constant 0 : index
    %c0_48 = arith.constant 0 : index
    %118 = vector.load %arg9[%c0_47, %c0_48] : memref<8x128xf32, #tpu.memory_space<vmem>>, vector<8x128xf32>
    tpu.vector_store %arg9[%c0_47, %c0_48], %113 {strides = array<i32>} : memref<8x128xf32, #tpu.memory_space<vmem>>, vector<8x128xf32>,
    %c0_49 = arith.constant 0 : index
    %c0_50 = arith.constant 0 : index
    %119 = vector.load %arg10[%c0_49, %c0_50] : memref<8x128xf32, #tpu.memory_space<vmem>>, vector<8x128xf32>
    tpu.vector_store %arg10[%c0_49, %c0_50], %111 {strides = array<i32>} : memref<8x128xf32, #tpu.memory_space<vmem>>, vector<8x128xf32>,
    %c0_51 = arith.constant 0 : index
    %c0_52 = arith.constant 0 : index
    %120 = vector.load %arg6[%c0_51, %c0_52] : memref<8x128xf32, #tpu.memory_space<vmem>>, vector<8x128xf32>
    tpu.vector_store %arg6[%c0_51, %c0_52], %113 {strides = array<i32>} : memref<8x128xf32, #tpu.memory_space<vmem>>, vector<8x128xf32>,
    %c0_53 = arith.constant 0 : index
    %c0_54 = arith.constant 0 : index
    %121 = vector.load %arg7[%c0_53, %c0_54] : memref<8x128xf32, #tpu.memory_space<vmem>>, vector<8x128xf32>
    tpu.vector_store %arg7[%c0_53, %c0_54], %111 {strides = array<i32>} : memref<8x128xf32, #tpu.memory_space<vmem>>, vector<8x128xf32>,
    return
  }
  func.func @transform_0(%arg0: i32) -> (i32, i32, i32) {
    %c0_i32 = arith.constant 0 : i32
    %c0_i32_0 = arith.constant 0 : i32
    %c0_i32_1 = arith.constant 0 : i32
    return %arg0, %c0_i32, %c0_i32_0 : i32, i32, i32
  }
  func.func @transform_1(%arg0: i32) -> (i32, i32) {
    %c0_i32 = arith.constant 0 : i32
    %c0_i32_0 = arith.constant 0 : i32
    %c0_i32_1 = arith.constant 0 : i32
    return %c0_i32, %c0_i32_0 : i32, i32
  }
  func.func @transform_2(%arg0: i32) -> (i32, i32) {
    %c0_i32 = arith.constant 0 : i32
    %c0_i32_0 = arith.constant 0 : i32
    %c0_i32_1 = arith.constant 0 : i32
    return %c0_i32, %c0_i32_0 : i32, i32
  }
  func.func @transform_3(%arg0: i32) -> (i32, i32) {
    %c0_i32 = arith.constant 0 : i32
    %c0_i32_0 = arith.constant 0 : i32
    %c0_i32_1 = arith.constant 0 : i32
    return %c0_i32, %c0_i32_0 : i32, i32
  }
  func.func @transform_4(%arg0: i32) -> (i32, i32, i32) {
    %c0_i32 = arith.constant 0 : i32
    %c0_i32_0 = arith.constant 0 : i32
    %c0_i32_1 = arith.constant 0 : i32
    return %arg0, %c0_i32, %c0_i32_0 : i32, i32, i32
  }
  func.func @transform_5(%arg0: i32) -> (i32, i32) {
    %c0_i32 = arith.constant 0 : i32
    %c0_i32_0 = arith.constant 0 : i32
    %c0_i32_1 = arith.constant 0 : i32
    return %c0_i32, %c0_i32_0 : i32, i32
  }
  func.func @transform_6(%arg0: i32) -> (i32, i32) {
    %c0_i32 = arith.constant 0 : i32
    %c0_i32_0 = arith.constant 0 : i32
    %c0_i32_1 = arith.constant 0 : i32
    return %c0_i32, %c0_i32_0 : i32, i32
  }
}

</mosaic_0001>

<llo_original>
// kernel: encoder_forward.3
$region0: #{encoder_forward.3}
  #allocation0 [shape = 'u32[]', space=smem, size = 0x4, offset = 0x4, fixed_abs, tag = 'smem constant byte address 0x4 - core index']
  #allocation1 [shape = 'u32[144,128]{1,0:T(1,128)}', space=vmem, size = 0x12000, scoped, tag = 'internal scratch']
  #allocation2 [shape = 'f32[4,8,512]{2,1,0:T(8,128)}', space=vmem, size = 0x10000, scoped, tag = 'scratch operand']
  #allocation3 [shape = 'f32[8,128]{1,0:T(8,128)}', space=vmem, size = 0x1000, scoped, tag = 'scratch operand']
  #allocation4 [shape = 'f32[8,128]{1,0:T(8,128)}', space=vmem, size = 0x1000, scoped, tag = 'scratch operand']
  %s0 = inlined_call_operand.vmem [shape: f32[8,8,128], index: 0, kind: input, shape index: {}]
  %s1 = inlined_call_operand.vmem [shape: f32[128,512], index: 1, kind: input, shape index: {}]
  %s2 = inlined_call_operand.vmem [shape: f32[128,512], index: 2, kind: input, shape index: {}]
  %s3 = inlined_call_operand.vmem [shape: f32[1,512], index: 3, kind: input, shape index: {}]
  %s4 = inlined_call_operand.hbm [shape: f32[8,8,128], index: 4, kind: output, shape index: {0}]
  %s5 = inlined_call_operand.vmem [shape: f32[8,128], index: 5, kind: output, shape index: {1}]
  %s6 = inlined_call_operand.vmem [shape: f32[8,128], index: 6, kind: output, shape index: {2}]
  %7 = xla_tuple %s4, %s5, %s6
  %s8 = sld [smem:[#allocation0]]
  $region69: #{encoder_forward.3} parent=0
    _
  %s10 = ssub.s32 1, %s8
  %s11 = scalar_select 0, %s10, %s8
  $region1: #{encoder_forward.3} parent=0
    #allocation5 [shape = 'u8[32768]{0}', space=vmem, size = 0x8000, scoped, tag = 'output window, operand 0']
    #allocation6 [shape = 's32[2]{0}', space=sflag, size = 0x8, scoped, tag = 'scoped memory for encoder_forward.3']
    %12 = vsyncpa [#allocation6], 0
    %s13 = scalar_lea.sflag [#allocation6], 1
    %14 = vsyncpa %s13, 0
    loop: start=0, step=1, limit=4
    $region2: #{encoder_forward.3} parent=1 // loop_pre_header
      _
    $region3: #{encoder_forward.3} parent=1 // loop_header
      %s16 = sphi 0, %s20
      %p17 = scmp.ge.s32.totalorder %s16, 4
      %s26 = sphi 0, %s28
      %s29 = sphi 0, %s26
      %s30 = sphi 0, %s29
      %s46 = sphi 0, %s30
      %s50 = sphi 0, %s50
      %s52 = sphi 0, %s50
      %s53 = sphi 0, %s52
      %s67 = sphi 0, %s53
      %s71 = sphi 0, %s71
      %s73 = sphi 0, %s71
      %s74 = sphi 0, %s73
      %s88 = sphi 0, %s74
      %s92 = sphi 0, %s92
      %s94 = sphi 0, %s92
      %s95 = sphi 0, %s94
      %s109 = sphi 0, %s95
      %s115 = sphi 0, %s117
      %s118 = sphi 0, %s115
      %s119 = sphi 0, %s118
      %s135 = sphi 0, %s119
      %s139 = sphi 0, %s139
      %s141 = sphi 0, %s139
      %s142 = sphi 0, %s141
      %s156 = sphi 0, %s142
      %s160 = sphi 0, %s160
      %s162 = sphi 0, %s160
      %s163 = sphi 0, %s162
      %s177 = sphi 0, %s163
    $region4: #{encoder_forward.3} parent=1 // loop_header_branch
      %19 = sbr.rel (%p17) target = $region8
    $region5: #{encoder_forward.3} parent=1 // loop_body
      %s21 = ssub.s32 %s16, 1
      %s22 = ssub.s32 %s16, 2
      %s23 = sadd.s32 %s16, 1
      %s24 = ssub.s32 %s16, %s23
      %p25 = scmp.eq.s32.totalorder %s24, 0
      %s27 = sadd.s32 %s26, 1
      %s28 = scalar_select %p25, %s26, %s27
      %p31 = pneg %p25
      %p32 = scmp.eq.s32.totalorder %s16, 1
      %p33 = por %p31, %p32
      %p34 = scmp.ne.s32.totalorder %s26, %s29
      %p35 = scmp.eq.s32.totalorder %s16, 0
      %p36 = por %p34, %p35
      %p37 = scmp.ne.s32.totalorder %s26, %s29
      %p38 = scmp.eq.s32.totalorder %s21, 1
      %p39 = por %p37, %p38
      %p40 = scmp.ne.s32.totalorder %s29, %s30
      %p41 = scmp.eq.s32.totalorder %s21, 0
      %p42 = por %p40, %p41
      %p43 = scmp.ne.s32.totalorder %s29, %s30
      %p44 = scmp.eq.s32.totalorder %s22, 1
      %p45 = por %p43, %p44
      %p47 = scmp.ne.s32.totalorder %s30, %s46
      %p48 = scmp.eq.s32.totalorder %s22, 0
      %p49 = por %p47, %p48
      %s51 = sadd.s32 %s50, 1
      %p54 = scmp.eq.s32.totalorder %s16, 1
      %p55 = scmp.ne.s32.totalorder %s50, %s52
      %p56 = scmp.eq.s32.totalorder %s16, 0
      %p57 = por %p55, %p56
      %p58 = scmp.ne.s32.totalorder %s50, %s52
      %p59 = scmp.eq.s32.totalorder %s21, 1
      %p60 = por %p58, %p59
      %p61 = scmp.ne.s32.totalorder %s52, %s53
      %p62 = scmp.eq.s32.totalorder %s21, 0
      %p63 = por %p61, %p62
      %p64 = scmp.ne.s32.totalorder %s52, %s53
      %p65 = scmp.eq.s32.totalorder %s22, 1
      %p66 = por %p64, %p65
      %p68 = scmp.ne.s32.totalorder %s53, %s67
      %p69 = scmp.eq.s32.totalorder %s22, 0
      %p70 = por %p68, %p69
      %s72 = sadd.s32 %s71, 1
      %p75 = scmp.eq.s32.totalorder %s16, 1
      %p76 = scmp.ne.s32.totalorder %s71, %s73
      %p77 = scmp.eq.s32.totalorder %s16, 0
      %p78 = por %p76, %p77
      %p79 = scmp.ne.s32.totalorder %s71, %s73
      %p80 = scmp.eq.s32.totalorder %s21, 1
      %p81 = por %p79, %p80
      %p82 = scmp.ne.s32.totalorder %s73, %s74
      %p83 = scmp.eq.s32.totalorder %s21, 0
      %p84 = por %p82, %p83
      %p85 = scmp.ne.s32.totalorder %s73, %s74
      %p86 = scmp.eq.s32.totalorder %s22, 1
      %p87 = por %p85, %p86
      %p89 = scmp.ne.s32.totalorder %s74, %s88
      %p90 = scmp.eq.s32.totalorder %s22, 0
      %p91 = por %p89, %p90
      %s93 = sadd.s32 %s92, 1
      %p96 = scmp.eq.s32.totalorder %s16, 1
      %p97 = scmp.ne.s32.totalorder %s92, %s94
      %p98 = scmp.eq.s32.totalorder %s16, 0
      %p99 = por %p97, %p98
      %p100 = scmp.ne.s32.totalorder %s92, %s94
      %p101 = scmp.eq.s32.totalorder %s21, 1
      %p102 = por %p100, %p101
      %p103 = scmp.ne.s32.totalorder %s94, %s95
      %p104 = scmp.eq.s32.totalorder %s21, 0
      %p105 = por %p103, %p104
      %p106 = scmp.ne.s32.totalorder %s94, %s95
      %p107 = scmp.eq.s32.totalorder %s22, 1
      %p108 = por %p106, %p107
      %p110 = scmp.ne.s32.totalorder %s95, %s109
      %p111 = scmp.eq.s32.totalorder %s22, 0
      %p112 = por %p110, %p111
      %s113 = ssub.s32 %s16, %s23
      %p114 = scmp.eq.s32.totalorder %s113, 0
      %s116 = sadd.s32 %s115, 1
      %s117 = scalar_select %p114, %s115, %s116
      %p120 = pneg %p114
      %p121 = scmp.eq.s32.totalorder %s16, 1
      %p122 = por %p120, %p121
      %p123 = scmp.ne.s32.totalorder %s115, %s118
      %p124 = scmp.eq.s32.totalorder %s16, 0
      %p125 = por %p123, %p124
      %p126 = scmp.ne.s32.totalorder %s115, %s118
      %p127 = scmp.eq.s32.totalorder %s21, 1
      %p128 = por %p126, %p127
      %p129 = scmp.ne.s32.totalorder %s118, %s119
      %p130 = scmp.eq.s32.totalorder %s21, 0
      %p131 = por %p129, %p130
      %p132 = scmp.ne.s32.totalorder %s118, %s119
      %p133 = scmp.eq.s32.totalorder %s22, 1
      %p134 = por %p132, %p133
      %p136 = scmp.ne.s32.totalorder %s119, %s135
      %p137 = scmp.eq.s32.totalorder %s22, 0
      %p138 = por %p136, %p137
      %s140 = sadd.s32 %s139, 1
      %p143 = scmp.eq.s32.totalorder %s16, 1
      %p144 = scmp.ne.s32.totalorder %s139, %s141
      %p145 = scmp.eq.s32.totalorder %s16, 0
      %p146 = por %p144, %p145
      %p147 = scmp.ne.s32.totalorder %s139, %s141
      %p148 = scmp.eq.s32.totalorder %s21, 1
      %p149 = por %p147, %p148
      %p150 = scmp.ne.s32.totalorder %s141, %s142
      %p151 = scmp.eq.s32.totalorder %s21, 0
      %p152 = por %p150, %p151
      %p153 = scmp.ne.s32.totalorder %s141, %s142
      %p154 = scmp.eq.s32.totalorder %s22, 1
      %p155 = por %p153, %p154
      %p157 = scmp.ne.s32.totalorder %s142, %s156
      %p158 = scmp.eq.s32.totalorder %s22, 0
      %p159 = por %p157, %p158
      %s161 = sadd.s32 %s160, 1
      %p164 = scmp.eq.s32.totalorder %s16, 1
      %p165 = scmp.ne.s32.totalorder %s160, %s162
      %p166 = scmp.eq.s32.totalorder %s16, 0
      %p167 = por %p165, %p166
      %p168 = scmp.ne.s32.totalorder %s160, %s162
      %p169 = scmp.eq.s32.totalorder %s21, 1
      %p170 = por %p168, %p169
      %p171 = scmp.ne.s32.totalorder %s162, %s163
      %p172 = scmp.eq.s32.totalorder %s21, 0
      %p173 = por %p171, %p172
      %p174 = scmp.ne.s32.totalorder %s162, %s163
      %p175 = scmp.eq.s32.totalorder %s22, 1
      %p176 = por %p174, %p175
      %p178 = scmp.ne.s32.totalorder %s163, %s177
      %p179 = scmp.eq.s32.totalorder %s22, 0
      %p180 = por %p178, %p179
      %p181 = scmp.le.s32.totalorder 1, %s16
      %p182 = scmp.lt.s32.totalorder %s16, 3
      %p183 = pnand %p181, %p182
      %p184 = pneg %p183
      // Predicated region
      $region9: #{encoder_forward.3} parent=5 // pred_check
        _
      $region10: #{encoder_forward.3} parent=5 // pred_check_branch
        %186 = sbr.rel (%p183) target = $region12
      $region11: #{encoder_forward.3} parent=5 // pred_region
        %s187 = ssub.s32 %s16, 1
        // Predicated region
        $region13: #{encoder_forward.3} parent=11 // pred_check
          %p188 = pneg %p63
        $region14: #{encoder_forward.3} parent=11 // pred_check_branch
          %190 = sbr.rel (%p188) target = $region16
        $region15: #{encoder_forward.3} parent=11 // pred_region
          _
        $region16: #{encoder_forward.3} parent=11 // pred_fallthru
          _
        // Predicated region
        $region17: #{encoder_forward.3} parent=11 // pred_check
          %p191 = pneg %p84
        $region18: #{encoder_forward.3} parent=11 // pred_check_branch
          %193 = sbr.rel (%p191) target = $region20
        $region19: #{encoder_forward.3} parent=11 // pred_region
          _
        $region20: #{encoder_forward.3} parent=11 // pred_fallthru
          _
        // Predicated region
        $region21: #{encoder_forward.3} parent=11 // pred_check
          %p194 = pneg %p105
        $region22: #{encoder_forward.3} parent=11 // pred_check_branch
          %196 = sbr.rel (%p194) target = $region24
        $region23: #{encoder_forward.3} parent=11 // pred_region
          _
        $region24: #{encoder_forward.3} parent=11 // pred_fallthru
          _
      $region12: #{encoder_forward.3} parent=5 // pred_fallthru
        _
      %p197 = scmp.lt.s32.totalorder %s16, 2
      // Predicated region
      $region25: #{encoder_forward.3} parent=5 // pred_check
        %p198 = pneg %p197
      $region26: #{encoder_forward.3} parent=5 // pred_check_branch
        %200 = sbr.rel (%p198) target = $region28
      $region27: #{encoder_forward.3} parent=5 // pred_region
        // Predicated region
        $region29: #{encoder_forward.3} parent=27 // pred_check
          %p201 = pneg %p36
        $region30: #{encoder_forward.3} parent=27 // pred_check_branch
          %203 = sbr.rel (%p201) target = $region32
        $region31: #{encoder_forward.3} parent=27 // pred_region
          %s204 = smul.u32 4, %s16
          %p205 = scmp.lt.s32.totalorder %s204, 7
          %s206 = scalar_select %p205, %s204, 7
          %s207 = smul.addr %s206, 8
          %s208 = scalar_lea.vmem %s0, %s207
          %s209 = smul.u32 4, %s16
        $region32: #{encoder_forward.3} parent=27 // pred_fallthru
          _
      $region28: #{encoder_forward.3} parent=5 // pred_fallthru
        _
      %p210 = scmp.le.s32.totalorder 1, %s16
      %p211 = scmp.lt.s32.totalorder %s16, 3
      %p212 = pnand %p210, %p211
      %p213 = pneg %p212
      // Predicated region
      $region33: #{encoder_forward.3} parent=5 // pred_check
        _
      $region34: #{encoder_forward.3} parent=5 // pred_check_branch
        %215 = sbr.rel (%p212) target = $region36
      $region35: #{encoder_forward.3} parent=5 // pred_region
        %s216 = ssub.s32 %s16, 1
        %s217 = smul.u32 4, %s21
        %p218 = scmp.lt.s32.totalorder %s217, 7
        %s219 = scalar_select %p218, %s217, 7
        %s220 = smul.addr %s219, 8
        %s221 = scalar_lea.vmem %s0, %s220
        %p222 = pneg %p42
        %p223 = pneg %p39
        %p224 = pneg %p63
        %p225 = pneg %p60
        %p226 = pneg %p84
        %p227 = pneg %p81
        %p228 = pneg %p105
        %p229 = pneg %p102
        %p230 = pneg %p131
        %p231 = pneg %p128
        %s232 = sand.u32 %s118, 1
        %s233 = scalar_lea.sflag [#allocation6], %s232
        %s234 = sand.u32 %s118, 1
        %s235 = smul.addr %s234, 32
        %s236 = scalar_lea.vmem [#allocation5], %s235
        %p237 = pneg %p152
        %p238 = pneg %p149
        %p239 = pneg %p173
        %p240 = pneg %p170
        %s241 = smul.u32 4, %s21
        %p242 = scmp.lt.s32.totalorder %s241, 7
        %s243 = scalar_select %p242, %s241, 7
        %s244 = smul.addr %s243, 8
        %s245 = scalar_lea.vmem %s0, %s244
        %s246 = smul.u32 4, %s21
        %s247 = smul.u32 4, %s21
        %p248 = scmp.eq.s32.totalorder %s21, 0
        // Predicated region
        $region37: #{encoder_forward.3} parent=35 // pred_check
          %p249 = pneg %p248
        $region38: #{encoder_forward.3} parent=35 // pred_check_branch
          %251 = sbr.rel (%p249) target = $region40
        $region39: #{encoder_forward.3} parent=35 // pred_region
          %252 = vst [vmem:[#allocation3] sm:$0xff] 0.0
          %253 = vst [vmem:[#allocation4] sm:$0xff] 0.0
        $region40: #{encoder_forward.3} parent=35 // pred_fallthru
          _
        %v254 = vld [vmem:[%s245] sm:$0xff]
        %v255 = vld [vmem:[%s245 + $0x8] sm:$0xff]
        %v256 = vld [vmem:[%s245 + $0x10] sm:$0xff]
        %v257 = vld [vmem:[%s245 + $0x18] sm:$0xff]
        %v258 = vld [vmem:[%s1] sm:$0xff]
        %v259 = vld [vmem:[%s1 + $0x8] sm:$0xff]
        %v260 = vld [vmem:[%s1 + $0x10] sm:$0xff]
        %v261 = vld [vmem:[%s1 + $0x18] sm:$0xff]
        %v262 = vld [vmem:[%s1 + $0x20] sm:$0xff]
        %v263 = vld [vmem:[%s1 + $0x28] sm:$0xff]
        %v264 = vld [vmem:[%s1 + $0x30] sm:$0xff]
        %v265 = vld [vmem:[%s1 + $0x38] sm:$0xff]
        %v266 = vld [vmem:[%s1 + $0x40] sm:$0xff]
        %v267 = vld [vmem:[%s1 + $0x48] sm:$0xff]
        %v268 = vld [vmem:[%s1 + $0x50] sm:$0xff]
        %v269 = vld [vmem:[%s1 + $0x58] sm:$0xff]
        %v270 = vld [vmem:[%s1 + $0x60] sm:$0xff]
        %v271 = vld [vmem:[%s1 + $0x68] sm:$0xff]
        %v272 = vld [vmem:[%s1 + $0x70] sm:$0xff]
        %v273 = vld [vmem:[%s1 + $0x78] sm:$0xff]
        %v274 = vld [vmem:[%s1 + $0x80] sm:$0xff]
        %v275 = vld [vmem:[%s1 + $0x88] sm:$0xff]
        %v276 = vld [vmem:[%s1 + $0x90] sm:$0xff]
        %v277 = vld [vmem:[%s1 + $0x98] sm:$0xff]
        %v278 = vld [vmem:[%s1 + $0xa0] sm:$0xff]
        %v279 = vld [vmem:[%s1 + $0xa8] sm:$0xff]
        %v280 = vld [vmem:[%s1 + $0xb0] sm:$0xff]
        %v281 = vld [vmem:[%s1 + $0xb8] sm:$0xff]
        %v282 = vld [vmem:[%s1 + $0xc0] sm:$0xff]
        %v283 = vld [vmem:[%s1 + $0xc8] sm:$0xff]
        %v284 = vld [vmem:[%s1 + $0xd0] sm:$0xff]
        %v285 = vld [vmem:[%s1 + $0xd8] sm:$0xff]
        %v286 = vld [vmem:[%s1 + $0xe0] sm:$0xff]
        %v287 = vld [vmem:[%s1 + $0xe8] sm:$0xff]
        %v288 = vld [vmem:[%s1 + $0xf0] sm:$0xff]
        %v289 = vld [vmem:[%s1 + $0xf8] sm:$0xff]
        %v290 = vld [vmem:[%s1 + $0x100] sm:$0xff]
        %v291 = vld [vmem:[%s1 + $0x108] sm:$0xff]
        %v292 = vld [vmem:[%s1 + $0x110] sm:$0xff]
        %v293 = vld [vmem:[%s1 + $0x118] sm:$0xff]
        %v294 = vld [vmem:[%s1 + $0x120] sm:$0xff]
        %v295 = vld [vmem:[%s1 + $0x128] sm:$0xff]
        %v296 = vld [vmem:[%s1 + $0x130] sm:$0xff]
        %v297 = vld [vmem:[%s1 + $0x138] sm:$0xff]
        %v298 = vld [vmem:[%s1 + $0x140] sm:$0xff]
        %v299 = vld [vmem:[%s1 + $0x148] sm:$0xff]
        %v300 = vld [vmem:[%s1 + $0x150] sm:$0xff]
        %v301 = vld [vmem:[%s1 + $0x158] sm:$0xff]
        %v302 = vld [vmem:[%s1 + $0x160] sm:$0xff]
        %v303 = vld [vmem:[%s1 + $0x168] sm:$0xff]
        %v304 = vld [vmem:[%s1 + $0x170] sm:$0xff]
        %v305 = vld [vmem:[%s1 + $0x178] sm:$0xff]
        %v306 = vld [vmem:[%s1 + $0x180] sm:$0xff]
        %v307 = vld [vmem:[%s1 + $0x188] sm:$0xff]
        %v308 = vld [vmem:[%s1 + $0x190] sm:$0xff]
        %v309 = vld [vmem:[%s1 + $0x198] sm:$0xff]
        %v310 = vld [vmem:[%s1 + $0x1a0] sm:$0xff]
        %v311 = vld [vmem:[%s1 + $0x1a8] sm:$0xff]
        %v312 = vld [vmem:[%s1 + $0x1b0] sm:$0xff]
        %v313 = vld [vmem:[%s1 + $0x1b8] sm:$0xff]
        %v314 = vld [vmem:[%s1 + $0x1c0] sm:$0xff]
        %v315 = vld [vmem:[%s1 + $0x1c8] sm:$0xff]
        %v316 = vld [vmem:[%s1 + $0x1d0] sm:$0xff]
        %v317 = vld [vmem:[%s1 + $0x1d8] sm:$0xff]
        %v318 = vld [vmem:[%s1 + $0x1e0] sm:$0xff]
        %v319 = vld [vmem:[%s1 + $0x1e8] sm:$0xff]
        %v320 = vld [vmem:[%s1 + $0x1f0] sm:$0xff]
        %v321 = vld [vmem:[%s1 + $0x1f8] sm:$0xff]
        %v322 = vld [vmem:[%s3] sm:$0xf]
        %v324 = vlaneseq
        %v325 = vshrl.u32 %v324, 7
        %v326 = vsub.s32 0, %v325
        %v327 = vrot.slane %v322, %v326
        %v328 = vlaneseq
        %v329 = vshrl.u32 %v328, 7
        %v330 = vsub.s32 1, %v329
        %v331 = vrot.slane %v322, %v330
        %v332 = vlaneseq
        %v333 = vshrl.u32 %v332, 7
        %v334 = vsub.s32 2, %v333
        %v335 = vrot.slane %v322, %v334
        %v336 = vlaneseq
        %v337 = vshrl.u32 %v336, 7
        %v338 = vsub.s32 3, %v337
        %v339 = vrot.slane %v322, %v338
        %344 = vmatprep.subr.mxu0 %v259
        %345 = vmatpush1.msra.mxu0 %v258
        %346 = vmatprep.subr.mxu0 %v263
        %347 = vmatpush1.msra.mxu0 %v262
        %348 = vmatprep.subr.mxu0 %v267
        %349 = vmatpush1.msra.mxu0 %v266
        %350 = vmatprep.subr.mxu0 %v271
        %351 = vmatpush1.msra.mxu0 %v270
        %352 = vmatprep.subr.mxu0 %v275
        %353 = vmatpush1.msra.mxu0 %v274
        %354 = vmatprep.subr.mxu0 %v279
        %355 = vmatpush1.msra.mxu0 %v278
        %356 = vmatprep.subr.mxu0 %v283
        %357 = vmatpush1.msra.mxu0 %v282
        %358 = vmatprep.subr.mxu0 %v287
        %359 = vmatpush1.msra.mxu0 %v286
        %360 = vmatprep.subr.mxu0 %v291
        %361 = vmatpush1.msra.mxu0 %v290
        %362 = vmatprep.subr.mxu0 %v295
        %363 = vmatpush1.msra.mxu0 %v294
        %364 = vmatprep.subr.mxu0 %v299
        %365 = vmatpush1.msra.mxu0 %v298
        %366 = vmatprep.subr.mxu0 %v303
        %367 = vmatpush1.msra.mxu0 %v302
        %368 = vmatprep.subr.mxu0 %v307
        %369 = vmatpush1.msra.mxu0 %v306
        %370 = vmatprep.subr.mxu0 %v311
        %371 = vmatpush1.msra.mxu0 %v310
        %372 = vmatprep.subr.mxu0 %v315
        %373 = vmatpush1.msra.mxu0 %v314
        %374 = vmatprep.subr.mxu0 %v319
        %375 = vmatpush1.msra.mxu0 %v318
        %376 = vmatprep.subr.mxu0 0.0
        %377 = vmatpush1.msra.mxu0 0.0
        %378 = vmatprep.subr.mxu0 0.0
        %379 = vmatpush1.msra.mxu0 0.0
        %380 = vmatprep.subr.mxu0 0.0
        %381 = vmatpush1.msra.mxu0 0.0
        %382 = vmatprep.subr.mxu0 0.0
        %383 = vmatpush1.msra.mxu0 0.0
        %384 = vmatprep.subr.mxu0 0.0
        %385 = vmatpush1.msra.mxu0 0.0
        %386 = vmatprep.subr.mxu0 0.0
        %387 = vmatpush1.msra.mxu0 0.0
        %388 = vmatprep.subr.mxu0 0.0
        %389 = vmatpush1.msra.mxu0 0.0
        %390 = vmatprep.subr.mxu0 0.0
        %391 = vmatpush1.msra.mxu0 0.0
        %392 = vmatprep.subr.mxu0 0.0
        %393 = vmatpush1.msra.mxu0 0.0
        %394 = vmatprep.subr.mxu0 0.0
        %395 = vmatpush1.msra.mxu0 0.0
        %396 = vmatprep.subr.mxu0 0.0
        %397 = vmatpush1.msra.mxu0 0.0
        %398 = vmatprep.subr.mxu0 0.0
        %399 = vmatpush1.msra.mxu0 0.0
        %400 = vmatprep.subr.mxu0 0.0
        %401 = vmatpush1.msra.mxu0 0.0
        %402 = vmatprep.subr.mxu0 0.0
        %403 = vmatpush1.msra.mxu0 0.0
        %404 = vmatprep.subr.mxu0 0.0
        %405 = vmatpush1.msra.mxu0 0.0
        %406 = vmatprep.subr.mxu0 0.0
        %407 = vmatpush1.msra.mxu0 0.0
        %408 = vmatprep.mubr.f32.mxu0 0.0
        %409 = vmatmul.mubr.f32.gmra.mrb[0].mxu0 %v254
        %v410 = vpop.f32.mrb[0].mxu0
        %v411 = vadd.f32 %v327, %v410
        %v412 = vpop.f32.mrb[0].mxu0
        %v413 = vadd.f32 %v331, %v412
        %414 = vmatprep.mubr.f32.mxu0 0.0
        %415 = vmatmul.mubr.f32.gmra.mrb[0].mxu0 %v255
        %v416 = vpop.f32.mrb[0].mxu0
        %v417 = vadd.f32 %v327, %v416
        %v418 = vpop.f32.mrb[0].mxu0
        %v419 = vadd.f32 %v331, %v418
        %420 = vmatprep.mubr.f32.mxu0 0.0
        %421 = vmatmul.mubr.f32.gmra.mrb[0].mxu0 %v256
        %v422 = vpop.f32.mrb[0].mxu0
        %v423 = vadd.f32 %v327, %v422
        %v424 = vpop.f32.mrb[0].mxu0
        %v425 = vadd.f32 %v331, %v424
        %426 = vmatprep.mubr.f32.mxu0 0.0
        %427 = vmatmul.mubr.f32.gmra.mrb[0].mxu0 %v257
        %v428 = vpop.f32.mrb[0].mxu0
        %v429 = vadd.f32 %v327, %v428
        %v430 = vpop.f32.mrb[0].mxu0
        %v431 = vadd.f32 %v331, %v430
        %432 = vdwg.mxu0
        %433 = vmatprep.subr.mxu0 %v261
        %434 = vmatpush1.msra.mxu0 %v260
        %435 = vmatprep.subr.mxu0 %v265
        %436 = vmatpush1.msra.mxu0 %v264
        %437 = vmatprep.subr.mxu0 %v269
        %438 = vmatpush1.msra.mxu0 %v268
        %439 = vmatprep.subr.mxu0 %v273
        %440 = vmatpush1.msra.mxu0 %v272
        %441 = vmatprep.subr.mxu0 %v277
        %442 = vmatpush1.msra.mxu0 %v276
        %443 = vmatprep.subr.mxu0 %v281
        %444 = vmatpush1.msra.mxu0 %v280
        %445 = vmatprep.subr.mxu0 %v285
        %446 = vmatpush1.msra.mxu0 %v284
        %447 = vmatprep.subr.mxu0 %v289
        %448 = vmatpush1.msra.mxu0 %v288
        %449 = vmatprep.subr.mxu0 %v293
        %450 = vmatpush1.msra.mxu0 %v292
        %451 = vmatprep.subr.mxu0 %v297
        %452 = vmatpush1.msra.mxu0 %v296
        %453 = vmatprep.subr.mxu0 %v301
        %454 = vmatpush1.msra.mxu0 %v300
        %455 = vmatprep.subr.mxu0 %v305
        %456 = vmatpush1.msra.mxu0 %v304
        %457 = vmatprep.subr.mxu0 %v309
        %458 = vmatpush1.msra.mxu0 %v308
        %459 = vmatprep.subr.mxu0 %v313
        %460 = vmatpush1.msra.mxu0 %v312
        %461 = vmatprep.subr.mxu0 %v317
        %462 = vmatpush1.msra.mxu0 %v316
        %463 = vmatprep.subr.mxu0 %v321
        %464 = vmatpush1.msra.mxu0 %v320
        %465 = vmatprep.subr.mxu0 0.0
        %466 = vmatpush1.msra.mxu0 0.0
        %467 = vmatprep.subr.mxu0 0.0
        %468 = vmatpush1.msra.mxu0 0.0
        %469 = vmatprep.subr.mxu0 0.0
        %470 = vmatpush1.msra.mxu0 0.0
        %471 = vmatprep.subr.mxu0 0.0
        %472 = vmatpush1.msra.mxu0 0.0
        %473 = vmatprep.subr.mxu0 0.0
        %474 = vmatpush1.msra.mxu0 0.0
        %475 = vmatprep.subr.mxu0 0.0
        %476 = vmatpush1.msra.mxu0 0.0
        %477 = vmatprep.subr.mxu0 0.0
        %478 = vmatpush1.msra.mxu0 0.0
        %479 = vmatprep.subr.mxu0 0.0
        %480 = vmatpush1.msra.mxu0 0.0
        %481 = vmatprep.subr.mxu0 0.0
        %482 = vmatpush1.msra.mxu0 0.0
        %483 = vmatprep.subr.mxu0 0.0
        %484 = vmatpush1.msra.mxu0 0.0
        %485 = vmatprep.subr.mxu0 0.0
        %486 = vmatpush1.msra.mxu0 0.0
        %487 = vmatprep.subr.mxu0 0.0
        %488 = vmatpush1.msra.mxu0 0.0
        %489 = vmatprep.subr.mxu0 0.0
        %490 = vmatpush1.msra.mxu0 0.0
        %491 = vmatprep.subr.mxu0 0.0
        %492 = vmatpush1.msra.mxu0 0.0
        %493 = vmatprep.subr.mxu0 0.0
        %494 = vmatpush1.msra.mxu0 0.0
        %495 = vmatprep.subr.mxu0 0.0
        %496 = vmatpush1.msra.mxu0 0.0
        %497 = vmatprep.mubr.f32.mxu0 0.0
        %498 = vmatmul.mubr.f32.gmra.mrb[0].mxu0 %v254
        %v499 = vpop.f32.mrb[0].mxu0
        %v500 = vadd.f32 %v335, %v499
        %v501 = vpop.f32.mrb[0].mxu0
        %v502 = vadd.f32 %v339, %v501
        %503 = vmatprep.mubr.f32.mxu0 0.0
        %504 = vmatmul.mubr.f32.gmra.mrb[0].mxu0 %v255
        %v505 = vpop.f32.mrb[0].mxu0
        %v506 = vadd.f32 %v335, %v505
        %v507 = vpop.f32.mrb[0].mxu0
        %v508 = vadd.f32 %v339, %v507
        %509 = vmatprep.mubr.f32.mxu0 0.0
        %510 = vmatmul.mubr.f32.gmra.mrb[0].mxu0 %v256
        %v511 = vpop.f32.mrb[0].mxu0
        %v512 = vadd.f32 %v335, %v511
        %v513 = vpop.f32.mrb[0].mxu0
        %v514 = vadd.f32 %v339, %v513
        %515 = vmatprep.mubr.f32.mxu0 0.0
        %516 = vmatmul.mubr.f32.gmra.mrb[0].mxu0 %v257
        %v517 = vpop.f32.mrb[0].mxu0
        %v518 = vadd.f32 %v335, %v517
        %v519 = vpop.f32.mrb[0].mxu0
        %v520 = vadd.f32 %v339, %v519
        %521 = vdwg.mxu0
        %522 = vst [vmem:[#allocation2] sm:$0xff] %v411
        %523 = vst [vmem:[#allocation2 + $0x8] sm:$0xff] %v413
        %524 = vst [vmem:[#allocation2 + $0x10] sm:$0xff] %v500
        %525 = vst [vmem:[#allocation2 + $0x18] sm:$0xff] %v502
        %526 = vst [vmem:[#allocation2 + $0x20] sm:$0xff] %v417
        %527 = vst [vmem:[#allocation2 + $0x28] sm:$0xff] %v419
        %528 = vst [vmem:[#allocation2 + $0x30] sm:$0xff] %v506
        %529 = vst [vmem:[#allocation2 + $0x38] sm:$0xff] %v508
        %530 = vst [vmem:[#allocation2 + $0x40] sm:$0xff] %v423
        %531 = vst [vmem:[#allocation2 + $0x48] sm:$0xff] %v425
        %532 = vst [vmem:[#allocation2 + $0x50] sm:$0xff] %v512
        %533 = vst [vmem:[#allocation2 + $0x58] sm:$0xff] %v514
        %534 = vst [vmem:[#allocation2 + $0x60] sm:$0xff] %v429
        %535 = vst [vmem:[#allocation2 + $0x68] sm:$0xff] %v431
        %536 = vst [vmem:[#allocation2 + $0x70] sm:$0xff] %v518
        %537 = vst [vmem:[#allocation2 + $0x78] sm:$0xff] %v520
        %v538 = vld [vmem:[#allocation3] sm:$0xff]
        %v539 = vld [vmem:[#allocation4] sm:$0xff]
        %v540 = vld [vmem:[#allocation2] sm:$0xff]
        %v541 = vld [vmem:[#allocation2 + $0x8] sm:$0xff]
        %v542 = vld [vmem:[#allocation2 + $0x10] sm:$0xff]
        %v543 = vld [vmem:[#allocation2 + $0x18] sm:$0xff]
        %v544 = vld [vmem:[%s2] sm:$0xff]
        %v545 = vld [vmem:[%s2 + $0x8] sm:$0xff]
        %v546 = vld [vmem:[%s2 + $0x10] sm:$0xff]
        %v547 = vld [vmem:[%s2 + $0x18] sm:$0xff]
        %v548 = vld [vmem:[%s2 + $0x20] sm:$0xff]
        %v549 = vld [vmem:[%s2 + $0x28] sm:$0xff]
        %v550 = vld [vmem:[%s2 + $0x30] sm:$0xff]
        %v551 = vld [vmem:[%s2 + $0x38] sm:$0xff]
        %v552 = vld [vmem:[%s2 + $0x40] sm:$0xff]
        %v553 = vld [vmem:[%s2 + $0x48] sm:$0xff]
        %v554 = vld [vmem:[%s2 + $0x50] sm:$0xff]
        %v555 = vld [vmem:[%s2 + $0x58] sm:$0xff]
        %v556 = vld [vmem:[%s2 + $0x60] sm:$0xff]
        %v557 = vld [vmem:[%s2 + $0x68] sm:$0xff]
        %v558 = vld [vmem:[%s2 + $0x70] sm:$0xff]
        %v559 = vld [vmem:[%s2 + $0x78] sm:$0xff]
        %v560 = vld [vmem:[%s2 + $0x80] sm:$0xff]
        %v561 = vld [vmem:[%s2 + $0x88] sm:$0xff]
        %v562 = vld [vmem:[%s2 + $0x90] sm:$0xff]
        %v563 = vld [vmem:[%s2 + $0x98] sm:$0xff]
        %v564 = vld [vmem:[%s2 + $0xa0] sm:$0xff]
        %v565 = vld [vmem:[%s2 + $0xa8] sm:$0xff]
        %v566 = vld [vmem:[%s2 + $0xb0] sm:$0xff]
        %v567 = vld [vmem:[%s2 + $0xb8] sm:$0xff]
        %v568 = vld [vmem:[%s2 + $0xc0] sm:$0xff]
        %v569 = vld [vmem:[%s2 + $0xc8] sm:$0xff]
        %v570 = vld [vmem:[%s2 + $0xd0] sm:$0xff]
        %v571 = vld [vmem:[%s2 + $0xd8] sm:$0xff]
        %v572 = vld [vmem:[%s2 + $0xe0] sm:$0xff]
        %v573 = vld [vmem:[%s2 + $0xe8] sm:$0xff]
        %v574 = vld [vmem:[%s2 + $0xf0] sm:$0xff]
        %v575 = vld [vmem:[%s2 + $0xf8] sm:$0xff]
        %v576 = vld [vmem:[%s2 + $0x100] sm:$0xff]
        %v577 = vld [vmem:[%s2 + $0x108] sm:$0xff]
        %v578 = vld [vmem:[%s2 + $0x110] sm:$0xff]
        %v579 = vld [vmem:[%s2 + $0x118] sm:$0xff]
        %v580 = vld [vmem:[%s2 + $0x120] sm:$0xff]
        %v581 = vld [vmem:[%s2 + $0x128] sm:$0xff]
        %v582 = vld [vmem:[%s2 + $0x130] sm:$0xff]
        %v583 = vld [vmem:[%s2 + $0x138] sm:$0xff]
        %v584 = vld [vmem:[%s2 + $0x140] sm:$0xff]
        %v585 = vld [vmem:[%s2 + $0x148] sm:$0xff]
        %v586 = vld [vmem:[%s2 + $0x150] sm:$0xff]
        %v587 = vld [vmem:[%s2 + $0x158] sm:$0xff]
        %v588 = vld [vmem:[%s2 + $0x160] sm:$0xff]
        %v589 = vld [vmem:[%s2 + $0x168] sm:$0xff]
        %v590 = vld [vmem:[%s2 + $0x170] sm:$0xff]
        %v591 = vld [vmem:[%s2 + $0x178] sm:$0xff]
        %v592 = vld [vmem:[%s2 + $0x180] sm:$0xff]
        %v593 = vld [vmem:[%s2 + $0x188] sm:$0xff]
        %v594 = vld [vmem:[%s2 + $0x190] sm:$0xff]
        %v595 = vld [vmem:[%s2 + $0x198] sm:$0xff]
        %v596 = vld [vmem:[%s2 + $0x1a0] sm:$0xff]
        %v597 = vld [vmem:[%s2 + $0x1a8] sm:$0xff]
        %v598 = vld [vmem:[%s2 + $0x1b0] sm:$0xff]
        %v599 = vld [vmem:[%s2 + $0x1b8] sm:$0xff]
        %v600 = vld [vmem:[%s2 + $0x1c0] sm:$0xff]
        %v601 = vld [vmem:[%s2 + $0x1c8] sm:$0xff]
        %v602 = vld [vmem:[%s2 + $0x1d0] sm:$0xff]
        %v603 = vld [vmem:[%s2 + $0x1d8] sm:$0xff]
        %v604 = vld [vmem:[%s2 + $0x1e0] sm:$0xff]
        %v605 = vld [vmem:[%s2 + $0x1e8] sm:$0xff]
        %v606 = vld [vmem:[%s2 + $0x1f0] sm:$0xff]
        %v607 = vld [vmem:[%s2 + $0x1f8] sm:$0xff]
        %608 = vmatprep.subr.mxu0 %v545
        %609 = vmatpush1.msra.mxu0 %v544
        %610 = vmatprep.subr.mxu0 %v549
        %611 = vmatpush1.msra.mxu0 %v548
        %612 = vmatprep.subr.mxu0 %v553
        %613 = vmatpush1.msra.mxu0 %v552
        %614 = vmatprep.subr.mxu0 %v557
        %615 = vmatpush1.msra.mxu0 %v556
        %616 = vmatprep.subr.mxu0 %v561
        %617 = vmatpush1.msra.mxu0 %v560
        %618 = vmatprep.subr.mxu0 %v565
        %619 = vmatpush1.msra.mxu0 %v564
        %620 = vmatprep.subr.mxu0 %v569
        %621 = vmatpush1.msra.mxu0 %v568
        %622 = vmatprep.subr.mxu0 %v573
        %623 = vmatpush1.msra.mxu0 %v572
        %624 = vmatprep.subr.mxu0 %v577
        %625 = vmatpush1.msra.mxu0 %v576
        %626 = vmatprep.subr.mxu0 %v581
        %627 = vmatpush1.msra.mxu0 %v580
        %628 = vmatprep.subr.mxu0 %v585
        %629 = vmatpush1.msra.mxu0 %v584
        %630 = vmatprep.subr.mxu0 %v589
        %631 = vmatpush1.msra.mxu0 %v588
        %632 = vmatprep.subr.mxu0 %v593
        %633 = vmatpush1.msra.mxu0 %v592
        %634 = vmatprep.subr.mxu0 %v597
        %635 = vmatpush1.msra.mxu0 %v596
        %636 = vmatprep.subr.mxu0 %v601
        %637 = vmatpush1.msra.mxu0 %v600
        %638 = vmatprep.subr.mxu0 %v605
        %639 = vmatpush1.msra.mxu0 %v604
        %640 = vmatprep.subr.mxu0 0.0
        %641 = vmatpush1.msra.mxu0 0.0
        %642 = vmatprep.subr.mxu0 0.0
        %643 = vmatpush1.msra.mxu0 0.0
        %644 = vmatprep.subr.mxu0 0.0
        %645 = vmatpush1.msra.mxu0 0.0
        %646 = vmatprep.subr.mxu0 0.0
        %647 = vmatpush1.msra.mxu0 0.0
        %648 = vmatprep.subr.mxu0 0.0
        %649 = vmatpush1.msra.mxu0 0.0
        %650 = vmatprep.subr.mxu0 0.0
        %651 = vmatpush1.msra.mxu0 0.0
        %652 = vmatprep.subr.mxu0 0.0
        %653 = vmatpush1.msra.mxu0 0.0
        %654 = vmatprep.subr.mxu0 0.0
        %655 = vmatpush1.msra.mxu0 0.0
        %656 = vmatprep.subr.mxu0 0.0
        %657 = vmatpush1.msra.mxu0 0.0
        %658 = vmatprep.subr.mxu0 0.0
        %659 = vmatpush1.msra.mxu0 0.0
        %660 = vmatprep.subr.mxu0 0.0
        %661 = vmatpush1.msra.mxu0 0.0
        %662 = vmatprep.subr.mxu0 0.0
        %663 = vmatpush1.msra.mxu0 0.0
        %664 = vmatprep.subr.mxu0 0.0
        %665 = vmatpush1.msra.mxu0 0.0
        %666 = vmatprep.subr.mxu0 0.0
        %667 = vmatpush1.msra.mxu0 0.0
        %668 = vmatprep.subr.mxu0 0.0
        %669 = vmatpush1.msra.mxu0 0.0
        %670 = vmatprep.subr.mxu0 0.0
        %671 = vmatpush1.msra.mxu0 0.0
        %672 = vmatprep.mubr.f32.mxu0 0.0
        %673 = vmatmul.mubr.f32.gmra.mrb[0].mxu0 %v538
        %v674 = vpop.f32.mrb[0].mxu0
        %v675 = vadd.f32 0.0, %v674
        %v676 = vpop.f32.mrb[0].mxu0
        %v677 = vadd.f32 0.0, %v676
        %678 = vdwg.mxu0
        %679 = vmatprep.subr.mxu0 %v547
        %680 = vmatpush1.msra.mxu0 %v546
        %681 = vmatprep.subr.mxu0 %v551
        %682 = vmatpush1.msra.mxu0 %v550
        %683 = vmatprep.subr.mxu0 %v555
        %684 = vmatpush1.msra.mxu0 %v554
        %685 = vmatprep.subr.mxu0 %v559
        %686 = vmatpush1.msra.mxu0 %v558
        %687 = vmatprep.subr.mxu0 %v563
        %688 = vmatpush1.msra.mxu0 %v562
        %689 = vmatprep.subr.mxu0 %v567
        %690 = vmatpush1.msra.mxu0 %v566
        %691 = vmatprep.subr.mxu0 %v571
        %692 = vmatpush1.msra.mxu0 %v570
        %693 = vmatprep.subr.mxu0 %v575
        %694 = vmatpush1.msra.mxu0 %v574
        %695 = vmatprep.subr.mxu0 %v579
        %696 = vmatpush1.msra.mxu0 %v578
        %697 = vmatprep.subr.mxu0 %v583
        %698 = vmatpush1.msra.mxu0 %v582
        %699 = vmatprep.subr.mxu0 %v587
        %700 = vmatpush1.msra.mxu0 %v586
        %701 = vmatprep.subr.mxu0 %v591
        %702 = vmatpush1.msra.mxu0 %v590
        %703 = vmatprep.subr.mxu0 %v595
        %704 = vmatpush1.msra.mxu0 %v594
        %705 = vmatprep.subr.mxu0 %v599
        %706 = vmatpush1.msra.mxu0 %v598
        %707 = vmatprep.subr.mxu0 %v603
        %708 = vmatpush1.msra.mxu0 %v602
        %709 = vmatprep.subr.mxu0 %v607
        %710 = vmatpush1.msra.mxu0 %v606
        %711 = vmatprep.subr.mxu0 0.0
        %712 = vmatpush1.msra.mxu0 0.0
        %713 = vmatprep.subr.mxu0 0.0
        %714 = vmatpush1.msra.mxu0 0.0
        %715 = vmatprep.subr.mxu0 0.0
        %716 = vmatpush1.msra.mxu0 0.0
        %717 = vmatprep.subr.mxu0 0.0
        %718 = vmatpush1.msra.mxu0 0.0
        %719 = vmatprep.subr.mxu0 0.0
        %720 = vmatpush1.msra.mxu0 0.0
        %721 = vmatprep.subr.mxu0 0.0
        %722 = vmatpush1.msra.mxu0 0.0
        %723 = vmatprep.subr.mxu0 0.0
        %724 = vmatpush1.msra.mxu0 0.0
        %725 = vmatprep.subr.mxu0 0.0
        %726 = vmatpush1.msra.mxu0 0.0
        %727 = vmatprep.subr.mxu0 0.0
        %728 = vmatpush1.msra.mxu0 0.0
        %729 = vmatprep.subr.mxu0 0.0
        %730 = vmatpush1.msra.mxu0 0.0
        %731 = vmatprep.subr.mxu0 0.0
        %732 = vmatpush1.msra.mxu0 0.0
        %733 = vmatprep.subr.mxu0 0.0
        %734 = vmatpush1.msra.mxu0 0.0
        %735 = vmatprep.subr.mxu0 0.0
        %736 = vmatpush1.msra.mxu0 0.0
        %737 = vmatprep.subr.mxu0 0.0
        %738 = vmatpush1.msra.mxu0 0.0
        %739 = vmatprep.subr.mxu0 0.0
        %740 = vmatpush1.msra.mxu0 0.0
        %741 = vmatprep.subr.mxu0 0.0
        %742 = vmatpush1.msra.mxu0 0.0
        %743 = vmatprep.mubr.f32.mxu0 0.0
        %744 = vmatmul.mubr.f32.gmra.mrb[0].mxu0 %v538
        %v745 = vpop.f32.mrb[0].mxu0
        %v746 = vadd.f32 0.0, %v745
        %v747 = vpop.f32.mrb[0].mxu0
        %v748 = vadd.f32 0.0, %v747
        %749 = vdwg.mxu0
        %v750 = vadd.f32 %v540, %v675
        %v751 = vadd.f32 %v541, %v677
        %v752 = vadd.f32 %v542, %v746
        %v753 = vadd.f32 %v543, %v748
        %v754 = vxor.u32 %v750, 2147483648
        %v755 = vxor.u32 %v751, 2147483648
        %v756 = vxor.u32 %v752, 2147483648
        %v757 = vmul.f32 %v754, 1.442695
        %v758 = vpow.pop %v757
        %v759 = vmul.f32 %v755, 1.442695
        %v760 = vpow.pop %v759
        %v761 = vmul.f32 %v756, 1.442695
        %v762 = vpow.pop %v761
        %v763 = vadd.f32 %v758, 1.0
        %v764 = vadd.f32 %v760, 1.0
        %v765 = vadd.f32 %v762, 1.0
        %v766 = vrcp.pop %v763
        %v767 = vmul.f32 1.0, %v766
        %v768 = vrcp.pop %v764
        %v769 = vmul.f32 1.0, %v768
        %v770 = vrcp.pop %v765
        %v771 = vmul.f32 1.0, %v770
        %v772 = vtanh.pop %v753
        %v773 = vmul.f32 %v769, %v539
        %v774 = vmul.f32 %v767, %v772
        %v775 = vadd.f32 %v773, %v774
        %v776 = vtanh.pop %v775
        %v777 = vmul.f32 %v771, %v776
        %778 = vst [vmem:[%s236] sm:$0xff] %v777
        %s779 = scalar_lea.vmem [#allocation2], 32
        %v780 = vld [vmem:[%s779] sm:$0xff]
        %v781 = vld [vmem:[%s779 + $0x8] sm:$0xff]
        %v782 = vld [vmem:[%s779 + $0x10] sm:$0xff]
        %v783 = vld [vmem:[%s779 + $0x18] sm:$0xff]
        %v784 = vld [vmem:[%s2] sm:$0xff]
        %v785 = vld [vmem:[%s2 + $0x8] sm:$0xff]
        %v786 = vld [vmem:[%s2 + $0x10] sm:$0xff]
        %v787 = vld [vmem:[%s2 + $0x18] sm:$0xff]
        %v788 = vld [vmem:[%s2 + $0x20] sm:$0xff]
        %v789 = vld [vmem:[%s2 + $0x28] sm:$0xff]
        %v790 = vld [vmem:[%s2 + $0x30] sm:$0xff]
        %v791 = vld [vmem:[%s2 + $0x38] sm:$0xff]
        %v792 = vld [vmem:[%s2 + $0x40] sm:$0xff]
        %v793 = vld [vmem:[%s2 + $0x48] sm:$0xff]
        %v794 = vld [vmem:[%s2 + $0x50] sm:$0xff]
        %v795 = vld [vmem:[%s2 + $0x58] sm:$0xff]
        %v796 = vld [vmem:[%s2 + $0x60] sm:$0xff]
        %v797 = vld [vmem:[%s2 + $0x68] sm:$0xff]
        %v798 = vld [vmem:[%s2 + $0x70] sm:$0xff]
        %v799 = vld [vmem:[%s2 + $0x78] sm:$0xff]
        %v800 = vld [vmem:[%s2 + $0x80] sm:$0xff]
        %v801 = vld [vmem:[%s2 + $0x88] sm:$0xff]
        %v802 = vld [vmem:[%s2 + $0x90] sm:$0xff]
        %v803 = vld [vmem:[%s2 + $0x98] sm:$0xff]
        %v804 = vld [vmem:[%s2 + $0xa0] sm:$0xff]
        %v805 = vld [vmem:[%s2 + $0xa8] sm:$0xff]
        %v806 = vld [vmem:[%s2 + $0xb0] sm:$0xff]
        %v807 = vld [vmem:[%s2 + $0xb8] sm:$0xff]
        %v808 = vld [vmem:[%s2 + $0xc0] sm:$0xff]
        %v809 = vld [vmem:[%s2 + $0xc8] sm:$0xff]
        %v810 = vld [vmem:[%s2 + $0xd0] sm:$0xff]
        %v811 = vld [vmem:[%s2 + $0xd8] sm:$0xff]
        %v812 = vld [vmem:[%s2 + $0xe0] sm:$0xff]
        %v813 = vld [vmem:[%s2 + $0xe8] sm:$0xff]
        %v814 = vld [vmem:[%s2 + $0xf0] sm:$0xff]
        %v815 = vld [vmem:[%s2 + $0xf8] sm:$0xff]
        %v816 = vld [vmem:[%s2 + $0x100] sm:$0xff]
        %v817 = vld [vmem:[%s2 + $0x108] sm:$0xff]
        %v818 = vld [vmem:[%s2 + $0x110] sm:$0xff]
        %v819 = vld [vmem:[%s2 + $0x118] sm:$0xff]
        %v820 = vld [vmem:[%s2 + $0x120] sm:$0xff]
        %v821 = vld [vmem:[%s2 + $0x128] sm:$0xff]
        %v822 = vld [vmem:[%s2 + $0x130] sm:$0xff]
        %v823 = vld [vmem:[%s2 + $0x138] sm:$0xff]
        %v824 = vld [vmem:[%s2 + $0x140] sm:$0xff]
        %v825 = vld [vmem:[%s2 + $0x148] sm:$0xff]
        %v826 = vld [vmem:[%s2 + $0x150] sm:$0xff]
        %v827 = vld [vmem:[%s2 + $0x158] sm:$0xff]
        %v828 = vld [vmem:[%s2 + $0x160] sm:$0xff]
        %v829 = vld [vmem:[%s2 + $0x168] sm:$0xff]
        %v830 = vld [vmem:[%s2 + $0x170] sm:$0xff]
        %v831 = vld [vmem:[%s2 + $0x178] sm:$0xff]
        %v832 = vld [vmem:[%s2 + $0x180] sm:$0xff]
        %v833 = vld [vmem:[%s2 + $0x188] sm:$0xff]
        %v834 = vld [vmem:[%s2 + $0x190] sm:$0xff]
        %v835 = vld [vmem:[%s2 + $0x198] sm:$0xff]
        %v836 = vld [vmem:[%s2 + $0x1a0] sm:$0xff]
        %v837 = vld [vmem:[%s2 + $0x1a8] sm:$0xff]
        %v838 = vld [vmem:[%s2 + $0x1b0] sm:$0xff]
        %v839 = vld [vmem:[%s2 + $0x1b8] sm:$0xff]
        %v840 = vld [vmem:[%s2 + $0x1c0] sm:$0xff]
        %v841 = vld [vmem:[%s2 + $0x1c8] sm:$0xff]
        %v842 = vld [vmem:[%s2 + $0x1d0] sm:$0xff]
        %v843 = vld [vmem:[%s2 + $0x1d8] sm:$0xff]
        %v844 = vld [vmem:[%s2 + $0x1e0] sm:$0xff]
        %v845 = vld [vmem:[%s2 + $0x1e8] sm:$0xff]
        %v846 = vld [vmem:[%s2 + $0x1f0] sm:$0xff]
        %v847 = vld [vmem:[%s2 + $0x1f8] sm:$0xff]
        %848 = vmatprep.subr.mxu0 %v785
        %849 = vmatpush1.msra.mxu0 %v784
        %850 = vmatprep.subr.mxu0 %v789
        %851 = vmatpush1.msra.mxu0 %v788
        %852 = vmatprep.subr.mxu0 %v793
        %853 = vmatpush1.msra.mxu0 %v792
        %854 = vmatprep.subr.mxu0 %v797
        %855 = vmatpush1.msra.mxu0 %v796
        %856 = vmatprep.subr.mxu0 %v801
        %857 = vmatpush1.msra.mxu0 %v800
        %858 = vmatprep.subr.mxu0 %v805
        %859 = vmatpush1.msra.mxu0 %v804
        %860 = vmatprep.subr.mxu0 %v809
        %861 = vmatpush1.msra.mxu0 %v808
        %862 = vmatprep.subr.mxu0 %v813
        %863 = vmatpush1.msra.mxu0 %v812
        %864 = vmatprep.subr.mxu0 %v817
        %865 = vmatpush1.msra.mxu0 %v816
        %866 = vmatprep.subr.mxu0 %v821
        %867 = vmatpush1.msra.mxu0 %v820
        %868 = vmatprep.subr.mxu0 %v825
        %869 = vmatpush1.msra.mxu0 %v824
        %870 = vmatprep.subr.mxu0 %v829
        %871 = vmatpush1.msra.mxu0 %v828
        %872 = vmatprep.subr.mxu0 %v833
        %873 = vmatpush1.msra.mxu0 %v832
        %874 = vmatprep.subr.mxu0 %v837
        %875 = vmatpush1.msra.mxu0 %v836
        %876 = vmatprep.subr.mxu0 %v841
        %877 = vmatpush1.msra.mxu0 %v840
        %878 = vmatprep.subr.mxu0 %v845
        %879 = vmatpush1.msra.mxu0 %v844
        %880 = vmatprep.subr.mxu0 0.0
        %881 = vmatpush1.msra.mxu0 0.0
        %882 = vmatprep.subr.mxu0 0.0
        %883 = vmatpush1.msra.mxu0 0.0
        %884 = vmatprep.subr.mxu0 0.0
        %885 = vmatpush1.msra.mxu0 0.0
        %886 = vmatprep.subr.mxu0 0.0
        %887 = vmatpush1.msra.mxu0 0.0
        %888 = vmatprep.subr.mxu0 0.0
        %889 = vmatpush1.msra.mxu0 0.0
        %890 = vmatprep.subr.mxu0 0.0
        %891 = vmatpush1.msra.mxu0 0.0
        %892 = vmatprep.subr.mxu0 0.0
        %893 = vmatpush1.msra.mxu0 0.0
        %894 = vmatprep.subr.mxu0 0.0
        %895 = vmatpush1.msra.mxu0 0.0
        %896 = vmatprep.subr.mxu0 0.0
        %897 = vmatpush1.msra.mxu0 0.0
        %898 = vmatprep.subr.mxu0 0.0
        %899 = vmatpush1.msra.mxu0 0.0
        %900 = vmatprep.subr.mxu0 0.0
        %901 = vmatpush1.msra.mxu0 0.0
        %902 = vmatprep.subr.mxu0 0.0
        %903 = vmatpush1.msra.mxu0 0.0
        %904 = vmatprep.subr.mxu0 0.0
        %905 = vmatpush1.msra.mxu0 0.0
        %906 = vmatprep.subr.mxu0 0.0
        %907 = vmatpush1.msra.mxu0 0.0
        %908 = vmatprep.subr.mxu0 0.0
        %909 = vmatpush1.msra.mxu0 0.0
        %910 = vmatprep.subr.mxu0 0.0
        %911 = vmatpush1.msra.mxu0 0.0
        %912 = vmatprep.mubr.f32.mxu0 0.0
        %913 = vmatmul.mubr.f32.gmra.mrb[0].mxu0 %v777
        %v914 = vpop.f32.mrb[0].mxu0
        %v915 = vadd.f32 0.0, %v914
        %v916 = vpop.f32.mrb[0].mxu0
        %v917 = vadd.f32 0.0, %v916
        %918 = vdwg.mxu0
        %919 = vmatprep.subr.mxu0 %v787
        %920 = vmatpush1.msra.mxu0 %v786
        %921 = vmatprep.subr.mxu0 %v791
        %922 = vmatpush1.msra.mxu0 %v790
        %923 = vmatprep.subr.mxu0 %v795
        %924 = vmatpush1.msra.mxu0 %v794
        %925 = vmatprep.subr.mxu0 %v799
        %926 = vmatpush1.msra.mxu0 %v798
        %927 = vmatprep.subr.mxu0 %v803
        %928 = vmatpush1.msra.mxu0 %v802
        %929 = vmatprep.subr.mxu0 %v807
        %930 = vmatpush1.msra.mxu0 %v806
        %931 = vmatprep.subr.mxu0 %v811
        %932 = vmatpush1.msra.mxu0 %v810
        %933 = vmatprep.subr.mxu0 %v815
        %934 = vmatpush1.msra.mxu0 %v814
        %935 = vmatprep.subr.mxu0 %v819
        %936 = vmatpush1.msra.mxu0 %v818
        %937 = vmatprep.subr.mxu0 %v823
        %938 = vmatpush1.msra.mxu0 %v822
        %939 = vmatprep.subr.mxu0 %v827
        %940 = vmatpush1.msra.mxu0 %v826
        %941 = vmatprep.subr.mxu0 %v831
        %942 = vmatpush1.msra.mxu0 %v830
        %943 = vmatprep.subr.mxu0 %v835
        %944 = vmatpush1.msra.mxu0 %v834
        %945 = vmatprep.subr.mxu0 %v839
        %946 = vmatpush1.msra.mxu0 %v838
        %947 = vmatprep.subr.mxu0 %v843
        %948 = vmatpush1.msra.mxu0 %v842
        %949 = vmatprep.subr.mxu0 %v847
        %950 = vmatpush1.msra.mxu0 %v846
        %951 = vmatprep.subr.mxu0 0.0
        %952 = vmatpush1.msra.mxu0 0.0
        %953 = vmatprep.subr.mxu0 0.0
        %954 = vmatpush1.msra.mxu0 0.0
        %955 = vmatprep.subr.mxu0 0.0
        %956 = vmatpush1.msra.mxu0 0.0
        %957 = vmatprep.subr.mxu0 0.0
        %958 = vmatpush1.msra.mxu0 0.0
        %959 = vmatprep.subr.mxu0 0.0
        %960 = vmatpush1.msra.mxu0 0.0
        %961 = vmatprep.subr.mxu0 0.0
        %962 = vmatpush1.msra.mxu0 0.0
        %963 = vmatprep.subr.mxu0 0.0
        %964 = vmatpush1.msra.mxu0 0.0
        %965 = vmatprep.subr.mxu0 0.0
        %966 = vmatpush1.msra.mxu0 0.0
        %967 = vmatprep.subr.mxu0 0.0
        %968 = vmatpush1.msra.mxu0 0.0
        %969 = vmatprep.subr.mxu0 0.0
        %970 = vmatpush1.msra.mxu0 0.0
        %971 = vmatprep.subr.mxu0 0.0
        %972 = vmatpush1.msra.mxu0 0.0
        %973 = vmatprep.subr.mxu0 0.0
        %974 = vmatpush1.msra.mxu0 0.0
        %975 = vmatprep.subr.mxu0 0.0
        %976 = vmatpush1.msra.mxu0 0.0
        %977 = vmatprep.subr.mxu0 0.0
        %978 = vmatpush1.msra.mxu0 0.0
        %979 = vmatprep.subr.mxu0 0.0
        %980 = vmatpush1.msra.mxu0 0.0
        %981 = vmatprep.subr.mxu0 0.0
        %982 = vmatpush1.msra.mxu0 0.0
        %983 = vmatprep.mubr.f32.mxu0 0.0
        %984 = vmatmul.mubr.f32.gmra.mrb[0].mxu0 %v777
        %v985 = vpop.f32.mrb[0].mxu0
        %v986 = vadd.f32 0.0, %v985
        %v987 = vpop.f32.mrb[0].mxu0
        %v988 = vadd.f32 0.0, %v987
        %989 = vdwg.mxu0
        %v990 = vadd.f32 %v780, %v915
        %v991 = vadd.f32 %v781, %v917
        %v992 = vadd.f32 %v782, %v986
        %v993 = vadd.f32 %v783, %v988
        %v994 = vxor.u32 %v990, 2147483648
        %v995 = vxor.u32 %v991, 2147483648
        %v996 = vxor.u32 %v992, 2147483648
        %v997 = vmul.f32 %v994, 1.442695
        %v998 = vpow.pop %v997
        %v999 = vmul.f32 %v995, 1.442695
        %v1000 = vpow.pop %v999
        %v1001 = vmul.f32 %v996, 1.442695
        %v1002 = vpow.pop %v1001
        %v1003 = vadd.f32 %v998, 1.0
        %v1004 = vadd.f32 %v1000, 1.0
        %v1005 = vadd.f32 %v1002, 1.0
        %v1006 = vrcp.pop %v1003
        %v1007 = vmul.f32 1.0, %v1006
        %v1008 = vrcp.pop %v1004
        %v1009 = vmul.f32 1.0, %v1008
        %v1010 = vrcp.pop %v1005
        %v1011 = vmul.f32 1.0, %v1010
        %v1012 = vtanh.pop %v993
        %v1013 = vmul.f32 %v1009, %v775
        %v1014 = vmul.f32 %v1007, %v1012
        %v1015 = vadd.f32 %v1013, %v1014
        %v1016 = vtanh.pop %v1015
        %v1017 = vmul.f32 %v1011, %v1016
        %s1018 = scalar_lea.vmem %s236, 8 [#allocation5]
        %1019 = vst [vmem:[%s1018] sm:$0xff] %v1017
        %s1020 = scalar_lea.vmem [#allocation2], 64
        %v1021 = vld [vmem:[%s1020] sm:$0xff]
        %v1022 = vld [vmem:[%s1020 + $0x8] sm:$0xff]
        %v1023 = vld [vmem:[%s1020 + $0x10] sm:$0xff]
        %v1024 = vld [vmem:[%s1020 + $0x18] sm:$0xff]
        %v1025 = vld [vmem:[%s2] sm:$0xff]
        %v1026 = vld [vmem:[%s2 + $0x8] sm:$0xff]
        %v1027 = vld [vmem:[%s2 + $0x10] sm:$0xff]
        %v1028 = vld [vmem:[%s2 + $0x18] sm:$0xff]
        %v1029 = vld [vmem:[%s2 + $0x20] sm:$0xff]
        %v1030 = vld [vmem:[%s2 + $0x28] sm:$0xff]
        %v1031 = vld [vmem:[%s2 + $0x30] sm:$0xff]
        %v1032 = vld [vmem:[%s2 + $0x38] sm:$0xff]
        %v1033 = vld [vmem:[%s2 + $0x40] sm:$0xff]
        %v1034 = vld [vmem:[%s2 + $0x48] sm:$0xff]
        %v1035 = vld [vmem:[%s2 + $0x50] sm:$0xff]
        %v1036 = vld [vmem:[%s2 + $0x58] sm:$0xff]
        %v1037 = vld [vmem:[%s2 + $0x60] sm:$0xff]
        %v1038 = vld [vmem:[%s2 + $0x68] sm:$0xff]
        %v1039 = vld [vmem:[%s2 + $0x70] sm:$0xff]
        %v1040 = vld [vmem:[%s2 + $0x78] sm:$0xff]
        %v1041 = vld [vmem:[%s2 + $0x80] sm:$0xff]
        %v1042 = vld [vmem:[%s2 + $0x88] sm:$0xff]
        %v1043 = vld [vmem:[%s2 + $0x90] sm:$0xff]
        %v1044 = vld [vmem:[%s2 + $0x98] sm:$0xff]
        %v1045 = vld [vmem:[%s2 + $0xa0] sm:$0xff]
        %v1046 = vld [vmem:[%s2 + $0xa8] sm:$0xff]
        %v1047 = vld [vmem:[%s2 + $0xb0] sm:$0xff]
        %v1048 = vld [vmem:[%s2 + $0xb8] sm:$0xff]
        %v1049 = vld [vmem:[%s2 + $0xc0] sm:$0xff]
        %v1050 = vld [vmem:[%s2 + $0xc8] sm:$0xff]
        %v1051 = vld [vmem:[%s2 + $0xd0] sm:$0xff]
        %v1052 = vld [vmem:[%s2 + $0xd8] sm:$0xff]
        %v1053 = vld [vmem:[%s2 + $0xe0] sm:$0xff]
        %v1054 = vld [vmem:[%s2 + $0xe8] sm:$0xff]
        %v1055 = vld [vmem:[%s2 + $0xf0] sm:$0xff]
        %v1056 = vld [vmem:[%s2 + $0xf8] sm:$0xff]
        %v1057 = vld [vmem:[%s2 + $0x100] sm:$0xff]
        %v1058 = vld [vmem:[%s2 + $0x108] sm:$0xff]
        %v1059 = vld [vmem:[%s2 + $0x110] sm:$0xff]
        %v1060 = vld [vmem:[%s2 + $0x118] sm:$0xff]
        %v1061 = vld [vmem:[%s2 + $0x120] sm:$0xff]
        %v1062 = vld [vmem:[%s2 + $0x128] sm:$0xff]
        %v1063 = vld [vmem:[%s2 + $0x130] sm:$0xff]
        %v1064 = vld [vmem:[%s2 + $0x138] sm:$0xff]
        %v1065 = vld [vmem:[%s2 + $0x140] sm:$0xff]
        %v1066 = vld [vmem:[%s2 + $0x148] sm:$0xff]
        %v1067 = vld [vmem:[%s2 + $0x150] sm:$0xff]
        %v1068 = vld [vmem:[%s2 + $0x158] sm:$0xff]
        %v1069 = vld [vmem:[%s2 + $0x160] sm:$0xff]
        %v1070 = vld [vmem:[%s2 + $0x168] sm:$0xff]
        %v1071 = vld [vmem:[%s2 + $0x170] sm:$0xff]
        %v1072 = vld [vmem:[%s2 + $0x178] sm:$0xff]
        %v1073 = vld [vmem:[%s2 + $0x180] sm:$0xff]
        %v1074 = vld [vmem:[%s2 + $0x188] sm:$0xff]
        %v1075 = vld [vmem:[%s2 + $0x190] sm:$0xff]
        %v1076 = vld [vmem:[%s2 + $0x198] sm:$0xff]
        %v1077 = vld [vmem:[%s2 + $0x1a0] sm:$0xff]
        %v1078 = vld [vmem:[%s2 + $0x1a8] sm:$0xff]
        %v1079 = vld [vmem:[%s2 + $0x1b0] sm:$0xff]
        %v1080 = vld [vmem:[%s2 + $0x1b8] sm:$0xff]
        %v1081 = vld [vmem:[%s2 + $0x1c0] sm:$0xff]
        %v1082 = vld [vmem:[%s2 + $0x1c8] sm:$0xff]
        %v1083 = vld [vmem:[%s2 + $0x1d0] sm:$0xff]
        %v1084 = vld [vmem:[%s2 + $0x1d8] sm:$0xff]
        %v1085 = vld [vmem:[%s2 + $0x1e0] sm:$0xff]
        %v1086 = vld [vmem:[%s2 + $0x1e8] sm:$0xff]
        %v1087 = vld [vmem:[%s2 + $0x1f0] sm:$0xff]
        %v1088 = vld [vmem:[%s2 + $0x1f8] sm:$0xff]
        %1089 = vmatprep.subr.mxu0 %v1026
        %1090 = vmatpush1.msra.mxu0 %v1025
        %1091 = vmatprep.subr.mxu0 %v1030
        %1092 = vmatpush1.msra.mxu0 %v1029
        %1093 = vmatprep.subr.mxu0 %v1034
        %1094 = vmatpush1.msra.mxu0 %v1033
        %1095 = vmatprep.subr.mxu0 %v1038
        %1096 = vmatpush1.msra.mxu0 %v1037
        %1097 = vmatprep.subr.mxu0 %v1042
        %1098 = vmatpush1.msra.mxu0 %v1041
        %1099 = vmatprep.subr.mxu0 %v1046
        %1100 = vmatpush1.msra.mxu0 %v1045
        %1101 = vmatprep.subr.mxu0 %v1050
        %1102 = vmatpush1.msra.mxu0 %v1049
        %1103 = vmatprep.subr.mxu0 %v1054
        %1104 = vmatpush1.msra.mxu0 %v1053
        %1105 = vmatprep.subr.mxu0 %v1058
        %1106 = vmatpush1.msra.mxu0 %v1057
        %1107 = vmatprep.subr.mxu0 %v1062
        %1108 = vmatpush1.msra.mxu0 %v1061
        %1109 = vmatprep.subr.mxu0 %v1066
        %1110 = vmatpush1.msra.mxu0 %v1065
        %1111 = vmatprep.subr.mxu0 %v1070
        %1112 = vmatpush1.msra.mxu0 %v1069
        %1113 = vmatprep.subr.mxu0 %v1074
        %1114 = vmatpush1.msra.mxu0 %v1073
        %1115 = vmatprep.subr.mxu0 %v1078
        %1116 = vmatpush1.msra.mxu0 %v1077
        %1117 = vmatprep.subr.mxu0 %v1082
        %1118 = vmatpush1.msra.mxu0 %v1081
        %1119 = vmatprep.subr.mxu0 %v1086
        %1120 = vmatpush1.msra.mxu0 %v1085
        %1121 = vmatprep.subr.mxu0 0.0
        %1122 = vmatpush1.msra.mxu0 0.0
        %1123 = vmatprep.subr.mxu0 0.0
        %1124 = vmatpush1.msra.mxu0 0.0
        %1125 = vmatprep.subr.mxu0 0.0
        %1126 = vmatpush1.msra.mxu0 0.0
        %1127 = vmatprep.subr.mxu0 0.0
        %1128 = vmatpush1.msra.mxu0 0.0
        %1129 = vmatprep.subr.mxu0 0.0
        %1130 = vmatpush1.msra.mxu0 0.0
        %1131 = vmatprep.subr.mxu0 0.0
        %1132 = vmatpush1.msra.mxu0 0.0
        %1133 = vmatprep.subr.mxu0 0.0
        %1134 = vmatpush1.msra.mxu0 0.0
        %1135 = vmatprep.subr.mxu0 0.0
        %1136 = vmatpush1.msra.mxu0 0.0
        %1137 = vmatprep.subr.mxu0 0.0
        %1138 = vmatpush1.msra.mxu0 0.0
        %1139 = vmatprep.subr.mxu0 0.0
        %1140 = vmatpush1.msra.mxu0 0.0
        %1141 = vmatprep.subr.mxu0 0.0
        %1142 = vmatpush1.msra.mxu0 0.0
        %1143 = vmatprep.subr.mxu0 0.0
        %1144 = vmatpush1.msra.mxu0 0.0
        %1145 = vmatprep.subr.mxu0 0.0
        %1146 = vmatpush1.msra.mxu0 0.0
        %1147 = vmatprep.subr.mxu0 0.0
        %1148 = vmatpush1.msra.mxu0 0.0
        %1149 = vmatprep.subr.mxu0 0.0
        %1150 = vmatpush1.msra.mxu0 0.0
        %1151 = vmatprep.subr.mxu0 0.0
        %1152 = vmatpush1.msra.mxu0 0.0
        %1153 = vmatprep.mubr.f32.mxu0 0.0
        %1154 = vmatmul.mubr.f32.gmra.mrb[0].mxu0 %v1017
        %v1155 = vpop.f32.mrb[0].mxu0
        %v1156 = vadd.f32 0.0, %v1155
        %v1157 = vpop.f32.mrb[0].mxu0
        %v1158 = vadd.f32 0.0, %v1157
        %1159 = vdwg.mxu0
        %1160 = vmatprep.subr.mxu0 %v1028
        %1161 = vmatpush1.msra.mxu0 %v1027
        %1162 = vmatprep.subr.mxu0 %v1032
        %1163 = vmatpush1.msra.mxu0 %v1031
        %1164 = vmatprep.subr.mxu0 %v1036
        %1165 = vmatpush1.msra.mxu0 %v1035
        %1166 = vmatprep.subr.mxu0 %v1040
        %1167 = vmatpush1.msra.mxu0 %v1039
        %1168 = vmatprep.subr.mxu0 %v1044
        %1169 = vmatpush1.msra.mxu0 %v1043
        %1170 = vmatprep.subr.mxu0 %v1048
        %1171 = vmatpush1.msra.mxu0 %v1047
        %1172 = vmatprep.subr.mxu0 %v1052
        %1173 = vmatpush1.msra.mxu0 %v1051
        %1174 = vmatprep.subr.mxu0 %v1056
        %1175 = vmatpush1.msra.mxu0 %v1055
        %1176 = vmatprep.subr.mxu0 %v1060
        %1177 = vmatpush1.msra.mxu0 %v1059
        %1178 = vmatprep.subr.mxu0 %v1064
        %1179 = vmatpush1.msra.mxu0 %v1063
        %1180 = vmatprep.subr.mxu0 %v1068
        %1181 = vmatpush1.msra.mxu0 %v1067
        %1182 = vmatprep.subr.mxu0 %v1072
        %1183 = vmatpush1.msra.mxu0 %v1071
        %1184 = vmatprep.subr.mxu0 %v1076
        %1185 = vmatpush1.msra.mxu0 %v1075
        %1186 = vmatprep.subr.mxu0 %v1080
        %1187 = vmatpush1.msra.mxu0 %v1079
        %1188 = vmatprep.subr.mxu0 %v1084
        %1189 = vmatpush1.msra.mxu0 %v1083
        %1190 = vmatprep.subr.mxu0 %v1088
        %1191 = vmatpush1.msra.mxu0 %v1087
        %1192 = vmatprep.subr.mxu0 0.0
        %1193 = vmatpush1.msra.mxu0 0.0
        %1194 = vmatprep.subr.mxu0 0.0
        %1195 = vmatpush1.msra.mxu0 0.0
        %1196 = vmatprep.subr.mxu0 0.0
        %1197 = vmatpush1.msra.mxu0 0.0
        %1198 = vmatprep.subr.mxu0 0.0
        %1199 = vmatpush1.msra.mxu0 0.0
        %1200 = vmatprep.subr.mxu0 0.0
        %1201 = vmatpush1.msra.mxu0 0.0
        %1202 = vmatprep.subr.mxu0 0.0
        %1203 = vmatpush1.msra.mxu0 0.0
        %1204 = vmatprep.subr.mxu0 0.0
        %1205 = vmatpush1.msra.mxu0 0.0
        %1206 = vmatprep.subr.mxu0 0.0
        %1207 = vmatpush1.msra.mxu0 0.0
        %1208 = vmatprep.subr.mxu0 0.0
        %1209 = vmatpush1.msra.mxu0 0.0
        %1210 = vmatprep.subr.mxu0 0.0
        %1211 = vmatpush1.msra.mxu0 0.0
        %1212 = vmatprep.subr.mxu0 0.0
        %1213 = vmatpush1.msra.mxu0 0.0
        %1214 = vmatprep.subr.mxu0 0.0
        %1215 = vmatpush1.msra.mxu0 0.0
        %1216 = vmatprep.subr.mxu0 0.0
        %1217 = vmatpush1.msra.mxu0 0.0
        %1218 = vmatprep.subr.mxu0 0.0
        %1219 = vmatpush1.msra.mxu0 0.0
        %1220 = vmatprep.subr.mxu0 0.0
        %1221 = vmatpush1.msra.mxu0 0.0
        %1222 = vmatprep.subr.mxu0 0.0
        %1223 = vmatpush1.msra.mxu0 0.0
        %1224 = vmatprep.mubr.f32.mxu0 0.0
        %1225 = vmatmul.mubr.f32.gmra.mrb[0].mxu0 %v1017
        %v1226 = vpop.f32.mrb[0].mxu0
        %v1227 = vadd.f32 0.0, %v1226
        %v1228 = vpop.f32.mrb[0].mxu0
        %v1229 = vadd.f32 0.0, %v1228
        %1230 = vdwg.mxu0
        %v1231 = vadd.f32 %v1021, %v1156
        %v1232 = vadd.f32 %v1022, %v1158
        %v1233 = vadd.f32 %v1023, %v1227
        %v1234 = vadd.f32 %v1024, %v1229
        %v1235 = vxor.u32 %v1231, 2147483648
        %v1236 = vxor.u32 %v1232, 2147483648
        %v1237 = vxor.u32 %v1233, 2147483648
        %v1238 = vmul.f32 %v1235, 1.442695
        %v1239 = vpow.pop %v1238
        %v1240 = vmul.f32 %v1236, 1.442695
        %v1241 = vpow.pop %v1240
        %v1242 = vmul.f32 %v1237, 1.442695
        %v1243 = vpow.pop %v1242
        %v1244 = vadd.f32 %v1239, 1.0
        %v1245 = vadd.f32 %v1241, 1.0
        %v1246 = vadd.f32 %v1243, 1.0
        %v1247 = vrcp.pop %v1244
        %v1248 = vmul.f32 1.0, %v1247
        %v1249 = vrcp.pop %v1245
        %v1250 = vmul.f32 1.0, %v1249
        %v1251 = vrcp.pop %v1246
        %v1252 = vmul.f32 1.0, %v1251
        %v1253 = vtanh.pop %v1234
        %v1254 = vmul.f32 %v1250, %v1015
        %v1255 = vmul.f32 %v1248, %v1253
        %v1256 = vadd.f32 %v1254, %v1255
        %v1257 = vtanh.pop %v1256
        %v1258 = vmul.f32 %v1252, %v1257
        %s1259 = scalar_lea.vmem %s236, 16 [#allocation5]
        %1260 = vst [vmem:[%s1259] sm:$0xff] %v1258
        %s1261 = scalar_lea.vmem [#allocation2], 96
        %v1262 = vld [vmem:[%s1261] sm:$0xff]
        %v1263 = vld [vmem:[%s1261 + $0x8] sm:$0xff]
        %v1264 = vld [vmem:[%s1261 + $0x10] sm:$0xff]
        %v1265 = vld [vmem:[%s1261 + $0x18] sm:$0xff]
        %v1266 = vld [vmem:[%s2] sm:$0xff]
        %v1267 = vld [vmem:[%s2 + $0x8] sm:$0xff]
        %v1268 = vld [vmem:[%s2 + $0x10] sm:$0xff]
        %v1269 = vld [vmem:[%s2 + $0x18] sm:$0xff]
        %v1270 = vld [vmem:[%s2 + $0x20] sm:$0xff]
        %v1271 = vld [vmem:[%s2 + $0x28] sm:$0xff]
        %v1272 = vld [vmem:[%s2 + $0x30] sm:$0xff]
        %v1273 = vld [vmem:[%s2 + $0x38] sm:$0xff]
        %v1274 = vld [vmem:[%s2 + $0x40] sm:$0xff]
        %v1275 = vld [vmem:[%s2 + $0x48] sm:$0xff]
        %v1276 = vld [vmem:[%s2 + $0x50] sm:$0xff]
        %v1277 = vld [vmem:[%s2 + $0x58] sm:$0xff]
        %v1278 = vld [vmem:[%s2 + $0x60] sm:$0xff]
        %v1279 = vld [vmem:[%s2 + $0x68] sm:$0xff]
        %v1280 = vld [vmem:[%s2 + $0x70] sm:$0xff]
        %v1281 = vld [vmem:[%s2 + $0x78] sm:$0xff]
        %v1282 = vld [vmem:[%s2 + $0x80] sm:$0xff]
        %v1283 = vld [vmem:[%s2 + $0x88] sm:$0xff]
        %v1284 = vld [vmem:[%s2 + $0x90] sm:$0xff]
        %v1285 = vld [vmem:[%s2 + $0x98] sm:$0xff]
        %v1286 = vld [vmem:[%s2 + $0xa0] sm:$0xff]
        %v1287 = vld [vmem:[%s2 + $0xa8] sm:$0xff]
        %v1288 = vld [vmem:[%s2 + $0xb0] sm:$0xff]
        %v1289 = vld [vmem:[%s2 + $0xb8] sm:$0xff]
        %v1290 = vld [vmem:[%s2 + $0xc0] sm:$0xff]
        %v1291 = vld [vmem:[%s2 + $0xc8] sm:$0xff]
        %v1292 = vld [vmem:[%s2 + $0xd0] sm:$0xff]
        %v1293 = vld [vmem:[%s2 + $0xd8] sm:$0xff]
        %v1294 = vld [vmem:[%s2 + $0xe0] sm:$0xff]
        %v1295 = vld [vmem:[%s2 + $0xe8] sm:$0xff]
        %v1296 = vld [vmem:[%s2 + $0xf0] sm:$0xff]
        %v1297 = vld [vmem:[%s2 + $0xf8] sm:$0xff]
        %v1298 = vld [vmem:[%s2 + $0x100] sm:$0xff]
        %v1299 = vld [vmem:[%s2 + $0x108] sm:$0xff]
        %v1300 = vld [vmem:[%s2 + $0x110] sm:$0xff]
        %v1301 = vld [vmem:[%s2 + $0x118] sm:$0xff]
        %v1302 = vld [vmem:[%s2 + $0x120] sm:$0xff]
        %v1303 = vld [vmem:[%s2 + $0x128] sm:$0xff]
        %v1304 = vld [vmem:[%s2 + $0x130] sm:$0xff]
        %v1305 = vld [vmem:[%s2 + $0x138] sm:$0xff]
        %v1306 = vld [vmem:[%s2 + $0x140] sm:$0xff]
        %v1307 = vld [vmem:[%s2 + $0x148] sm:$0xff]
        %v1308 = vld [vmem:[%s2 + $0x150] sm:$0xff]
        %v1309 = vld [vmem:[%s2 + $0x158] sm:$0xff]
        %v1310 = vld [vmem:[%s2 + $0x160] sm:$0xff]
        %v1311 = vld [vmem:[%s2 + $0x168] sm:$0xff]
        %v1312 = vld [vmem:[%s2 + $0x170] sm:$0xff]
        %v1313 = vld [vmem:[%s2 + $0x178] sm:$0xff]
        %v1314 = vld [vmem:[%s2 + $0x180] sm:$0xff]
        %v1315 = vld [vmem:[%s2 + $0x188] sm:$0xff]
        %v1316 = vld [vmem:[%s2 + $0x190] sm:$0xff]
        %v1317 = vld [vmem:[%s2 + $0x198] sm:$0xff]
        %v1318 = vld [vmem:[%s2 + $0x1a0] sm:$0xff]
        %v1319 = vld [vmem:[%s2 + $0x1a8] sm:$0xff]
        %v1320 = vld [vmem:[%s2 + $0x1b0] sm:$0xff]
        %v1321 = vld [vmem:[%s2 + $0x1b8] sm:$0xff]
        %v1322 = vld [vmem:[%s2 + $0x1c0] sm:$0xff]
        %v1323 = vld [vmem:[%s2 + $0x1c8] sm:$0xff]
        %v1324 = vld [vmem:[%s2 + $0x1d0] sm:$0xff]
        %v1325 = vld [vmem:[%s2 + $0x1d8] sm:$0xff]
        %v1326 = vld [vmem:[%s2 + $0x1e0] sm:$0xff]
        %v1327 = vld [vmem:[%s2 + $0x1e8] sm:$0xff]
        %v1328 = vld [vmem:[%s2 + $0x1f0] sm:$0xff]
        %v1329 = vld [vmem:[%s2 + $0x1f8] sm:$0xff]
        %1330 = vmatprep.subr.mxu0 %v1267
        %1331 = vmatpush1.msra.mxu0 %v1266
        %1332 = vmatprep.subr.mxu0 %v1271
        %1333 = vmatpush1.msra.mxu0 %v1270
        %1334 = vmatprep.subr.mxu0 %v1275
        %1335 = vmatpush1.msra.mxu0 %v1274
        %1336 = vmatprep.subr.mxu0 %v1279
        %1337 = vmatpush1.msra.mxu0 %v1278
        %1338 = vmatprep.subr.mxu0 %v1283
        %1339 = vmatpush1.msra.mxu0 %v1282
        %1340 = vmatprep.subr.mxu0 %v1287
        %1341 = vmatpush1.msra.mxu0 %v1286
        %1342 = vmatprep.subr.mxu0 %v1291
        %1343 = vmatpush1.msra.mxu0 %v1290
        %1344 = vmatprep.subr.mxu0 %v1295
        %1345 = vmatpush1.msra.mxu0 %v1294
        %1346 = vmatprep.subr.mxu0 %v1299
        %1347 = vmatpush1.msra.mxu0 %v1298
        %1348 = vmatprep.subr.mxu0 %v1303
        %1349 = vmatpush1.msra.mxu0 %v1302
        %1350 = vmatprep.subr.mxu0 %v1307
        %1351 = vmatpush1.msra.mxu0 %v1306
        %1352 = vmatprep.subr.mxu0 %v1311
        %1353 = vmatpush1.msra.mxu0 %v1310
        %1354 = vmatprep.subr.mxu0 %v1315
        %1355 = vmatpush1.msra.mxu0 %v1314
        %1356 = vmatprep.subr.mxu0 %v1319
        %1357 = vmatpush1.msra.mxu0 %v1318
        %1358 = vmatprep.subr.mxu0 %v1323
        %1359 = vmatpush1.msra.mxu0 %v1322
        %1360 = vmatprep.subr.mxu0 %v1327
        %1361 = vmatpush1.msra.mxu0 %v1326
        %1362 = vmatprep.subr.mxu0 0.0
        %1363 = vmatpush1.msra.mxu0 0.0
        %1364 = vmatprep.subr.mxu0 0.0
        %1365 = vmatpush1.msra.mxu0 0.0
        %1366 = vmatprep.subr.mxu0 0.0
        %1367 = vmatpush1.msra.mxu0 0.0
        %1368 = vmatprep.subr.mxu0 0.0
        %1369 = vmatpush1.msra.mxu0 0.0
        %1370 = vmatprep.subr.mxu0 0.0
        %1371 = vmatpush1.msra.mxu0 0.0
        %1372 = vmatprep.subr.mxu0 0.0
        %1373 = vmatpush1.msra.mxu0 0.0
        %1374 = vmatprep.subr.mxu0 0.0
        %1375 = vmatpush1.msra.mxu0 0.0
        %1376 = vmatprep.subr.mxu0 0.0
        %1377 = vmatpush1.msra.mxu0 0.0
        %1378 = vmatprep.subr.mxu0 0.0
        %1379 = vmatpush1.msra.mxu0 0.0
        %1380 = vmatprep.subr.mxu0 0.0
        %1381 = vmatpush1.msra.mxu0 0.0
        %1382 = vmatprep.subr.mxu0 0.0
        %1383 = vmatpush1.msra.mxu0 0.0
        %1384 = vmatprep.subr.mxu0 0.0
        %1385 = vmatpush1.msra.mxu0 0.0
        %1386 = vmatprep.subr.mxu0 0.0
        %1387 = vmatpush1.msra.mxu0 0.0
        %1388 = vmatprep.subr.mxu0 0.0
        %1389 = vmatpush1.msra.mxu0 0.0
        %1390 = vmatprep.subr.mxu0 0.0
        %1391 = vmatpush1.msra.mxu0 0.0
        %1392 = vmatprep.subr.mxu0 0.0
        %1393 = vmatpush1.msra.mxu0 0.0
        %1394 = vmatprep.mubr.f32.mxu0 0.0
        %1395 = vmatmul.mubr.f32.gmra.mrb[0].mxu0 %v1258
        %v1396 = vpop.f32.mrb[0].mxu0
        %v1397 = vadd.f32 0.0, %v1396
        %v1398 = vpop.f32.mrb[0].mxu0
        %v1399 = vadd.f32 0.0, %v1398
        %1400 = vdwg.mxu0
        %1401 = vmatprep.subr.mxu0 %v1269
        %1402 = vmatpush1.msra.mxu0 %v1268
        %1403 = vmatprep.subr.mxu0 %v1273
        %1404 = vmatpush1.msra.mxu0 %v1272
        %1405 = vmatprep.subr.mxu0 %v1277
        %1406 = vmatpush1.msra.mxu0 %v1276
        %1407 = vmatprep.subr.mxu0 %v1281
        %1408 = vmatpush1.msra.mxu0 %v1280
        %1409 = vmatprep.subr.mxu0 %v1285
        %1410 = vmatpush1.msra.mxu0 %v1284
        %1411 = vmatprep.subr.mxu0 %v1289
        %1412 = vmatpush1.msra.mxu0 %v1288
        %1413 = vmatprep.subr.mxu0 %v1293
        %1414 = vmatpush1.msra.mxu0 %v1292
        %1415 = vmatprep.subr.mxu0 %v1297
        %1416 = vmatpush1.msra.mxu0 %v1296
        %1417 = vmatprep.subr.mxu0 %v1301
        %1418 = vmatpush1.msra.mxu0 %v1300
        %1419 = vmatprep.subr.mxu0 %v1305
        %1420 = vmatpush1.msra.mxu0 %v1304
        %1421 = vmatprep.subr.mxu0 %v1309
        %1422 = vmatpush1.msra.mxu0 %v1308
        %1423 = vmatprep.subr.mxu0 %v1313
        %1424 = vmatpush1.msra.mxu0 %v1312
        %1425 = vmatprep.subr.mxu0 %v1317
        %1426 = vmatpush1.msra.mxu0 %v1316
        %1427 = vmatprep.subr.mxu0 %v1321
        %1428 = vmatpush1.msra.mxu0 %v1320
        %1429 = vmatprep.subr.mxu0 %v1325
        %1430 = vmatpush1.msra.mxu0 %v1324
        %1431 = vmatprep.subr.mxu0 %v1329
        %1432 = vmatpush1.msra.mxu0 %v1328
        %1433 = vmatprep.subr.mxu0 0.0
        %1434 = vmatpush1.msra.mxu0 0.0
        %1435 = vmatprep.subr.mxu0 0.0
        %1436 = vmatpush1.msra.mxu0 0.0
        %1437 = vmatprep.subr.mxu0 0.0
        %1438 = vmatpush1.msra.mxu0 0.0
        %1439 = vmatprep.subr.mxu0 0.0
        %1440 = vmatpush1.msra.mxu0 0.0
        %1441 = vmatprep.subr.mxu0 0.0
        %1442 = vmatpush1.msra.mxu0 0.0
        %1443 = vmatprep.subr.mxu0 0.0
        %1444 = vmatpush1.msra.mxu0 0.0
        %1445 = vmatprep.subr.mxu0 0.0
        %1446 = vmatpush1.msra.mxu0 0.0
        %1447 = vmatprep.subr.mxu0 0.0
        %1448 = vmatpush1.msra.mxu0 0.0
        %1449 = vmatprep.subr.mxu0 0.0
        %1450 = vmatpush1.msra.mxu0 0.0
        %1451 = vmatprep.subr.mxu0 0.0
        %1452 = vmatpush1.msra.mxu0 0.0
        %1453 = vmatprep.subr.mxu0 0.0
        %1454 = vmatpush1.msra.mxu0 0.0
        %1455 = vmatprep.subr.mxu0 0.0
        %1456 = vmatpush1.msra.mxu0 0.0
        %1457 = vmatprep.subr.mxu0 0.0
        %1458 = vmatpush1.msra.mxu0 0.0
        %1459 = vmatprep.subr.mxu0 0.0
        %1460 = vmatpush1.msra.mxu0 0.0
        %1461 = vmatprep.subr.mxu0 0.0
        %1462 = vmatpush1.msra.mxu0 0.0
        %1463 = vmatprep.subr.mxu0 0.0
        %1464 = vmatpush1.msra.mxu0 0.0
        %1465 = vmatprep.mubr.f32.mxu0 0.0
        %1466 = vmatmul.mubr.f32.gmra.mrb[0].mxu0 %v1258
        %v1467 = vpop.f32.mrb[0].mxu0
        %v1468 = vadd.f32 0.0, %v1467
        %v1469 = vpop.f32.mrb[0].mxu0
        %v1470 = vadd.f32 0.0, %v1469
        %1471 = vdwg.mxu0
        %v1472 = vadd.f32 %v1262, %v1397
        %v1473 = vadd.f32 %v1263, %v1399
        %v1474 = vadd.f32 %v1264, %v1468
        %v1475 = vadd.f32 %v1265, %v1470
        %v1476 = vxor.u32 %v1472, 2147483648
        %v1477 = vxor.u32 %v1473, 2147483648
        %v1478 = vxor.u32 %v1474, 2147483648
        %v1479 = vmul.f32 %v1476, 1.442695
        %v1480 = vpow.pop %v1479
        %v1481 = vmul.f32 %v1477, 1.442695
        %v1482 = vpow.pop %v1481
        %v1483 = vmul.f32 %v1478, 1.442695
        %v1484 = vpow.pop %v1483
        %v1485 = vadd.f32 %v1480, 1.0
        %v1486 = vadd.f32 %v1482, 1.0
        %v1487 = vadd.f32 %v1484, 1.0
        %v1488 = vrcp.pop %v1485
        %v1489 = vmul.f32 1.0, %v1488
        %v1490 = vrcp.pop %v1486
        %v1491 = vmul.f32 1.0, %v1490
        %v1492 = vrcp.pop %v1487
        %v1493 = vmul.f32 1.0, %v1492
        %v1494 = vtanh.pop %v1475
        %v1495 = vmul.f32 %v1491, %v1256
        %v1496 = vmul.f32 %v1489, %v1494
        %v1497 = vadd.f32 %v1495, %v1496
        %v1498 = vtanh.pop %v1497
        %v1499 = vmul.f32 %v1493, %v1498
        %s1500 = scalar_lea.vmem %s236, 24 [#allocation5]
        %1501 = vst [vmem:[%s1500] sm:$0xff] %v1499
        %1502 = vst [vmem:[#allocation3] sm:$0xff] %v1499
        %1503 = vst [vmem:[#allocation4] sm:$0xff] %v1497
        %1504 = vst [vmem:[%s5] sm:$0xff] %v1499
        %1505 = vst [vmem:[%s6] sm:$0xff] %v1497
        %s1506 = sand.u32 %s118, 1
        %s1507 = scalar_lea.sflag [#allocation6], %s1506
        %s1508 = sand.u32 %s118, 1
        %s1509 = smul.addr %s1508, 32
        %s1510 = scalar_lea.vmem [#allocation5], %s1509
        // Predicated region
        $region41: #{encoder_forward.3} parent=35 // pred_check
          %p1511 = pneg %p128
        $region42: #{encoder_forward.3} parent=35 // pred_check_branch
          %1513 = sbr.rel (%p1511) target = $region44
        $region43: #{encoder_forward.3} parent=35 // pred_region
          %s1514 = smul.u32 4, %s21
          %s1516 = ssub.s32 512, 512
          %1517 = vsyncadd %s1507, %s1516
          %s1518 = smul.addr %s1514, 128
          %s1519 = scalar_lea.hbm %s4, %s1518
          %s1520 = sshll.u32 %s1510, 4
          %s1521 = int_to_ptr.vmem [resolvable:$true] %s1520
          %1526 = dma.vmem_to_hbm [thread:$0]  %s1521, 512, %s1519, %s1507, 128, 128, 8
        $region44: #{encoder_forward.3} parent=35 // pred_fallthru
          _
        // Predicated region
        $region45: #{encoder_forward.3} parent=35 // pred_check
          %p1527 = pneg %p149
        $region46: #{encoder_forward.3} parent=35 // pred_check_branch
          %1529 = sbr.rel (%p1527) target = $region48
        $region47: #{encoder_forward.3} parent=35 // pred_region
          _
        $region48: #{encoder_forward.3} parent=35 // pred_fallthru
          _
        // Predicated region
        $region49: #{encoder_forward.3} parent=35 // pred_check
          %p1530 = pneg %p170
        $region50: #{encoder_forward.3} parent=35 // pred_check_branch
          %1532 = sbr.rel (%p1530) target = $region52
        $region51: #{encoder_forward.3} parent=35 // pred_region
          _
        $region52: #{encoder_forward.3} parent=35 // pred_fallthru
          _
        // Predicated region
        $region53: #{encoder_forward.3} parent=35 // pred_check
          %p1533 = pneg %p149
        $region54: #{encoder_forward.3} parent=35 // pred_check_branch
          %1535 = sbr.rel (%p1533) target = $region56
        $region55: #{encoder_forward.3} parent=35 // pred_region
          _
        $region56: #{encoder_forward.3} parent=35 // pred_fallthru
          _
        // Predicated region
        $region57: #{encoder_forward.3} parent=35 // pred_check
          %p1536 = pneg %p170
        $region58: #{encoder_forward.3} parent=35 // pred_check_branch
          %1538 = sbr.rel (%p1536) target = $region60
        $region59: #{encoder_forward.3} parent=35 // pred_region
          _
        $region60: #{encoder_forward.3} parent=35 // pred_fallthru
          _
      $region36: #{encoder_forward.3} parent=5 // pred_fallthru
        _
      %p1539 = scmp.le.s32.totalorder 2, %s16
      // Predicated region
      $region61: #{encoder_forward.3} parent=5 // pred_check
        %p1540 = pneg %p1539
      $region62: #{encoder_forward.3} parent=5 // pred_check_branch
        %1542 = sbr.rel (%p1540) target = $region64
      $region63: #{encoder_forward.3} parent=5 // pred_region
        %s1543 = ssub.s32 %s16, 2
        // Predicated region
        $region65: #{encoder_forward.3} parent=63 // pred_check
          %p1544 = pneg %p134
        $region66: #{encoder_forward.3} parent=63 // pred_check_branch
          %1546 = sbr.rel (%p1544) target = $region68
        $region67: #{encoder_forward.3} parent=63 // pred_region
          %s1547 = sand.u32 %s119, 1
          %s1548 = scalar_lea.sflag [#allocation6], %s1547
          %s1549 = sand.u32 %s119, 1
          %s1550 = smul.addr %s1549, 32
          %s1551 = scalar_lea.vmem [#allocation5], %s1550
          %1552 = dma.done %s1548, 512
        $region68: #{encoder_forward.3} parent=63 // pred_fallthru
          _
      $region64: #{encoder_forward.3} parent=5 // pred_fallthru
        _
    $region6: #{encoder_forward.3} parent=1 // loop_footer
      %s20 = sadd.s32 1, %s16
    $region7: #{encoder_forward.3} parent=1 // loop_footer_branch
      %15 = sbr.rel target = $region3
    $region8: #{encoder_forward.3} parent=1 // loop_exit
      _
    %1553 = vsyncpa [#allocation6], 1
    %s1554 = scalar_lea.sflag [#allocation6], 1
    %1555 = vsyncpa %s1554, 1

// kernel: encoder_forward.2
$region0: #{encoder_forward.2}
  #allocation0 [shape = 'u32[]', space=smem, size = 0x4, offset = 0x4, fixed_abs, tag = 'smem constant byte address 0x4 - core index']
  #allocation1 [shape = 'u32[144,128]{1,0:T(1,128)}', space=vmem, size = 0x12000, scoped, tag = 'internal scratch']
  #allocation2 [shape = 'f32[4,8,512]{2,1,0:T(8,128)}', space=vmem, size = 0x10000, scoped, tag = 'scratch operand']
  #allocation3 [shape = 'f32[8,128]{1,0:T(8,128)}', space=vmem, size = 0x1000, scoped, tag = 'scratch operand']
  #allocation4 [shape = 'f32[8,128]{1,0:T(8,128)}', space=vmem, size = 0x1000, scoped, tag = 'scratch operand']
  %s0 = inlined_call_operand.vmem [shape: f32[8,8,128], index: 0, kind: input, shape index: {}]
  %s1 = inlined_call_operand.vmem [shape: f32[128,512], index: 1, kind: input, shape index: {}]
  %s2 = inlined_call_operand.vmem [shape: f32[128,512], index: 2, kind: input, shape index: {}]
  %s3 = inlined_call_operand.vmem [shape: f32[1,512], index: 3, kind: input, shape index: {}]
  %s4 = inlined_call_operand.vmem [shape: f32[8,8,128], index: 4, kind: output, shape index: {0}]
  %s5 = inlined_call_operand.vmem [shape: f32[8,128], index: 5, kind: output, shape index: {1}]
  %s6 = inlined_call_operand.vmem [shape: f32[8,128], index: 6, kind: output, shape index: {2}]
  %7 = xla_tuple %s4, %s5, %s6
  %s8 = sld [smem:[#allocation0]]
  $region69: #{encoder_forward.2} parent=0
    _
  %s10 = ssub.s32 1, %s8
  %s11 = scalar_select 0, %s10, %s8
  loop: start=0, step=1, limit=4
  $region2: #{encoder_forward.2} parent=0 // loop_pre_header
    _
  $region3: #{encoder_forward.2} parent=0 // loop_header
    %s13 = sphi 0, %s17
    %p14 = scmp.ge.s32.totalorder %s13, 4
    %s23 = sphi 0, %s25
    %s26 = sphi 0, %s23
    %s27 = sphi 0, %s26
    %s43 = sphi 0, %s27
    %s47 = sphi 0, %s47
    %s49 = sphi 0, %s47
    %s50 = sphi 0, %s49
    %s64 = sphi 0, %s50
    %s68 = sphi 0, %s68
    %s70 = sphi 0, %s68
    %s71 = sphi 0, %s70
    %s85 = sphi 0, %s71
    %s89 = sphi 0, %s89
    %s91 = sphi 0, %s89
    %s92 = sphi 0, %s91
    %s106 = sphi 0, %s92
    %s112 = sphi 0, %s114
    %s115 = sphi 0, %s112
    %s116 = sphi 0, %s115
    %s132 = sphi 0, %s116
    %s136 = sphi 0, %s136
    %s138 = sphi 0, %s136
    %s139 = sphi 0, %s138
    %s153 = sphi 0, %s139
    %s157 = sphi 0, %s157
    %s159 = sphi 0, %s157
    %s160 = sphi 0, %s159
    %s174 = sphi 0, %s160
  $region4: #{encoder_forward.2} parent=0 // loop_header_branch
    %16 = sbr.rel (%p14) target = $region8
  $region5: #{encoder_forward.2} parent=0 // loop_body
    %s18 = ssub.s32 %s13, 1
    %s19 = ssub.s32 %s13, 2
    %s20 = sadd.s32 %s13, 1
    %s21 = ssub.s32 %s13, %s20
    %p22 = scmp.eq.s32.totalorder %s21, 0
    %s24 = sadd.s32 %s23, 1
    %s25 = scalar_select %p22, %s23, %s24
    %p28 = pneg %p22
    %p29 = scmp.eq.s32.totalorder %s13, 1
    %p30 = por %p28, %p29
    %p31 = scmp.ne.s32.totalorder %s23, %s26
    %p32 = scmp.eq.s32.totalorder %s13, 0
    %p33 = por %p31, %p32
    %p34 = scmp.ne.s32.totalorder %s23, %s26
    %p35 = scmp.eq.s32.totalorder %s18, 1
    %p36 = por %p34, %p35
    %p37 = scmp.ne.s32.totalorder %s26, %s27
    %p38 = scmp.eq.s32.totalorder %s18, 0
    %p39 = por %p37, %p38
    %p40 = scmp.ne.s32.totalorder %s26, %s27
    %p41 = scmp.eq.s32.totalorder %s19, 1
    %p42 = por %p40, %p41
    %p44 = scmp.ne.s32.totalorder %s27, %s43
    %p45 = scmp.eq.s32.totalorder %s19, 0
    %p46 = por %p44, %p45
    %s48 = sadd.s32 %s47, 1
    %p51 = scmp.eq.s32.totalorder %s13, 1
    %p52 = scmp.ne.s32.totalorder %s47, %s49
    %p53 = scmp.eq.s32.totalorder %s13, 0
    %p54 = por %p52, %p53
    %p55 = scmp.ne.s32.totalorder %s47, %s49
    %p56 = scmp.eq.s32.totalorder %s18, 1
    %p57 = por %p55, %p56
    %p58 = scmp.ne.s32.totalorder %s49, %s50
    %p59 = scmp.eq.s32.totalorder %s18, 0
    %p60 = por %p58, %p59
    %p61 = scmp.ne.s32.totalorder %s49, %s50
    %p62 = scmp.eq.s32.totalorder %s19, 1
    %p63 = por %p61, %p62
    %p65 = scmp.ne.s32.totalorder %s50, %s64
    %p66 = scmp.eq.s32.totalorder %s19, 0
    %p67 = por %p65, %p66
    %s69 = sadd.s32 %s68, 1
    %p72 = scmp.eq.s32.totalorder %s13, 1
    %p73 = scmp.ne.s32.totalorder %s68, %s70
    %p74 = scmp.eq.s32.totalorder %s13, 0
    %p75 = por %p73, %p74
    %p76 = scmp.ne.s32.totalorder %s68, %s70
    %p77 = scmp.eq.s32.totalorder %s18, 1
    %p78 = por %p76, %p77
    %p79 = scmp.ne.s32.totalorder %s70, %s71
    %p80 = scmp.eq.s32.totalorder %s18, 0
    %p81 = por %p79, %p80
    %p82 = scmp.ne.s32.totalorder %s70, %s71
    %p83 = scmp.eq.s32.totalorder %s19, 1
    %p84 = por %p82, %p83
    %p86 = scmp.ne.s32.totalorder %s71, %s85
    %p87 = scmp.eq.s32.totalorder %s19, 0
    %p88 = por %p86, %p87
    %s90 = sadd.s32 %s89, 1
    %p93 = scmp.eq.s32.totalorder %s13, 1
    %p94 = scmp.ne.s32.totalorder %s89, %s91
    %p95 = scmp.eq.s32.totalorder %s13, 0
    %p96 = por %p94, %p95
    %p97 = scmp.ne.s32.totalorder %s89, %s91
    %p98 = scmp.eq.s32.totalorder %s18, 1
    %p99 = por %p97, %p98
    %p100 = scmp.ne.s32.totalorder %s91, %s92
    %p101 = scmp.eq.s32.totalorder %s18, 0
    %p102 = por %p100, %p101
    %p103 = scmp.ne.s32.totalorder %s91, %s92
    %p104 = scmp.eq.s32.totalorder %s19, 1
    %p105 = por %p103, %p104
    %p107 = scmp.ne.s32.totalorder %s92, %s106
    %p108 = scmp.eq.s32.totalorder %s19, 0
    %p109 = por %p107, %p108
    %s110 = ssub.s32 %s13, %s20
    %p111 = scmp.eq.s32.totalorder %s110, 0
    %s113 = sadd.s32 %s112, 1
    %s114 = scalar_select %p111, %s112, %s113
    %p117 = pneg %p111
    %p118 = scmp.eq.s32.totalorder %s13, 1
    %p119 = por %p117, %p118
    %p120 = scmp.ne.s32.totalorder %s112, %s115
    %p121 = scmp.eq.s32.totalorder %s13, 0
    %p122 = por %p120, %p121
    %p123 = scmp.ne.s32.totalorder %s112, %s115
    %p124 = scmp.eq.s32.totalorder %s18, 1
    %p125 = por %p123, %p124
    %p126 = scmp.ne.s32.totalorder %s115, %s116
    %p127 = scmp.eq.s32.totalorder %s18, 0
    %p128 = por %p126, %p127
    %p129 = scmp.ne.s32.totalorder %s115, %s116
    %p130 = scmp.eq.s32.totalorder %s19, 1
    %p131 = por %p129, %p130
    %p133 = scmp.ne.s32.totalorder %s116, %s132
    %p134 = scmp.eq.s32.totalorder %s19, 0
    %p135 = por %p133, %p134
    %s137 = sadd.s32 %s136, 1
    %p140 = scmp.eq.s32.totalorder %s13, 1
    %p141 = scmp.ne.s32.totalorder %s136, %s138
    %p142 = scmp.eq.s32.totalorder %s13, 0
    %p143 = por %p141, %p142
    %p144 = scmp.ne.s32.totalorder %s136, %s138
    %p145 = scmp.eq.s32.totalorder %s18, 1
    %p146 = por %p144, %p145
    %p147 = scmp.ne.s32.totalorder %s138, %s139
    %p148 = scmp.eq.s32.totalorder %s18, 0
    %p149 = por %p147, %p148
    %p150 = scmp.ne.s32.totalorder %s138, %s139
    %p151 = scmp.eq.s32.totalorder %s19, 1
    %p152 = por %p150, %p151
    %p154 = scmp.ne.s32.totalorder %s139, %s153
    %p155 = scmp.eq.s32.totalorder %s19, 0
    %p156 = por %p154, %p155
    %s158 = sadd.s32 %s157, 1
    %p161 = scmp.eq.s32.totalorder %s13, 1
    %p162 = scmp.ne.s32.totalorder %s157, %s159
    %p163 = scmp.eq.s32.totalorder %s13, 0
    %p164 = por %p162, %p163
    %p165 = scmp.ne.s32.totalorder %s157, %s159
    %p166 = scmp.eq.s32.totalorder %s18, 1
    %p167 = por %p165, %p166
    %p168 = scmp.ne.s32.totalorder %s159, %s160
    %p169 = scmp.eq.s32.totalorder %s18, 0
    %p170 = por %p168, %p169
    %p171 = scmp.ne.s32.totalorder %s159, %s160
    %p172 = scmp.eq.s32.totalorder %s19, 1
    %p173 = por %p171, %p172
    %p175 = scmp.ne.s32.totalorder %s160, %s174
    %p176 = scmp.eq.s32.totalorder %s19, 0
    %p177 = por %p175, %p176
    %p178 = scmp.le.s32.totalorder 1, %s13
    %p179 = scmp.lt.s32.totalorder %s13, 3
    %p180 = pnand %p178, %p179
    %p181 = pneg %p180
    // Predicated region
    $region9: #{encoder_forward.2} parent=5 // pred_check
      _
    $region10: #{encoder_forward.2} parent=5 // pred_check_branch
      %183 = sbr.rel (%p180) target = $region12
    $region11: #{encoder_forward.2} parent=5 // pred_region
      %s184 = ssub.s32 %s13, 1
      // Predicated region
      $region13: #{encoder_forward.2} parent=11 // pred_check
        %p185 = pneg %p60
      $region14: #{encoder_forward.2} parent=11 // pred_check_branch
        %187 = sbr.rel (%p185) target = $region16
      $region15: #{encoder_forward.2} parent=11 // pred_region
        _
      $region16: #{encoder_forward.2} parent=11 // pred_fallthru
        _
      // Predicated region
      $region17: #{encoder_forward.2} parent=11 // pred_check
        %p188 = pneg %p81
      $region18: #{encoder_forward.2} parent=11 // pred_check_branch
        %190 = sbr.rel (%p188) target = $region20
      $region19: #{encoder_forward.2} parent=11 // pred_region
        _
      $region20: #{encoder_forward.2} parent=11 // pred_fallthru
        _
      // Predicated region
      $region21: #{encoder_forward.2} parent=11 // pred_check
        %p191 = pneg %p102
      $region22: #{encoder_forward.2} parent=11 // pred_check_branch
        %193 = sbr.rel (%p191) target = $region24
      $region23: #{encoder_forward.2} parent=11 // pred_region
        _
      $region24: #{encoder_forward.2} parent=11 // pred_fallthru
        _
    $region12: #{encoder_forward.2} parent=5 // pred_fallthru
      _
    %p194 = scmp.lt.s32.totalorder %s13, 2
    // Predicated region
    $region25: #{encoder_forward.2} parent=5 // pred_check
      %p195 = pneg %p194
    $region26: #{encoder_forward.2} parent=5 // pred_check_branch
      %197 = sbr.rel (%p195) target = $region28
    $region27: #{encoder_forward.2} parent=5 // pred_region
      // Predicated region
      $region29: #{encoder_forward.2} parent=27 // pred_check
        %p198 = pneg %p33
      $region30: #{encoder_forward.2} parent=27 // pred_check_branch
        %200 = sbr.rel (%p198) target = $region32
      $region31: #{encoder_forward.2} parent=27 // pred_region
        %s201 = smul.u32 4, %s13
        %p202 = scmp.lt.s32.totalorder %s201, 7
        %s203 = scalar_select %p202, %s201, 7
        %s204 = smul.addr %s203, 8
        %s205 = scalar_lea.vmem %s0, %s204
        %s206 = smul.u32 4, %s13
      $region32: #{encoder_forward.2} parent=27 // pred_fallthru
        _
    $region28: #{encoder_forward.2} parent=5 // pred_fallthru
      _
    %p207 = scmp.le.s32.totalorder 1, %s13
    %p208 = scmp.lt.s32.totalorder %s13, 3
    %p209 = pnand %p207, %p208
    %p210 = pneg %p209
    // Predicated region
    $region33: #{encoder_forward.2} parent=5 // pred_check
      _
    $region34: #{encoder_forward.2} parent=5 // pred_check_branch
      %212 = sbr.rel (%p209) target = $region36
    $region35: #{encoder_forward.2} parent=5 // pred_region
      %s213 = ssub.s32 %s13, 1
      %s214 = smul.u32 4, %s18
      %p215 = scmp.lt.s32.totalorder %s214, 7
      %s216 = scalar_select %p215, %s214, 7
      %s217 = smul.addr %s216, 8
      %s218 = scalar_lea.vmem %s0, %s217
      %p219 = pneg %p39
      %p220 = pneg %p36
      %p221 = pneg %p60
      %p222 = pneg %p57
      %p223 = pneg %p81
      %p224 = pneg %p78
      %p225 = pneg %p102
      %p226 = pneg %p99
      %p227 = pneg %p128
      %p228 = pneg %p125
      %s229 = smul.u32 4, %s18
      %p230 = scmp.lt.s32.totalorder %s229, 7
      %s231 = scalar_select %p230, %s229, 7
      %s232 = smul.addr %s231, 8
      %s233 = scalar_lea.vmem %s4, %s232
      %p234 = pneg %p149
      %p235 = pneg %p146
      %p236 = pneg %p170
      %p237 = pneg %p167
      %s238 = smul.u32 4, %s18
      %p239 = scmp.lt.s32.totalorder %s238, 7
      %s240 = scalar_select %p239, %s238, 7
      %s241 = smul.addr %s240, 8
      %s242 = scalar_lea.vmem %s0, %s241
      %s243 = smul.u32 4, %s18
      %s244 = smul.u32 4, %s18
      %p245 = scmp.lt.s32.totalorder %s244, 7
      %s246 = scalar_select %p245, %s244, 7
      %s247 = smul.addr %s246, 8
      %s248 = scalar_lea.vmem %s4, %s247
      %s249 = smul.u32 4, %s18
      %p250 = scmp.eq.s32.totalorder %s18, 0
      // Predicated region
      $region37: #{encoder_forward.2} parent=35 // pred_check
        %p251 = pneg %p250
      $region38: #{encoder_forward.2} parent=35 // pred_check_branch
        %253 = sbr.rel (%p251) target = $region40
      $region39: #{encoder_forward.2} parent=35 // pred_region
        %254 = vst [vmem:[#allocation3] sm:$0xff] 0.0
        %255 = vst [vmem:[#allocation4] sm:$0xff] 0.0
      $region40: #{encoder_forward.2} parent=35 // pred_fallthru
        _
      %v256 = vld [vmem:[%s242] sm:$0xff]
      %v257 = vld [vmem:[%s242 + $0x8] sm:$0xff]
      %v258 = vld [vmem:[%s242 + $0x10] sm:$0xff]
      %v259 = vld [vmem:[%s242 + $0x18] sm:$0xff]
      %v260 = vld [vmem:[%s1] sm:$0xff]
      %v261 = vld [vmem:[%s1 + $0x8] sm:$0xff]
      %v262 = vld [vmem:[%s1 + $0x10] sm:$0xff]
      %v263 = vld [vmem:[%s1 + $0x18] sm:$0xff]
      %v264 = vld [vmem:[%s1 + $0x20] sm:$0xff]
      %v265 = vld [vmem:[%s1 + $0x28] sm:$0xff]
      %v266 = vld [vmem:[%s1 + $0x30] sm:$0xff]
      %v267 = vld [vmem:[%s1 + $0x38] sm:$0xff]
      %v268 = vld [vmem:[%s1 + $0x40] sm:$0xff]
      %v269 = vld [vmem:[%s1 + $0x48] sm:$0xff]
      %v270 = vld [vmem:[%s1 + $0x50] sm:$0xff]
      %v271 = vld [vmem:[%s1 + $0x58] sm:$0xff]
      %v272 = vld [vmem:[%s1 + $0x60] sm:$0xff]
      %v273 = vld [vmem:[%s1 + $0x68] sm:$0xff]
      %v274 = vld [vmem:[%s1 + $0x70] sm:$0xff]
      %v275 = vld [vmem:[%s1 + $0x78] sm:$0xff]
      %v276 = vld [vmem:[%s1 + $0x80] sm:$0xff]
      %v277 = vld [vmem:[%s1 + $0x88] sm:$0xff]
      %v278 = vld [vmem:[%s1 + $0x90] sm:$0xff]
      %v279 = vld [vmem:[%s1 + $0x98] sm:$0xff]
      %v280 = vld [vmem:[%s1 + $0xa0] sm:$0xff]
      %v281 = vld [vmem:[%s1 + $0xa8] sm:$0xff]
      %v282 = vld [vmem:[%s1 + $0xb0] sm:$0xff]
      %v283 = vld [vmem:[%s1 + $0xb8] sm:$0xff]
      %v284 = vld [vmem:[%s1 + $0xc0] sm:$0xff]
      %v285 = vld [vmem:[%s1 + $0xc8] sm:$0xff]
      %v286 = vld [vmem:[%s1 + $0xd0] sm:$0xff]
      %v287 = vld [vmem:[%s1 + $0xd8] sm:$0xff]
      %v288 = vld [vmem:[%s1 + $0xe0] sm:$0xff]
      %v289 = vld [vmem:[%s1 + $0xe8] sm:$0xff]
      %v290 = vld [vmem:[%s1 + $0xf0] sm:$0xff]
      %v291 = vld [vmem:[%s1 + $0xf8] sm:$0xff]
      %v292 = vld [vmem:[%s1 + $0x100] sm:$0xff]
      %v293 = vld [vmem:[%s1 + $0x108] sm:$0xff]
      %v294 = vld [vmem:[%s1 + $0x110] sm:$0xff]
      %v295 = vld [vmem:[%s1 + $0x118] sm:$0xff]
      %v296 = vld [vmem:[%s1 + $0x120] sm:$0xff]
      %v297 = vld [vmem:[%s1 + $0x128] sm:$0xff]
      %v298 = vld [vmem:[%s1 + $0x130] sm:$0xff]
      %v299 = vld [vmem:[%s1 + $0x138] sm:$0xff]
      %v300 = vld [vmem:[%s1 + $0x140] sm:$0xff]
      %v301 = vld [vmem:[%s1 + $0x148] sm:$0xff]
      %v302 = vld [vmem:[%s1 + $0x150] sm:$0xff]
      %v303 = vld [vmem:[%s1 + $0x158] sm:$0xff]
      %v304 = vld [vmem:[%s1 + $0x160] sm:$0xff]
      %v305 = vld [vmem:[%s1 + $0x168] sm:$0xff]
      %v306 = vld [vmem:[%s1 + $0x170] sm:$0xff]
      %v307 = vld [vmem:[%s1 + $0x178] sm:$0xff]
      %v308 = vld [vmem:[%s1 + $0x180] sm:$0xff]
      %v309 = vld [vmem:[%s1 + $0x188] sm:$0xff]
      %v310 = vld [vmem:[%s1 + $0x190] sm:$0xff]
      %v311 = vld [vmem:[%s1 + $0x198] sm:$0xff]
      %v312 = vld [vmem:[%s1 + $0x1a0] sm:$0xff]
      %v313 = vld [vmem:[%s1 + $0x1a8] sm:$0xff]
      %v314 = vld [vmem:[%s1 + $0x1b0] sm:$0xff]
      %v315 = vld [vmem:[%s1 + $0x1b8] sm:$0xff]
      %v316 = vld [vmem:[%s1 + $0x1c0] sm:$0xff]
      %v317 = vld [vmem:[%s1 + $0x1c8] sm:$0xff]
      %v318 = vld [vmem:[%s1 + $0x1d0] sm:$0xff]
      %v319 = vld [vmem:[%s1 + $0x1d8] sm:$0xff]
      %v320 = vld [vmem:[%s1 + $0x1e0] sm:$0xff]
      %v321 = vld [vmem:[%s1 + $0x1e8] sm:$0xff]
      %v322 = vld [vmem:[%s1 + $0x1f0] sm:$0xff]
      %v323 = vld [vmem:[%s1 + $0x1f8] sm:$0xff]
      %v324 = vld [vmem:[%s3] sm:$0xf]
      %v326 = vlaneseq
      %v327 = vshrl.u32 %v326, 7
      %v328 = vsub.s32 0, %v327
      %v329 = vrot.slane %v324, %v328
      %v330 = vlaneseq
      %v331 = vshrl.u32 %v330, 7
      %v332 = vsub.s32 1, %v331
      %v333 = vrot.slane %v324, %v332
      %v334 = vlaneseq
      %v335 = vshrl.u32 %v334, 7
      %v336 = vsub.s32 2, %v335
      %v337 = vrot.slane %v324, %v336
      %v338 = vlaneseq
      %v339 = vshrl.u32 %v338, 7
      %v340 = vsub.s32 3, %v339
      %v341 = vrot.slane %v324, %v340
      %346 = vmatprep.subr.mxu0 %v261
      %347 = vmatpush1.msra.mxu0 %v260
      %348 = vmatprep.subr.mxu0 %v265
      %349 = vmatpush1.msra.mxu0 %v264
      %350 = vmatprep.subr.mxu0 %v269
      %351 = vmatpush1.msra.mxu0 %v268
      %352 = vmatprep.subr.mxu0 %v273
      %353 = vmatpush1.msra.mxu0 %v272
      %354 = vmatprep.subr.mxu0 %v277
      %355 = vmatpush1.msra.mxu0 %v276
      %356 = vmatprep.subr.mxu0 %v281
      %357 = vmatpush1.msra.mxu0 %v280
      %358 = vmatprep.subr.mxu0 %v285
      %359 = vmatpush1.msra.mxu0 %v284
      %360 = vmatprep.subr.mxu0 %v289
      %361 = vmatpush1.msra.mxu0 %v288
      %362 = vmatprep.subr.mxu0 %v293
      %363 = vmatpush1.msra.mxu0 %v292
      %364 = vmatprep.subr.mxu0 %v297
      %365 = vmatpush1.msra.mxu0 %v296
      %366 = vmatprep.subr.mxu0 %v301
      %367 = vmatpush1.msra.mxu0 %v300
      %368 = vmatprep.subr.mxu0 %v305
      %369 = vmatpush1.msra.mxu0 %v304
      %370 = vmatprep.subr.mxu0 %v309
      %371 = vmatpush1.msra.mxu0 %v308
      %372 = vmatprep.subr.mxu0 %v313
      %373 = vmatpush1.msra.mxu0 %v312
      %374 = vmatprep.subr.mxu0 %v317
      %375 = vmatpush1.msra.mxu0 %v316
      %376 = vmatprep.subr.mxu0 %v321
      %377 = vmatpush1.msra.mxu0 %v320
      %378 = vmatprep.subr.mxu0 0.0
      %379 = vmatpush1.msra.mxu0 0.0
      %380 = vmatprep.subr.mxu0 0.0
      %381 = vmatpush1.msra.mxu0 0.0
      %382 = vmatprep.subr.mxu0 0.0
      %383 = vmatpush1.msra.mxu0 0.0
      %384 = vmatprep.subr.mxu0 0.0
      %385 = vmatpush1.msra.mxu0 0.0
      %386 = vmatprep.subr.mxu0 0.0
      %387 = vmatpush1.msra.mxu0 0.0
      %388 = vmatprep.subr.mxu0 0.0
      %389 = vmatpush1.msra.mxu0 0.0
      %390 = vmatprep.subr.mxu0 0.0
      %391 = vmatpush1.msra.mxu0 0.0
      %392 = vmatprep.subr.mxu0 0.0
      %393 = vmatpush1.msra.mxu0 0.0
      %394 = vmatprep.subr.mxu0 0.0
      %395 = vmatpush1.msra.mxu0 0.0
      %396 = vmatprep.subr.mxu0 0.0
      %397 = vmatpush1.msra.mxu0 0.0
      %398 = vmatprep.subr.mxu0 0.0
      %399 = vmatpush1.msra.mxu0 0.0
      %400 = vmatprep.subr.mxu0 0.0
      %401 = vmatpush1.msra.mxu0 0.0
      %402 = vmatprep.subr.mxu0 0.0
      %403 = vmatpush1.msra.mxu0 0.0
      %404 = vmatprep.subr.mxu0 0.0
      %405 = vmatpush1.msra.mxu0 0.0
      %406 = vmatprep.subr.mxu0 0.0
      %407 = vmatpush1.msra.mxu0 0.0
      %408 = vmatprep.subr.mxu0 0.0
      %409 = vmatpush1.msra.mxu0 0.0
      %410 = vmatprep.mubr.f32.mxu0 0.0
      %411 = vmatmul.mubr.f32.gmra.mrb[0].mxu0 %v256
      %v412 = vpop.f32.mrb[0].mxu0
      %v413 = vadd.f32 %v329, %v412
      %v414 = vpop.f32.mrb[0].mxu0
      %v415 = vadd.f32 %v333, %v414
      %416 = vmatprep.mubr.f32.mxu0 0.0
      %417 = vmatmul.mubr.f32.gmra.mrb[0].mxu0 %v257
      %v418 = vpop.f32.mrb[0].mxu0
      %v419 = vadd.f32 %v329, %v418
      %v420 = vpop.f32.mrb[0].mxu0
      %v421 = vadd.f32 %v333, %v420
      %422 = vmatprep.mubr.f32.mxu0 0.0
      %423 = vmatmul.mubr.f32.gmra.mrb[0].mxu0 %v258
      %v424 = vpop.f32.mrb[0].mxu0
      %v425 = vadd.f32 %v329, %v424
      %v426 = vpop.f32.mrb[0].mxu0
      %v427 = vadd.f32 %v333, %v426
      %428 = vmatprep.mubr.f32.mxu0 0.0
      %429 = vmatmul.mubr.f32.gmra.mrb[0].mxu0 %v259
      %v430 = vpop.f32.mrb[0].mxu0
      %v431 = vadd.f32 %v329, %v430
      %v432 = vpop.f32.mrb[0].mxu0
      %v433 = vadd.f32 %v333, %v432
      %434 = vdwg.mxu0
      %435 = vmatprep.subr.mxu0 %v263
      %436 = vmatpush1.msra.mxu0 %v262
      %437 = vmatprep.subr.mxu0 %v267
      %438 = vmatpush1.msra.mxu0 %v266
      %439 = vmatprep.subr.mxu0 %v271
      %440 = vmatpush1.msra.mxu0 %v270
      %441 = vmatprep.subr.mxu0 %v275
      %442 = vmatpush1.msra.mxu0 %v274
      %443 = vmatprep.subr.mxu0 %v279
      %444 = vmatpush1.msra.mxu0 %v278
      %445 = vmatprep.subr.mxu0 %v283
      %446 = vmatpush1.msra.mxu0 %v282
      %447 = vmatprep.subr.mxu0 %v287
      %448 = vmatpush1.msra.mxu0 %v286
      %449 = vmatprep.subr.mxu0 %v291
      %450 = vmatpush1.msra.mxu0 %v290
      %451 = vmatprep.subr.mxu0 %v295
      %452 = vmatpush1.msra.mxu0 %v294
      %453 = vmatprep.subr.mxu0 %v299
      %454 = vmatpush1.msra.mxu0 %v298
      %455 = vmatprep.subr.mxu0 %v303
      %456 = vmatpush1.msra.mxu0 %v302
      %457 = vmatprep.subr.mxu0 %v307
      %458 = vmatpush1.msra.mxu0 %v306
      %459 = vmatprep.subr.mxu0 %v311
      %460 = vmatpush1.msra.mxu0 %v310
      %461 = vmatprep.subr.mxu0 %v315
      %462 = vmatpush1.msra.mxu0 %v314
      %463 = vmatprep.subr.mxu0 %v319
      %464 = vmatpush1.msra.mxu0 %v318
      %465 = vmatprep.subr.mxu0 %v323
      %466 = vmatpush1.msra.mxu0 %v322
      %467 = vmatprep.subr.mxu0 0.0
      %468 = vmatpush1.msra.mxu0 0.0
      %469 = vmatprep.subr.mxu0 0.0
      %470 = vmatpush1.msra.mxu0 0.0
      %471 = vmatprep.subr.mxu0 0.0
      %472 = vmatpush1.msra.mxu0 0.0
      %473 = vmatprep.subr.mxu0 0.0
      %474 = vmatpush1.msra.mxu0 0.0
      %475 = vmatprep.subr.mxu0 0.0
      %476 = vmatpush1.msra.mxu0 0.0
      %477 = vmatprep.subr.mxu0 0.0
      %478 = vmatpush1.msra.mxu0 0.0
      %479 = vmatprep.subr.mxu0 0.0
      %480 = vmatpush1.msra.mxu0 0.0
      %481 = vmatprep.subr.mxu0 0.0
      %482 = vmatpush1.msra.mxu0 0.0
      %483 = vmatprep.subr.mxu0 0.0
      %484 = vmatpush1.msra.mxu0 0.0
      %485 = vmatprep.subr.mxu0 0.0
      %486 = vmatpush1.msra.mxu0 0.0
      %487 = vmatprep.subr.mxu0 0.0
      %488 = vmatpush1.msra.mxu0 0.0
      %489 = vmatprep.subr.mxu0 0.0
      %490 = vmatpush1.msra.mxu0 0.0
      %491 = vmatprep.subr.mxu0 0.0
      %492 = vmatpush1.msra.mxu0 0.0
      %493 = vmatprep.subr.mxu0 0.0
      %494 = vmatpush1.msra.mxu0 0.0
      %495 = vmatprep.subr.mxu0 0.0
      %496 = vmatpush1.msra.mxu0 0.0
      %497 = vmatprep.subr.mxu0 0.0
      %498 = vmatpush1.msra.mxu0 0.0
      %499 = vmatprep.mubr.f32.mxu0 0.0
      %500 = vmatmul.mubr.f32.gmra.mrb[0].mxu0 %v256
      %v501 = vpop.f32.mrb[0].mxu0
      %v502 = vadd.f32 %v337, %v501
      %v503 = vpop.f32.mrb[0].mxu0
      %v504 = vadd.f32 %v341, %v503
      %505 = vmatprep.mubr.f32.mxu0 0.0
      %506 = vmatmul.mubr.f32.gmra.mrb[0].mxu0 %v257
      %v507 = vpop.f32.mrb[0].mxu0
      %v508 = vadd.f32 %v337, %v507
      %v509 = vpop.f32.mrb[0].mxu0
      %v510 = vadd.f32 %v341, %v509
      %511 = vmatprep.mubr.f32.mxu0 0.0
      %512 = vmatmul.mubr.f32.gmra.mrb[0].mxu0 %v258
      %v513 = vpop.f32.mrb[0].mxu0
      %v514 = vadd.f32 %v337, %v513
      %v515 = vpop.f32.mrb[0].mxu0
      %v516 = vadd.f32 %v341, %v515
      %517 = vmatprep.mubr.f32.mxu0 0.0
      %518 = vmatmul.mubr.f32.gmra.mrb[0].mxu0 %v259
      %v519 = vpop.f32.mrb[0].mxu0
      %v520 = vadd.f32 %v337, %v519
      %v521 = vpop.f32.mrb[0].mxu0
      %v522 = vadd.f32 %v341, %v521
      %523 = vdwg.mxu0
      %524 = vst [vmem:[#allocation2] sm:$0xff] %v413
      %525 = vst [vmem:[#allocation2 + $0x8] sm:$0xff] %v415
      %526 = vst [vmem:[#allocation2 + $0x10] sm:$0xff] %v502
      %527 = vst [vmem:[#allocation2 + $0x18] sm:$0xff] %v504
      %528 = vst [vmem:[#allocation2 + $0x20] sm:$0xff] %v419
      %529 = vst [vmem:[#allocation2 + $0x28] sm:$0xff] %v421
      %530 = vst [vmem:[#allocation2 + $0x30] sm:$0xff] %v508
      %531 = vst [vmem:[#allocation2 + $0x38] sm:$0xff] %v510
      %532 = vst [vmem:[#allocation2 + $0x40] sm:$0xff] %v425
      %533 = vst [vmem:[#allocation2 + $0x48] sm:$0xff] %v427
      %534 = vst [vmem:[#allocation2 + $0x50] sm:$0xff] %v514
      %535 = vst [vmem:[#allocation2 + $0x58] sm:$0xff] %v516
      %536 = vst [vmem:[#allocation2 + $0x60] sm:$0xff] %v431
      %537 = vst [vmem:[#allocation2 + $0x68] sm:$0xff] %v433
      %538 = vst [vmem:[#allocation2 + $0x70] sm:$0xff] %v520
      %539 = vst [vmem:[#allocation2 + $0x78] sm:$0xff] %v522
      %v540 = vld [vmem:[#allocation3] sm:$0xff]
      %v541 = vld [vmem:[#allocation4] sm:$0xff]
      %v542 = vld [vmem:[#allocation2] sm:$0xff]
      %v543 = vld [vmem:[#allocation2 + $0x8] sm:$0xff]
      %v544 = vld [vmem:[#allocation2 + $0x10] sm:$0xff]
      %v545 = vld [vmem:[#allocation2 + $0x18] sm:$0xff]
      %v546 = vld [vmem:[%s2] sm:$0xff]
      %v547 = vld [vmem:[%s2 + $0x8] sm:$0xff]
      %v548 = vld [vmem:[%s2 + $0x10] sm:$0xff]
      %v549 = vld [vmem:[%s2 + $0x18] sm:$0xff]
      %v550 = vld [vmem:[%s2 + $0x20] sm:$0xff]
      %v551 = vld [vmem:[%s2 + $0x28] sm:$0xff]
      %v552 = vld [vmem:[%s2 + $0x30] sm:$0xff]
      %v553 = vld [vmem:[%s2 + $0x38] sm:$0xff]
      %v554 = vld [vmem:[%s2 + $0x40] sm:$0xff]
      %v555 = vld [vmem:[%s2 + $0x48] sm:$0xff]
      %v556 = vld [vmem:[%s2 + $0x50] sm:$0xff]
      %v557 = vld [vmem:[%s2 + $0x58] sm:$0xff]
      %v558 = vld [vmem:[%s2 + $0x60] sm:$0xff]
      %v559 = vld [vmem:[%s2 + $0x68] sm:$0xff]
      %v560 = vld [vmem:[%s2 + $0x70] sm:$0xff]
      %v561 = vld [vmem:[%s2 + $0x78] sm:$0xff]
      %v562 = vld [vmem:[%s2 + $0x80] sm:$0xff]
      %v563 = vld [vmem:[%s2 + $0x88] sm:$0xff]
      %v564 = vld [vmem:[%s2 + $0x90] sm:$0xff]
      %v565 = vld [vmem:[%s2 + $0x98] sm:$0xff]
      %v566 = vld [vmem:[%s2 + $0xa0] sm:$0xff]
      %v567 = vld [vmem:[%s2 + $0xa8] sm:$0xff]
      %v568 = vld [vmem:[%s2 + $0xb0] sm:$0xff]
      %v569 = vld [vmem:[%s2 + $0xb8] sm:$0xff]
      %v570 = vld [vmem:[%s2 + $0xc0] sm:$0xff]
      %v571 = vld [vmem:[%s2 + $0xc8] sm:$0xff]
      %v572 = vld [vmem:[%s2 + $0xd0] sm:$0xff]
      %v573 = vld [vmem:[%s2 + $0xd8] sm:$0xff]
      %v574 = vld [vmem:[%s2 + $0xe0] sm:$0xff]
      %v575 = vld [vmem:[%s2 + $0xe8] sm:$0xff]
      %v576 = vld [vmem:[%s2 + $0xf0] sm:$0xff]
      %v577 = vld [vmem:[%s2 + $0xf8] sm:$0xff]
      %v578 = vld [vmem:[%s2 + $0x100] sm:$0xff]
      %v579 = vld [vmem:[%s2 + $0x108] sm:$0xff]
      %v580 = vld [vmem:[%s2 + $0x110] sm:$0xff]
      %v581 = vld [vmem:[%s2 + $0x118] sm:$0xff]
      %v582 = vld [vmem:[%s2 + $0x120] sm:$0xff]
      %v583 = vld [vmem:[%s2 + $0x128] sm:$0xff]
      %v584 = vld [vmem:[%s2 + $0x130] sm:$0xff]
      %v585 = vld [vmem:[%s2 + $0x138] sm:$0xff]
      %v586 = vld [vmem:[%s2 + $0x140] sm:$0xff]
      %v587 = vld [vmem:[%s2 + $0x148] sm:$0xff]
      %v588 = vld [vmem:[%s2 + $0x150] sm:$0xff]
      %v589 = vld [vmem:[%s2 + $0x158] sm:$0xff]
      %v590 = vld [vmem:[%s2 + $0x160] sm:$0xff]
      %v591 = vld [vmem:[%s2 + $0x168] sm:$0xff]
      %v592 = vld [vmem:[%s2 + $0x170] sm:$0xff]
      %v593 = vld [vmem:[%s2 + $0x178] sm:$0xff]
      %v594 = vld [vmem:[%s2 + $0x180] sm:$0xff]
      %v595 = vld [vmem:[%s2 + $0x188] sm:$0xff]
      %v596 = vld [vmem:[%s2 + $0x190] sm:$0xff]
      %v597 = vld [vmem:[%s2 + $0x198] sm:$0xff]
      %v598 = vld [vmem:[%s2 + $0x1a0] sm:$0xff]
      %v599 = vld [vmem:[%s2 + $0x1a8] sm:$0xff]
      %v600 = vld [vmem:[%s2 + $0x1b0] sm:$0xff]
      %v601 = vld [vmem:[%s2 + $0x1b8] sm:$0xff]
      %v602 = vld [vmem:[%s2 + $0x1c0] sm:$0xff]
      %v603 = vld [vmem:[%s2 + $0x1c8] sm:$0xff]
      %v604 = vld [vmem:[%s2 + $0x1d0] sm:$0xff]
      %v605 = vld [vmem:[%s2 + $0x1d8] sm:$0xff]
      %v606 = vld [vmem:[%s2 + $0x1e0] sm:$0xff]
      %v607 = vld [vmem:[%s2 + $0x1e8] sm:$0xff]
      %v608 = vld [vmem:[%s2 + $0x1f0] sm:$0xff]
      %v609 = vld [vmem:[%s2 + $0x1f8] sm:$0xff]
      %610 = vmatprep.subr.mxu0 %v547
      %611 = vmatpush1.msra.mxu0 %v546
      %612 = vmatprep.subr.mxu0 %v551
      %613 = vmatpush1.msra.mxu0 %v550
      %614 = vmatprep.subr.mxu0 %v555
      %615 = vmatpush1.msra.mxu0 %v554
      %616 = vmatprep.subr.mxu0 %v559
      %617 = vmatpush1.msra.mxu0 %v558
      %618 = vmatprep.subr.mxu0 %v563
      %619 = vmatpush1.msra.mxu0 %v562
      %620 = vmatprep.subr.mxu0 %v567
      %621 = vmatpush1.msra.mxu0 %v566
      %622 = vmatprep.subr.mxu0 %v571
      %623 = vmatpush1.msra.mxu0 %v570
      %624 = vmatprep.subr.mxu0 %v575
      %625 = vmatpush1.msra.mxu0 %v574
      %626 = vmatprep.subr.mxu0 %v579
      %627 = vmatpush1.msra.mxu0 %v578
      %628 = vmatprep.subr.mxu0 %v583
      %629 = vmatpush1.msra.mxu0 %v582
      %630 = vmatprep.subr.mxu0 %v587
      %631 = vmatpush1.msra.mxu0 %v586
      %632 = vmatprep.subr.mxu0 %v591
      %633 = vmatpush1.msra.mxu0 %v590
      %634 = vmatprep.subr.mxu0 %v595
      %635 = vmatpush1.msra.mxu0 %v594
      %636 = vmatprep.subr.mxu0 %v599
      %637 = vmatpush1.msra.mxu0 %v598
      %638 = vmatprep.subr.mxu0 %v603
      %639 = vmatpush1.msra.mxu0 %v602
      %640 = vmatprep.subr.mxu0 %v607
      %641 = vmatpush1.msra.mxu0 %v606
      %642 = vmatprep.subr.mxu0 0.0
      %643 = vmatpush1.msra.mxu0 0.0
      %644 = vmatprep.subr.mxu0 0.0
      %645 = vmatpush1.msra.mxu0 0.0
      %646 = vmatprep.subr.mxu0 0.0
      %647 = vmatpush1.msra.mxu0 0.0
      %648 = vmatprep.subr.mxu0 0.0
      %649 = vmatpush1.msra.mxu0 0.0
      %650 = vmatprep.subr.mxu0 0.0
      %651 = vmatpush1.msra.mxu0 0.0
      %652 = vmatprep.subr.mxu0 0.0
      %653 = vmatpush1.msra.mxu0 0.0
      %654 = vmatprep.subr.mxu0 0.0
      %655 = vmatpush1.msra.mxu0 0.0
      %656 = vmatprep.subr.mxu0 0.0
      %657 = vmatpush1.msra.mxu0 0.0
      %658 = vmatprep.subr.mxu0 0.0
      %659 = vmatpush1.msra.mxu0 0.0
      %660 = vmatprep.subr.mxu0 0.0
      %661 = vmatpush1.msra.mxu0 0.0
      %662 = vmatprep.subr.mxu0 0.0
      %663 = vmatpush1.msra.mxu0 0.0
      %664 = vmatprep.subr.mxu0 0.0
      %665 = vmatpush1.msra.mxu0 0.0
      %666 = vmatprep.subr.mxu0 0.0
      %667 = vmatpush1.msra.mxu0 0.0
      %668 = vmatprep.subr.mxu0 0.0
      %669 = vmatpush1.msra.mxu0 0.0
      %670 = vmatprep.subr.mxu0 0.0
      %671 = vmatpush1.msra.mxu0 0.0
      %672 = vmatprep.subr.mxu0 0.0
      %673 = vmatpush1.msra.mxu0 0.0
      %674 = vmatprep.mubr.f32.mxu0 0.0
      %675 = vmatmul.mubr.f32.gmra.mrb[0].mxu0 %v540
      %v676 = vpop.f32.mrb[0].mxu0
      %v677 = vadd.f32 0.0, %v676
      %v678 = vpop.f32.mrb[0].mxu0
      %v679 = vadd.f32 0.0, %v678
      %680 = vdwg.mxu0
      %681 = vmatprep.subr.mxu0 %v549
      %682 = vmatpush1.msra.mxu0 %v548
      %683 = vmatprep.subr.mxu0 %v553
      %684 = vmatpush1.msra.mxu0 %v552
      %685 = vmatprep.subr.mxu0 %v557
      %686 = vmatpush1.msra.mxu0 %v556
      %687 = vmatprep.subr.mxu0 %v561
      %688 = vmatpush1.msra.mxu0 %v560
      %689 = vmatprep.subr.mxu0 %v565
      %690 = vmatpush1.msra.mxu0 %v564
      %691 = vmatprep.subr.mxu0 %v569
      %692 = vmatpush1.msra.mxu0 %v568
      %693 = vmatprep.subr.mxu0 %v573
      %694 = vmatpush1.msra.mxu0 %v572
      %695 = vmatprep.subr.mxu0 %v577
      %696 = vmatpush1.msra.mxu0 %v576
      %697 = vmatprep.subr.mxu0 %v581
      %698 = vmatpush1.msra.mxu0 %v580
      %699 = vmatprep.subr.mxu0 %v585
      %700 = vmatpush1.msra.mxu0 %v584
      %701 = vmatprep.subr.mxu0 %v589
      %702 = vmatpush1.msra.mxu0 %v588
      %703 = vmatprep.subr.mxu0 %v593
      %704 = vmatpush1.msra.mxu0 %v592
      %705 = vmatprep.subr.mxu0 %v597
      %706 = vmatpush1.msra.mxu0 %v596
      %707 = vmatprep.subr.mxu0 %v601
      %708 = vmatpush1.msra.mxu0 %v600
      %709 = vmatprep.subr.mxu0 %v605
      %710 = vmatpush1.msra.mxu0 %v604
      %711 = vmatprep.subr.mxu0 %v609
      %712 = vmatpush1.msra.mxu0 %v608
      %713 = vmatprep.subr.mxu0 0.0
      %714 = vmatpush1.msra.mxu0 0.0
      %715 = vmatprep.subr.mxu0 0.0
      %716 = vmatpush1.msra.mxu0 0.0
      %717 = vmatprep.subr.mxu0 0.0
      %718 = vmatpush1.msra.mxu0 0.0
      %719 = vmatprep.subr.mxu0 0.0
      %720 = vmatpush1.msra.mxu0 0.0
      %721 = vmatprep.subr.mxu0 0.0
      %722 = vmatpush1.msra.mxu0 0.0
      %723 = vmatprep.subr.mxu0 0.0
      %724 = vmatpush1.msra.mxu0 0.0
      %725 = vmatprep.subr.mxu0 0.0
      %726 = vmatpush1.msra.mxu0 0.0
      %727 = vmatprep.subr.mxu0 0.0
      %728 = vmatpush1.msra.mxu0 0.0
      %729 = vmatprep.subr.mxu0 0.0
      %730 = vmatpush1.msra.mxu0 0.0
      %731 = vmatprep.subr.mxu0 0.0
      %732 = vmatpush1.msra.mxu0 0.0
      %733 = vmatprep.subr.mxu0 0.0
      %734 = vmatpush1.msra.mxu0 0.0
      %735 = vmatprep.subr.mxu0 0.0
      %736 = vmatpush1.msra.mxu0 0.0
      %737 = vmatprep.subr.mxu0 0.0
      %738 = vmatpush1.msra.mxu0 0.0
      %739 = vmatprep.subr.mxu0 0.0
      %740 = vmatpush1.msra.mxu0 0.0
      %741 = vmatprep.subr.mxu0 0.0
      %742 = vmatpush1.msra.mxu0 0.0
      %743 = vmatprep.subr.mxu0 0.0
      %744 = vmatpush1.msra.mxu0 0.0
      %745 = vmatprep.mubr.f32.mxu0 0.0
      %746 = vmatmul.mubr.f32.gmra.mrb[0].mxu0 %v540
      %v747 = vpop.f32.mrb[0].mxu0
      %v748 = vadd.f32 0.0, %v747
      %v749 = vpop.f32.mrb[0].mxu0
      %v750 = vadd.f32 0.0, %v749
      %751 = vdwg.mxu0
      %v752 = vadd.f32 %v542, %v677
      %v753 = vadd.f32 %v543, %v679
      %v754 = vadd.f32 %v544, %v748
      %v755 = vadd.f32 %v545, %v750
      %v756 = vxor.u32 %v752, 2147483648
      %v757 = vxor.u32 %v753, 2147483648
      %v758 = vxor.u32 %v754, 2147483648
      %v759 = vmul.f32 %v756, 1.442695
      %v760 = vpow.pop %v759
      %v761 = vmul.f32 %v757, 1.442695
      %v762 = vpow.pop %v761
      %v763 = vmul.f32 %v758, 1.442695
      %v764 = vpow.pop %v763
      %v765 = vadd.f32 %v760, 1.0
      %v766 = vadd.f32 %v762, 1.0
      %v767 = vadd.f32 %v764, 1.0
      %v768 = vrcp.pop %v765
      %v769 = vmul.f32 1.0, %v768
      %v770 = vrcp.pop %v766
      %v771 = vmul.f32 1.0, %v770
      %v772 = vrcp.pop %v767
      %v773 = vmul.f32 1.0, %v772
      %v774 = vtanh.pop %v755
      %v775 = vmul.f32 %v771, %v541
      %v776 = vmul.f32 %v769, %v774
      %v777 = vadd.f32 %v775, %v776
      %v778 = vtanh.pop %v777
      %v779 = vmul.f32 %v773, %v778
      %780 = vst [vmem:[%s248] sm:$0xff] %v779
      %s781 = scalar_lea.vmem [#allocation2], 32
      %v782 = vld [vmem:[%s781] sm:$0xff]
      %v783 = vld [vmem:[%s781 + $0x8] sm:$0xff]
      %v784 = vld [vmem:[%s781 + $0x10] sm:$0xff]
      %v785 = vld [vmem:[%s781 + $0x18] sm:$0xff]
      %v786 = vld [vmem:[%s2] sm:$0xff]
      %v787 = vld [vmem:[%s2 + $0x8] sm:$0xff]
      %v788 = vld [vmem:[%s2 + $0x10] sm:$0xff]
      %v789 = vld [vmem:[%s2 + $0x18] sm:$0xff]
      %v790 = vld [vmem:[%s2 + $0x20] sm:$0xff]
      %v791 = vld [vmem:[%s2 + $0x28] sm:$0xff]
      %v792 = vld [vmem:[%s2 + $0x30] sm:$0xff]
      %v793 = vld [vmem:[%s2 + $0x38] sm:$0xff]
      %v794 = vld [vmem:[%s2 + $0x40] sm:$0xff]
      %v795 = vld [vmem:[%s2 + $0x48] sm:$0xff]
      %v796 = vld [vmem:[%s2 + $0x50] sm:$0xff]
      %v797 = vld [vmem:[%s2 + $0x58] sm:$0xff]
      %v798 = vld [vmem:[%s2 + $0x60] sm:$0xff]
      %v799 = vld [vmem:[%s2 + $0x68] sm:$0xff]
      %v800 = vld [vmem:[%s2 + $0x70] sm:$0xff]
      %v801 = vld [vmem:[%s2 + $0x78] sm:$0xff]
      %v802 = vld [vmem:[%s2 + $0x80] sm:$0xff]
      %v803 = vld [vmem:[%s2 + $0x88] sm:$0xff]
      %v804 = vld [vmem:[%s2 + $0x90] sm:$0xff]
      %v805 = vld [vmem:[%s2 + $0x98] sm:$0xff]
      %v806 = vld [vmem:[%s2 + $0xa0] sm:$0xff]
      %v807 = vld [vmem:[%s2 + $0xa8] sm:$0xff]
      %v808 = vld [vmem:[%s2 + $0xb0] sm:$0xff]
      %v809 = vld [vmem:[%s2 + $0xb8] sm:$0xff]
      %v810 = vld [vmem:[%s2 + $0xc0] sm:$0xff]
      %v811 = vld [vmem:[%s2 + $0xc8] sm:$0xff]
      %v812 = vld [vmem:[%s2 + $0xd0] sm:$0xff]
      %v813 = vld [vmem:[%s2 + $0xd8] sm:$0xff]
      %v814 = vld [vmem:[%s2 + $0xe0] sm:$0xff]
      %v815 = vld [vmem:[%s2 + $0xe8] sm:$0xff]
      %v816 = vld [vmem:[%s2 + $0xf0] sm:$0xff]
      %v817 = vld [vmem:[%s2 + $0xf8] sm:$0xff]
      %v818 = vld [vmem:[%s2 + $0x100] sm:$0xff]
      %v819 = vld [vmem:[%s2 + $0x108] sm:$0xff]
      %v820 = vld [vmem:[%s2 + $0x110] sm:$0xff]
      %v821 = vld [vmem:[%s2 + $0x118] sm:$0xff]
      %v822 = vld [vmem:[%s2 + $0x120] sm:$0xff]
      %v823 = vld [vmem:[%s2 + $0x128] sm:$0xff]
      %v824 = vld [vmem:[%s2 + $0x130] sm:$0xff]
      %v825 = vld [vmem:[%s2 + $0x138] sm:$0xff]
      %v826 = vld [vmem:[%s2 + $0x140] sm:$0xff]
      %v827 = vld [vmem:[%s2 + $0x148] sm:$0xff]
      %v828 = vld [vmem:[%s2 + $0x150] sm:$0xff]
      %v829 = vld [vmem:[%s2 + $0x158] sm:$0xff]
      %v830 = vld [vmem:[%s2 + $0x160] sm:$0xff]
      %v831 = vld [vmem:[%s2 + $0x168] sm:$0xff]
      %v832 = vld [vmem:[%s2 + $0x170] sm:$0xff]
      %v833 = vld [vmem:[%s2 + $0x178] sm:$0xff]
      %v834 = vld [vmem:[%s2 + $0x180] sm:$0xff]
      %v835 = vld [vmem:[%s2 + $0x188] sm:$0xff]
      %v836 = vld [vmem:[%s2 + $0x190] sm:$0xff]
      %v837 = vld [vmem:[%s2 + $0x198] sm:$0xff]
      %v838 = vld [vmem:[%s2 + $0x1a0] sm:$0xff]
      %v839 = vld [vmem:[%s2 + $0x1a8] sm:$0xff]
      %v840 = vld [vmem:[%s2 + $0x1b0] sm:$0xff]
      %v841 = vld [vmem:[%s2 + $0x1b8] sm:$0xff]
      %v842 = vld [vmem:[%s2 + $0x1c0] sm:$0xff]
      %v843 = vld [vmem:[%s2 + $0x1c8] sm:$0xff]
      %v844 = vld [vmem:[%s2 + $0x1d0] sm:$0xff]
      %v845 = vld [vmem:[%s2 + $0x1d8] sm:$0xff]
      %v846 = vld [vmem:[%s2 + $0x1e0] sm:$0xff]
      %v847 = vld [vmem:[%s2 + $0x1e8] sm:$0xff]
      %v848 = vld [vmem:[%s2 + $0x1f0] sm:$0xff]
      %v849 = vld [vmem:[%s2 + $0x1f8] sm:$0xff]
      %850 = vmatprep.subr.mxu0 %v787
      %851 = vmatpush1.msra.mxu0 %v786
      %852 = vmatprep.subr.mxu0 %v791
      %853 = vmatpush1.msra.mxu0 %v790
      %854 = vmatprep.subr.mxu0 %v795
      %855 = vmatpush1.msra.mxu0 %v794
      %856 = vmatprep.subr.mxu0 %v799
      %857 = vmatpush1.msra.mxu0 %v798
      %858 = vmatprep.subr.mxu0 %v803
      %859 = vmatpush1.msra.mxu0 %v802
      %860 = vmatprep.subr.mxu0 %v807
      %861 = vmatpush1.msra.mxu0 %v806
      %862 = vmatprep.subr.mxu0 %v811
      %863 = vmatpush1.msra.mxu0 %v810
      %864 = vmatprep.subr.mxu0 %v815
      %865 = vmatpush1.msra.mxu0 %v814
      %866 = vmatprep.subr.mxu0 %v819
      %867 = vmatpush1.msra.mxu0 %v818
      %868 = vmatprep.subr.mxu0 %v823
      %869 = vmatpush1.msra.mxu0 %v822
      %870 = vmatprep.subr.mxu0 %v827
      %871 = vmatpush1.msra.mxu0 %v826
      %872 = vmatprep.subr.mxu0 %v831
      %873 = vmatpush1.msra.mxu0 %v830
      %874 = vmatprep.subr.mxu0 %v835
      %875 = vmatpush1.msra.mxu0 %v834
      %876 = vmatprep.subr.mxu0 %v839
      %877 = vmatpush1.msra.mxu0 %v838
      %878 = vmatprep.subr.mxu0 %v843
      %879 = vmatpush1.msra.mxu0 %v842
      %880 = vmatprep.subr.mxu0 %v847
      %881 = vmatpush1.msra.mxu0 %v846
      %882 = vmatprep.subr.mxu0 0.0
      %883 = vmatpush1.msra.mxu0 0.0
      %884 = vmatprep.subr.mxu0 0.0
      %885 = vmatpush1.msra.mxu0 0.0
      %886 = vmatprep.subr.mxu0 0.0
      %887 = vmatpush1.msra.mxu0 0.0
      %888 = vmatprep.subr.mxu0 0.0
      %889 = vmatpush1.msra.mxu0 0.0
      %890 = vmatprep.subr.mxu0 0.0
      %891 = vmatpush1.msra.mxu0 0.0
      %892 = vmatprep.subr.mxu0 0.0
      %893 = vmatpush1.msra.mxu0 0.0
      %894 = vmatprep.subr.mxu0 0.0
      %895 = vmatpush1.msra.mxu0 0.0
      %896 = vmatprep.subr.mxu0 0.0
      %897 = vmatpush1.msra.mxu0 0.0
      %898 = vmatprep.subr.mxu0 0.0
      %899 = vmatpush1.msra.mxu0 0.0
      %900 = vmatprep.subr.mxu0 0.0
      %901 = vmatpush1.msra.mxu0 0.0
      %902 = vmatprep.subr.mxu0 0.0
      %903 = vmatpush1.msra.mxu0 0.0
      %904 = vmatprep.subr.mxu0 0.0
      %905 = vmatpush1.msra.mxu0 0.0
      %906 = vmatprep.subr.mxu0 0.0
      %907 = vmatpush1.msra.mxu0 0.0
      %908 = vmatprep.subr.mxu0 0.0
      %909 = vmatpush1.msra.mxu0 0.0
      %910 = vmatprep.subr.mxu0 0.0
      %911 = vmatpush1.msra.mxu0 0.0
      %912 = vmatprep.subr.mxu0 0.0
      %913 = vmatpush1.msra.mxu0 0.0
      %914 = vmatprep.mubr.f32.mxu0 0.0
      %915 = vmatmul.mubr.f32.gmra.mrb[0].mxu0 %v779
      %v916 = vpop.f32.mrb[0].mxu0
      %v917 = vadd.f32 0.0, %v916
      %v918 = vpop.f32.mrb[0].mxu0
      %v919 = vadd.f32 0.0, %v918
      %920 = vdwg.mxu0
      %921 = vmatprep.subr.mxu0 %v789
      %922 = vmatpush1.msra.mxu0 %v788
      %923 = vmatprep.subr.mxu0 %v793
      %924 = vmatpush1.msra.mxu0 %v792
      %925 = vmatprep.subr.mxu0 %v797
      %926 = vmatpush1.msra.mxu0 %v796
      %927 = vmatprep.subr.mxu0 %v801
      %928 = vmatpush1.msra.mxu0 %v800
      %929 = vmatprep.subr.mxu0 %v805
      %930 = vmatpush1.msra.mxu0 %v804
      %931 = vmatprep.subr.mxu0 %v809
      %932 = vmatpush1.msra.mxu0 %v808
      %933 = vmatprep.subr.mxu0 %v813
      %934 = vmatpush1.msra.mxu0 %v812
      %935 = vmatprep.subr.mxu0 %v817
      %936 = vmatpush1.msra.mxu0 %v816
      %937 = vmatprep.subr.mxu0 %v821
      %938 = vmatpush1.msra.mxu0 %v820
      %939 = vmatprep.subr.mxu0 %v825
      %940 = vmatpush1.msra.mxu0 %v824
      %941 = vmatprep.subr.mxu0 %v829
      %942 = vmatpush1.msra.mxu0 %v828
      %943 = vmatprep.subr.mxu0 %v833
      %944 = vmatpush1.msra.mxu0 %v832
      %945 = vmatprep.subr.mxu0 %v837
      %946 = vmatpush1.msra.mxu0 %v836
      %947 = vmatprep.subr.mxu0 %v841
      %948 = vmatpush1.msra.mxu0 %v840
      %949 = vmatprep.subr.mxu0 %v845
      %950 = vmatpush1.msra.mxu0 %v844
      %951 = vmatprep.subr.mxu0 %v849
      %952 = vmatpush1.msra.mxu0 %v848
      %953 = vmatprep.subr.mxu0 0.0
      %954 = vmatpush1.msra.mxu0 0.0
      %955 = vmatprep.subr.mxu0 0.0
      %956 = vmatpush1.msra.mxu0 0.0
      %957 = vmatprep.subr.mxu0 0.0
      %958 = vmatpush1.msra.mxu0 0.0
      %959 = vmatprep.subr.mxu0 0.0
      %960 = vmatpush1.msra.mxu0 0.0
      %961 = vmatprep.subr.mxu0 0.0
      %962 = vmatpush1.msra.mxu0 0.0
      %963 = vmatprep.subr.mxu0 0.0
      %964 = vmatpush1.msra.mxu0 0.0
      %965 = vmatprep.subr.mxu0 0.0
      %966 = vmatpush1.msra.mxu0 0.0
      %967 = vmatprep.subr.mxu0 0.0
      %968 = vmatpush1.msra.mxu0 0.0
      %969 = vmatprep.subr.mxu0 0.0
      %970 = vmatpush1.msra.mxu0 0.0
      %971 = vmatprep.subr.mxu0 0.0
      %972 = vmatpush1.msra.mxu0 0.0
      %973 = vmatprep.subr.mxu0 0.0
      %974 = vmatpush1.msra.mxu0 0.0
      %975 = vmatprep.subr.mxu0 0.0
      %976 = vmatpush1.msra.mxu0 0.0
      %977 = vmatprep.subr.mxu0 0.0
      %978 = vmatpush1.msra.mxu0 0.0
      %979 = vmatprep.subr.mxu0 0.0
      %980 = vmatpush1.msra.mxu0 0.0
      %981 = vmatprep.subr.mxu0 0.0
      %982 = vmatpush1.msra.mxu0 0.0
      %983 = vmatprep.subr.mxu0 0.0
      %984 = vmatpush1.msra.mxu0 0.0
      %985 = vmatprep.mubr.f32.mxu0 0.0
      %986 = vmatmul.mubr.f32.gmra.mrb[0].mxu0 %v779
      %v987 = vpop.f32.mrb[0].mxu0
      %v988 = vadd.f32 0.0, %v987
      %v989 = vpop.f32.mrb[0].mxu0
      %v990 = vadd.f32 0.0, %v989
      %991 = vdwg.mxu0
      %v992 = vadd.f32 %v782, %v917
      %v993 = vadd.f32 %v783, %v919
      %v994 = vadd.f32 %v784, %v988
      %v995 = vadd.f32 %v785, %v990
      %v996 = vxor.u32 %v992, 2147483648
      %v997 = vxor.u32 %v993, 2147483648
      %v998 = vxor.u32 %v994, 2147483648
      %v999 = vmul.f32 %v996, 1.442695
      %v1000 = vpow.pop %v999
      %v1001 = vmul.f32 %v997, 1.442695
      %v1002 = vpow.pop %v1001
      %v1003 = vmul.f32 %v998, 1.442695
      %v1004 = vpow.pop %v1003
      %v1005 = vadd.f32 %v1000, 1.0
      %v1006 = vadd.f32 %v1002, 1.0
      %v1007 = vadd.f32 %v1004, 1.0
      %v1008 = vrcp.pop %v1005
      %v1009 = vmul.f32 1.0, %v1008
      %v1010 = vrcp.pop %v1006
      %v1011 = vmul.f32 1.0, %v1010
      %v1012 = vrcp.pop %v1007
      %v1013 = vmul.f32 1.0, %v1012
      %v1014 = vtanh.pop %v995
      %v1015 = vmul.f32 %v1011, %v777
      %v1016 = vmul.f32 %v1009, %v1014
      %v1017 = vadd.f32 %v1015, %v1016
      %v1018 = vtanh.pop %v1017
      %v1019 = vmul.f32 %v1013, %v1018
      %s1020 = scalar_lea.vmem %s248, 8
      %1021 = vst [vmem:[%s1020] sm:$0xff] %v1019
      %s1022 = scalar_lea.vmem [#allocation2], 64
      %v1023 = vld [vmem:[%s1022] sm:$0xff]
      %v1024 = vld [vmem:[%s1022 + $0x8] sm:$0xff]
      %v1025 = vld [vmem:[%s1022 + $0x10] sm:$0xff]
      %v1026 = vld [vmem:[%s1022 + $0x18] sm:$0xff]
      %v1027 = vld [vmem:[%s2] sm:$0xff]
      %v1028 = vld [vmem:[%s2 + $0x8] sm:$0xff]
      %v1029 = vld [vmem:[%s2 + $0x10] sm:$0xff]
      %v1030 = vld [vmem:[%s2 + $0x18] sm:$0xff]
      %v1031 = vld [vmem:[%s2 + $0x20] sm:$0xff]
      %v1032 = vld [vmem:[%s2 + $0x28] sm:$0xff]
      %v1033 = vld [vmem:[%s2 + $0x30] sm:$0xff]
      %v1034 = vld [vmem:[%s2 + $0x38] sm:$0xff]
      %v1035 = vld [vmem:[%s2 + $0x40] sm:$0xff]
      %v1036 = vld [vmem:[%s2 + $0x48] sm:$0xff]
      %v1037 = vld [vmem:[%s2 + $0x50] sm:$0xff]
      %v1038 = vld [vmem:[%s2 + $0x58] sm:$0xff]
      %v1039 = vld [vmem:[%s2 + $0x60] sm:$0xff]
      %v1040 = vld [vmem:[%s2 + $0x68] sm:$0xff]
      %v1041 = vld [vmem:[%s2 + $0x70] sm:$0xff]
      %v1042 = vld [vmem:[%s2 + $0x78] sm:$0xff]
      %v1043 = vld [vmem:[%s2 + $0x80] sm:$0xff]
      %v1044 = vld [vmem:[%s2 + $0x88] sm:$0xff]
      %v1045 = vld [vmem:[%s2 + $0x90] sm:$0xff]
      %v1046 = vld [vmem:[%s2 + $0x98] sm:$0xff]
      %v1047 = vld [vmem:[%s2 + $0xa0] sm:$0xff]
      %v1048 = vld [vmem:[%s2 + $0xa8] sm:$0xff]
      %v1049 = vld [vmem:[%s2 + $0xb0] sm:$0xff]
      %v1050 = vld [vmem:[%s2 + $0xb8] sm:$0xff]
      %v1051 = vld [vmem:[%s2 + $0xc0] sm:$0xff]
      %v1052 = vld [vmem:[%s2 + $0xc8] sm:$0xff]
      %v1053 = vld [vmem:[%s2 + $0xd0] sm:$0xff]
      %v1054 = vld [vmem:[%s2 + $0xd8] sm:$0xff]
      %v1055 = vld [vmem:[%s2 + $0xe0] sm:$0xff]
      %v1056 = vld [vmem:[%s2 + $0xe8] sm:$0xff]
      %v1057 = vld [vmem:[%s2 + $0xf0] sm:$0xff]
      %v1058 = vld [vmem:[%s2 + $0xf8] sm:$0xff]
      %v1059 = vld [vmem:[%s2 + $0x100] sm:$0xff]
      %v1060 = vld [vmem:[%s2 + $0x108] sm:$0xff]
      %v1061 = vld [vmem:[%s2 + $0x110] sm:$0xff]
      %v1062 = vld [vmem:[%s2 + $0x118] sm:$0xff]
      %v1063 = vld [vmem:[%s2 + $0x120] sm:$0xff]
      %v1064 = vld [vmem:[%s2 + $0x128] sm:$0xff]
      %v1065 = vld [vmem:[%s2 + $0x130] sm:$0xff]
      %v1066 = vld [vmem:[%s2 + $0x138] sm:$0xff]
      %v1067 = vld [vmem:[%s2 + $0x140] sm:$0xff]
      %v1068 = vld [vmem:[%s2 + $0x148] sm:$0xff]
      %v1069 = vld [vmem:[%s2 + $0x150] sm:$0xff]
      %v1070 = vld [vmem:[%s2 + $0x158] sm:$0xff]
      %v1071 = vld [vmem:[%s2 + $0x160] sm:$0xff]
      %v1072 = vld [vmem:[%s2 + $0x168] sm:$0xff]
      %v1073 = vld [vmem:[%s2 + $0x170] sm:$0xff]
      %v1074 = vld [vmem:[%s2 + $0x178] sm:$0xff]
      %v1075 = vld [vmem:[%s2 + $0x180] sm:$0xff]
      %v1076 = vld [vmem:[%s2 + $0x188] sm:$0xff]
      %v1077 = vld [vmem:[%s2 + $0x190] sm:$0xff]
      %v1078 = vld [vmem:[%s2 + $0x198] sm:$0xff]
      %v1079 = vld [vmem:[%s2 + $0x1a0] sm:$0xff]
      %v1080 = vld [vmem:[%s2 + $0x1a8] sm:$0xff]
      %v1081 = vld [vmem:[%s2 + $0x1b0] sm:$0xff]
      %v1082 = vld [vmem:[%s2 + $0x1b8] sm:$0xff]
      %v1083 = vld [vmem:[%s2 + $0x1c0] sm:$0xff]
      %v1084 = vld [vmem:[%s2 + $0x1c8] sm:$0xff]
      %v1085 = vld [vmem:[%s2 + $0x1d0] sm:$0xff]
      %v1086 = vld [vmem:[%s2 + $0x1d8] sm:$0xff]
      %v1087 = vld [vmem:[%s2 + $0x1e0] sm:$0xff]
      %v1088 = vld [vmem:[%s2 + $0x1e8] sm:$0xff]
      %v1089 = vld [vmem:[%s2 + $0x1f0] sm:$0xff]
      %v1090 = vld [vmem:[%s2 + $0x1f8] sm:$0xff]
      %1091 = vmatprep.subr.mxu0 %v1028
      %1092 = vmatpush1.msra.mxu0 %v1027
      %1093 = vmatprep.subr.mxu0 %v1032
      %1094 = vmatpush1.msra.mxu0 %v1031
      %1095 = vmatprep.subr.mxu0 %v1036
      %1096 = vmatpush1.msra.mxu0 %v1035
      %1097 = vmatprep.subr.mxu0 %v1040
      %1098 = vmatpush1.msra.mxu0 %v1039
      %1099 = vmatprep.subr.mxu0 %v1044
      %1100 = vmatpush1.msra.mxu0 %v1043
      %1101 = vmatprep.subr.mxu0 %v1048
      %1102 = vmatpush1.msra.mxu0 %v1047
      %1103 = vmatprep.subr.mxu0 %v1052
      %1104 = vmatpush1.msra.mxu0 %v1051
      %1105 = vmatprep.subr.mxu0 %v1056
      %1106 = vmatpush1.msra.mxu0 %v1055
      %1107 = vmatprep.subr.mxu0 %v1060
      %1108 = vmatpush1.msra.mxu0 %v1059
      %1109 = vmatprep.subr.mxu0 %v1064
      %1110 = vmatpush1.msra.mxu0 %v1063
      %1111 = vmatprep.subr.mxu0 %v1068
      %1112 = vmatpush1.msra.mxu0 %v1067
      %1113 = vmatprep.subr.mxu0 %v1072
      %1114 = vmatpush1.msra.mxu0 %v1071
      %1115 = vmatprep.subr.mxu0 %v1076
      %1116 = vmatpush1.msra.mxu0 %v1075
      %1117 = vmatprep.subr.mxu0 %v1080
      %1118 = vmatpush1.msra.mxu0 %v1079
      %1119 = vmatprep.subr.mxu0 %v1084
      %1120 = vmatpush1.msra.mxu0 %v1083
      %1121 = vmatprep.subr.mxu0 %v1088
      %1122 = vmatpush1.msra.mxu0 %v1087
      %1123 = vmatprep.subr.mxu0 0.0
      %1124 = vmatpush1.msra.mxu0 0.0
      %1125 = vmatprep.subr.mxu0 0.0
      %1126 = vmatpush1.msra.mxu0 0.0
      %1127 = vmatprep.subr.mxu0 0.0
      %1128 = vmatpush1.msra.mxu0 0.0
      %1129 = vmatprep.subr.mxu0 0.0
      %1130 = vmatpush1.msra.mxu0 0.0
      %1131 = vmatprep.subr.mxu0 0.0
      %1132 = vmatpush1.msra.mxu0 0.0
      %1133 = vmatprep.subr.mxu0 0.0
      %1134 = vmatpush1.msra.mxu0 0.0
      %1135 = vmatprep.subr.mxu0 0.0
      %1136 = vmatpush1.msra.mxu0 0.0
      %1137 = vmatprep.subr.mxu0 0.0
      %1138 = vmatpush1.msra.mxu0 0.0
      %1139 = vmatprep.subr.mxu0 0.0
      %1140 = vmatpush1.msra.mxu0 0.0
      %1141 = vmatprep.subr.mxu0 0.0
      %1142 = vmatpush1.msra.mxu0 0.0
      %1143 = vmatprep.subr.mxu0 0.0
      %1144 = vmatpush1.msra.mxu0 0.0
      %1145 = vmatprep.subr.mxu0 0.0
      %1146 = vmatpush1.msra.mxu0 0.0
      %1147 = vmatprep.subr.mxu0 0.0
      %1148 = vmatpush1.msra.mxu0 0.0
      %1149 = vmatprep.subr.mxu0 0.0
      %1150 = vmatpush1.msra.mxu0 0.0
      %1151 = vmatprep.subr.mxu0 0.0
      %1152 = vmatpush1.msra.mxu0 0.0
      %1153 = vmatprep.subr.mxu0 0.0
      %1154 = vmatpush1.msra.mxu0 0.0
      %1155 = vmatprep.mubr.f32.mxu0 0.0
      %1156 = vmatmul.mubr.f32.gmra.mrb[0].mxu0 %v1019
      %v1157 = vpop.f32.mrb[0].mxu0
      %v1158 = vadd.f32 0.0, %v1157
      %v1159 = vpop.f32.mrb[0].mxu0
      %v1160 = vadd.f32 0.0, %v1159
      %1161 = vdwg.mxu0
      %1162 = vmatprep.subr.mxu0 %v1030
      %1163 = vmatpush1.msra.mxu0 %v1029
      %1164 = vmatprep.subr.mxu0 %v1034
      %1165 = vmatpush1.msra.mxu0 %v1033
      %1166 = vmatprep.subr.mxu0 %v1038
      %1167 = vmatpush1.msra.mxu0 %v1037
      %1168 = vmatprep.subr.mxu0 %v1042
      %1169 = vmatpush1.msra.mxu0 %v1041
      %1170 = vmatprep.subr.mxu0 %v1046
      %1171 = vmatpush1.msra.mxu0 %v1045
      %1172 = vmatprep.subr.mxu0 %v1050
      %1173 = vmatpush1.msra.mxu0 %v1049
      %1174 = vmatprep.subr.mxu0 %v1054
      %1175 = vmatpush1.msra.mxu0 %v1053
      %1176 = vmatprep.subr.mxu0 %v1058
      %1177 = vmatpush1.msra.mxu0 %v1057
      %1178 = vmatprep.subr.mxu0 %v1062
      %1179 = vmatpush1.msra.mxu0 %v1061
      %1180 = vmatprep.subr.mxu0 %v1066
      %1181 = vmatpush1.msra.mxu0 %v1065
      %1182 = vmatprep.subr.mxu0 %v1070
      %1183 = vmatpush1.msra.mxu0 %v1069
      %1184 = vmatprep.subr.mxu0 %v1074
      %1185 = vmatpush1.msra.mxu0 %v1073
      %1186 = vmatprep.subr.mxu0 %v1078
      %1187 = vmatpush1.msra.mxu0 %v1077
      %1188 = vmatprep.subr.mxu0 %v1082
      %1189 = vmatpush1.msra.mxu0 %v1081
      %1190 = vmatprep.subr.mxu0 %v1086
      %1191 = vmatpush1.msra.mxu0 %v1085
      %1192 = vmatprep.subr.mxu0 %v1090
      %1193 = vmatpush1.msra.mxu0 %v1089
      %1194 = vmatprep.subr.mxu0 0.0
      %1195 = vmatpush1.msra.mxu0 0.0
      %1196 = vmatprep.subr.mxu0 0.0
      %1197 = vmatpush1.msra.mxu0 0.0
      %1198 = vmatprep.subr.mxu0 0.0
      %1199 = vmatpush1.msra.mxu0 0.0
      %1200 = vmatprep.subr.mxu0 0.0
      %1201 = vmatpush1.msra.mxu0 0.0
      %1202 = vmatprep.subr.mxu0 0.0
      %1203 = vmatpush1.msra.mxu0 0.0
      %1204 = vmatprep.subr.mxu0 0.0
      %1205 = vmatpush1.msra.mxu0 0.0
      %1206 = vmatprep.subr.mxu0 0.0
      %1207 = vmatpush1.msra.mxu0 0.0
      %1208 = vmatprep.subr.mxu0 0.0
      %1209 = vmatpush1.msra.mxu0 0.0
      %1210 = vmatprep.subr.mxu0 0.0
      %1211 = vmatpush1.msra.mxu0 0.0
      %1212 = vmatprep.subr.mxu0 0.0
      %1213 = vmatpush1.msra.mxu0 0.0
      %1214 = vmatprep.subr.mxu0 0.0
      %1215 = vmatpush1.msra.mxu0 0.0
      %1216 = vmatprep.subr.mxu0 0.0
      %1217 = vmatpush1.msra.mxu0 0.0
      %1218 = vmatprep.subr.mxu0 0.0
      %1219 = vmatpush1.msra.mxu0 0.0
      %1220 = vmatprep.subr.mxu0 0.0
      %1221 = vmatpush1.msra.mxu0 0.0
      %1222 = vmatprep.subr.mxu0 0.0
      %1223 = vmatpush1.msra.mxu0 0.0
      %1224 = vmatprep.subr.mxu0 0.0
      %1225 = vmatpush1.msra.mxu0 0.0
      %1226 = vmatprep.mubr.f32.mxu0 0.0
      %1227 = vmatmul.mubr.f32.gmra.mrb[0].mxu0 %v1019
      %v1228 = vpop.f32.mrb[0].mxu0
      %v1229 = vadd.f32 0.0, %v1228
      %v1230 = vpop.f32.mrb[0].mxu0
      %v1231 = vadd.f32 0.0, %v1230
      %1232 = vdwg.mxu0
      %v1233 = vadd.f32 %v1023, %v1158
      %v1234 = vadd.f32 %v1024, %v1160
      %v1235 = vadd.f32 %v1025, %v1229
      %v1236 = vadd.f32 %v1026, %v1231
      %v1237 = vxor.u32 %v1233, 2147483648
      %v1238 = vxor.u32 %v1234, 2147483648
      %v1239 = vxor.u32 %v1235, 2147483648
      %v1240 = vmul.f32 %v1237, 1.442695
      %v1241 = vpow.pop %v1240
      %v1242 = vmul.f32 %v1238, 1.442695
      %v1243 = vpow.pop %v1242
      %v1244 = vmul.f32 %v1239, 1.442695
      %v1245 = vpow.pop %v1244
      %v1246 = vadd.f32 %v1241, 1.0
      %v1247 = vadd.f32 %v1243, 1.0
      %v1248 = vadd.f32 %v1245, 1.0
      %v1249 = vrcp.pop %v1246
      %v1250 = vmul.f32 1.0, %v1249
      %v1251 = vrcp.pop %v1247
      %v1252 = vmul.f32 1.0, %v1251
      %v1253 = vrcp.pop %v1248
      %v1254 = vmul.f32 1.0, %v1253
      %v1255 = vtanh.pop %v1236
      %v1256 = vmul.f32 %v1252, %v1017
      %v1257 = vmul.f32 %v1250, %v1255
      %v1258 = vadd.f32 %v1256, %v1257
      %v1259 = vtanh.pop %v1258
      %v1260 = vmul.f32 %v1254, %v1259
      %s1261 = scalar_lea.vmem %s248, 16
      %1262 = vst [vmem:[%s1261] sm:$0xff] %v1260
      %s1263 = scalar_lea.vmem [#allocation2], 96
      %v1264 = vld [vmem:[%s1263] sm:$0xff]
      %v1265 = vld [vmem:[%s1263 + $0x8] sm:$0xff]
      %v1266 = vld [vmem:[%s1263 + $0x10] sm:$0xff]
      %v1267 = vld [vmem:[%s1263 + $0x18] sm:$0xff]
      %v1268 = vld [vmem:[%s2] sm:$0xff]
      %v1269 = vld [vmem:[%s2 + $0x8] sm:$0xff]
      %v1270 = vld [vmem:[%s2 + $0x10] sm:$0xff]
      %v1271 = vld [vmem:[%s2 + $0x18] sm:$0xff]
      %v1272 = vld [vmem:[%s2 + $0x20] sm:$0xff]
      %v1273 = vld [vmem:[%s2 + $0x28] sm:$0xff]
      %v1274 = vld [vmem:[%s2 + $0x30] sm:$0xff]
      %v1275 = vld [vmem:[%s2 + $0x38] sm:$0xff]
      %v1276 = vld [vmem:[%s2 + $0x40] sm:$0xff]
      %v1277 = vld [vmem:[%s2 + $0x48] sm:$0xff]
      %v1278 = vld [vmem:[%s2 + $0x50] sm:$0xff]
      %v1279 = vld [vmem:[%s2 + $0x58] sm:$0xff]
      %v1280 = vld [vmem:[%s2 + $0x60] sm:$0xff]
      %v1281 = vld [vmem:[%s2 + $0x68] sm:$0xff]
      %v1282 = vld [vmem:[%s2 + $0x70] sm:$0xff]
      %v1283 = vld [vmem:[%s2 + $0x78] sm:$0xff]
      %v1284 = vld [vmem:[%s2 + $0x80] sm:$0xff]
      %v1285 = vld [vmem:[%s2 + $0x88] sm:$0xff]
      %v1286 = vld [vmem:[%s2 + $0x90] sm:$0xff]
      %v1287 = vld [vmem:[%s2 + $0x98] sm:$0xff]
      %v1288 = vld [vmem:[%s2 + $0xa0] sm:$0xff]
      %v1289 = vld [vmem:[%s2 + $0xa8] sm:$0xff]
      %v1290 = vld [vmem:[%s2 + $0xb0] sm:$0xff]
      %v1291 = vld [vmem:[%s2 + $0xb8] sm:$0xff]
      %v1292 = vld [vmem:[%s2 + $0xc0] sm:$0xff]
      %v1293 = vld [vmem:[%s2 + $0xc8] sm:$0xff]
      %v1294 = vld [vmem:[%s2 + $0xd0] sm:$0xff]
      %v1295 = vld [vmem:[%s2 + $0xd8] sm:$0xff]
      %v1296 = vld [vmem:[%s2 + $0xe0] sm:$0xff]
      %v1297 = vld [vmem:[%s2 + $0xe8] sm:$0xff]
      %v1298 = vld [vmem:[%s2 + $0xf0] sm:$0xff]
      %v1299 = vld [vmem:[%s2 + $0xf8] sm:$0xff]
      %v1300 = vld [vmem:[%s2 + $0x100] sm:$0xff]
      %v1301 = vld [vmem:[%s2 + $0x108] sm:$0xff]
      %v1302 = vld [vmem:[%s2 + $0x110] sm:$0xff]
      %v1303 = vld [vmem:[%s2 + $0x118] sm:$0xff]
      %v1304 = vld [vmem:[%s2 + $0x120] sm:$0xff]
      %v1305 = vld [vmem:[%s2 + $0x128] sm:$0xff]
      %v1306 = vld [vmem:[%s2 + $0x130] sm:$0xff]
      %v1307 = vld [vmem:[%s2 + $0x138] sm:$0xff]
      %v1308 = vld [vmem:[%s2 + $0x140] sm:$0xff]
      %v1309 = vld [vmem:[%s2 + $0x148] sm:$0xff]
      %v1310 = vld [vmem:[%s2 + $0x150] sm:$0xff]
      %v1311 = vld [vmem:[%s2 + $0x158] sm:$0xff]
      %v1312 = vld [vmem:[%s2 + $0x160] sm:$0xff]
      %v1313 = vld [vmem:[%s2 + $0x168] sm:$0xff]
      %v1314 = vld [vmem:[%s2 + $0x170] sm:$0xff]
      %v1315 = vld [vmem:[%s2 + $0x178] sm:$0xff]
      %v1316 = vld [vmem:[%s2 + $0x180] sm:$0xff]
      %v1317 = vld [vmem:[%s2 + $0x188] sm:$0xff]
      %v1318 = vld [vmem:[%s2 + $0x190] sm:$0xff]
      %v1319 = vld [vmem:[%s2 + $0x198] sm:$0xff]
      %v1320 = vld [vmem:[%s2 + $0x1a0] sm:$0xff]
      %v1321 = vld [vmem:[%s2 + $0x1a8] sm:$0xff]
      %v1322 = vld [vmem:[%s2 + $0x1b0] sm:$0xff]
      %v1323 = vld [vmem:[%s2 + $0x1b8] sm:$0xff]
      %v1324 = vld [vmem:[%s2 + $0x1c0] sm:$0xff]
      %v1325 = vld [vmem:[%s2 + $0x1c8] sm:$0xff]
      %v1326 = vld [vmem:[%s2 + $0x1d0] sm:$0xff]
      %v1327 = vld [vmem:[%s2 + $0x1d8] sm:$0xff]
      %v1328 = vld [vmem:[%s2 + $0x1e0] sm:$0xff]
      %v1329 = vld [vmem:[%s2 + $0x1e8] sm:$0xff]
      %v1330 = vld [vmem:[%s2 + $0x1f0] sm:$0xff]
      %v1331 = vld [vmem:[%s2 + $0x1f8] sm:$0xff]
      %1332 = vmatprep.subr.mxu0 %v1269
      %1333 = vmatpush1.msra.mxu0 %v1268
      %1334 = vmatprep.subr.mxu0 %v1273
      %1335 = vmatpush1.msra.mxu0 %v1272
      %1336 = vmatprep.subr.mxu0 %v1277
      %1337 = vmatpush1.msra.mxu0 %v1276
      %1338 = vmatprep.subr.mxu0 %v1281
      %1339 = vmatpush1.msra.mxu0 %v1280
      %1340 = vmatprep.subr.mxu0 %v1285
      %1341 = vmatpush1.msra.mxu0 %v1284
      %1342 = vmatprep.subr.mxu0 %v1289
      %1343 = vmatpush1.msra.mxu0 %v1288
      %1344 = vmatprep.subr.mxu0 %v1293
      %1345 = vmatpush1.msra.mxu0 %v1292
      %1346 = vmatprep.subr.mxu0 %v1297
      %1347 = vmatpush1.msra.mxu0 %v1296
      %1348 = vmatprep.subr.mxu0 %v1301
      %1349 = vmatpush1.msra.mxu0 %v1300
      %1350 = vmatprep.subr.mxu0 %v1305
      %1351 = vmatpush1.msra.mxu0 %v1304
      %1352 = vmatprep.subr.mxu0 %v1309
      %1353 = vmatpush1.msra.mxu0 %v1308
      %1354 = vmatprep.subr.mxu0 %v1313
      %1355 = vmatpush1.msra.mxu0 %v1312
      %1356 = vmatprep.subr.mxu0 %v1317
      %1357 = vmatpush1.msra.mxu0 %v1316
      %1358 = vmatprep.subr.mxu0 %v1321
      %1359 = vmatpush1.msra.mxu0 %v1320
      %1360 = vmatprep.subr.mxu0 %v1325
      %1361 = vmatpush1.msra.mxu0 %v1324
      %1362 = vmatprep.subr.mxu0 %v1329
      %1363 = vmatpush1.msra.mxu0 %v1328
      %1364 = vmatprep.subr.mxu0 0.0
      %1365 = vmatpush1.msra.mxu0 0.0
      %1366 = vmatprep.subr.mxu0 0.0
      %1367 = vmatpush1.msra.mxu0 0.0
      %1368 = vmatprep.subr.mxu0 0.0
      %1369 = vmatpush1.msra.mxu0 0.0
      %1370 = vmatprep.subr.mxu0 0.0
      %1371 = vmatpush1.msra.mxu0 0.0
      %1372 = vmatprep.subr.mxu0 0.0
      %1373 = vmatpush1.msra.mxu0 0.0
      %1374 = vmatprep.subr.mxu0 0.0
      %1375 = vmatpush1.msra.mxu0 0.0
      %1376 = vmatprep.subr.mxu0 0.0
      %1377 = vmatpush1.msra.mxu0 0.0
      %1378 = vmatprep.subr.mxu0 0.0
      %1379 = vmatpush1.msra.mxu0 0.0
      %1380 = vmatprep.subr.mxu0 0.0
      %1381 = vmatpush1.msra.mxu0 0.0
      %1382 = vmatprep.subr.mxu0 0.0
      %1383 = vmatpush1.msra.mxu0 0.0
      %1384 = vmatprep.subr.mxu0 0.0
      %1385 = vmatpush1.msra.mxu0 0.0
      %1386 = vmatprep.subr.mxu0 0.0
      %1387 = vmatpush1.msra.mxu0 0.0
      %1388 = vmatprep.subr.mxu0 0.0
      %1389 = vmatpush1.msra.mxu0 0.0
      %1390 = vmatprep.subr.mxu0 0.0
      %1391 = vmatpush1.msra.mxu0 0.0
      %1392 = vmatprep.subr.mxu0 0.0
      %1393 = vmatpush1.msra.mxu0 0.0
      %1394 = vmatprep.subr.mxu0 0.0
      %1395 = vmatpush1.msra.mxu0 0.0
      %1396 = vmatprep.mubr.f32.mxu0 0.0
      %1397 = vmatmul.mubr.f32.gmra.mrb[0].mxu0 %v1260
      %v1398 = vpop.f32.mrb[0].mxu0
      %v1399 = vadd.f32 0.0, %v1398
      %v1400 = vpop.f32.mrb[0].mxu0
      %v1401 = vadd.f32 0.0, %v1400
      %1402 = vdwg.mxu0
      %1403 = vmatprep.subr.mxu0 %v1271
      %1404 = vmatpush1.msra.mxu0 %v1270
      %1405 = vmatprep.subr.mxu0 %v1275
      %1406 = vmatpush1.msra.mxu0 %v1274
      %1407 = vmatprep.subr.mxu0 %v1279
      %1408 = vmatpush1.msra.mxu0 %v1278
      %1409 = vmatprep.subr.mxu0 %v1283
      %1410 = vmatpush1.msra.mxu0 %v1282
      %1411 = vmatprep.subr.mxu0 %v1287
      %1412 = vmatpush1.msra.mxu0 %v1286
      %1413 = vmatprep.subr.mxu0 %v1291
      %1414 = vmatpush1.msra.mxu0 %v1290
      %1415 = vmatprep.subr.mxu0 %v1295
      %1416 = vmatpush1.msra.mxu0 %v1294
      %1417 = vmatprep.subr.mxu0 %v1299
      %1418 = vmatpush1.msra.mxu0 %v1298
      %1419 = vmatprep.subr.mxu0 %v1303
      %1420 = vmatpush1.msra.mxu0 %v1302
      %1421 = vmatprep.subr.mxu0 %v1307
      %1422 = vmatpush1.msra.mxu0 %v1306
      %1423 = vmatprep.subr.mxu0 %v1311
      %1424 = vmatpush1.msra.mxu0 %v1310
      %1425 = vmatprep.subr.mxu0 %v1315
      %1426 = vmatpush1.msra.mxu0 %v1314
      %1427 = vmatprep.subr.mxu0 %v1319
      %1428 = vmatpush1.msra.mxu0 %v1318
      %1429 = vmatprep.subr.mxu0 %v1323
      %1430 = vmatpush1.msra.mxu0 %v1322
      %1431 = vmatprep.subr.mxu0 %v1327
      %1432 = vmatpush1.msra.mxu0 %v1326
      %1433 = vmatprep.subr.mxu0 %v1331
      %1434 = vmatpush1.msra.mxu0 %v1330
      %1435 = vmatprep.subr.mxu0 0.0
      %1436 = vmatpush1.msra.mxu0 0.0
      %1437 = vmatprep.subr.mxu0 0.0
      %1438 = vmatpush1.msra.mxu0 0.0
      %1439 = vmatprep.subr.mxu0 0.0
      %1440 = vmatpush1.msra.mxu0 0.0
      %1441 = vmatprep.subr.mxu0 0.0
      %1442 = vmatpush1.msra.mxu0 0.0
      %1443 = vmatprep.subr.mxu0 0.0
      %1444 = vmatpush1.msra.mxu0 0.0
      %1445 = vmatprep.subr.mxu0 0.0
      %1446 = vmatpush1.msra.mxu0 0.0
      %1447 = vmatprep.subr.mxu0 0.0
      %1448 = vmatpush1.msra.mxu0 0.0
      %1449 = vmatprep.subr.mxu0 0.0
      %1450 = vmatpush1.msra.mxu0 0.0
      %1451 = vmatprep.subr.mxu0 0.0
      %1452 = vmatpush1.msra.mxu0 0.0
      %1453 = vmatprep.subr.mxu0 0.0
      %1454 = vmatpush1.msra.mxu0 0.0
      %1455 = vmatprep.subr.mxu0 0.0
      %1456 = vmatpush1.msra.mxu0 0.0
      %1457 = vmatprep.subr.mxu0 0.0
      %1458 = vmatpush1.msra.mxu0 0.0
      %1459 = vmatprep.subr.mxu0 0.0
      %1460 = vmatpush1.msra.mxu0 0.0
      %1461 = vmatprep.subr.mxu0 0.0
      %1462 = vmatpush1.msra.mxu0 0.0
      %1463 = vmatprep.subr.mxu0 0.0
      %1464 = vmatpush1.msra.mxu0 0.0
      %1465 = vmatprep.subr.mxu0 0.0
      %1466 = vmatpush1.msra.mxu0 0.0
      %1467 = vmatprep.mubr.f32.mxu0 0.0
      %1468 = vmatmul.mubr.f32.gmra.mrb[0].mxu0 %v1260
      %v1469 = vpop.f32.mrb[0].mxu0
      %v1470 = vadd.f32 0.0, %v1469
      %v1471 = vpop.f32.mrb[0].mxu0
      %v1472 = vadd.f32 0.0, %v1471
      %1473 = vdwg.mxu0
      %v1474 = vadd.f32 %v1264, %v1399
      %v1475 = vadd.f32 %v1265, %v1401
      %v1476 = vadd.f32 %v1266, %v1470
      %v1477 = vadd.f32 %v1267, %v1472
      %v1478 = vxor.u32 %v1474, 2147483648
      %v1479 = vxor.u32 %v1475, 2147483648
      %v1480 = vxor.u32 %v1476, 2147483648
      %v1481 = vmul.f32 %v1478, 1.442695
      %v1482 = vpow.pop %v1481
      %v1483 = vmul.f32 %v1479, 1.442695
      %v1484 = vpow.pop %v1483
      %v1485 = vmul.f32 %v1480, 1.442695
      %v1486 = vpow.pop %v1485
      %v1487 = vadd.f32 %v1482, 1.0
      %v1488 = vadd.f32 %v1484, 1.0
      %v1489 = vadd.f32 %v1486, 1.0
      %v1490 = vrcp.pop %v1487
      %v1491 = vmul.f32 1.0, %v1490
      %v1492 = vrcp.pop %v1488
      %v1493 = vmul.f32 1.0, %v1492
      %v1494 = vrcp.pop %v1489
      %v1495 = vmul.f32 1.0, %v1494
      %v1496 = vtanh.pop %v1477
      %v1497 = vmul.f32 %v1493, %v1258
      %v1498 = vmul.f32 %v1491, %v1496
      %v1499 = vadd.f32 %v1497, %v1498
      %v1500 = vtanh.pop %v1499
      %v1501 = vmul.f32 %v1495, %v1500
      %s1502 = scalar_lea.vmem %s248, 24
      %1503 = vst [vmem:[%s1502] sm:$0xff] %v1501
      %1504 = vst [vmem:[#allocation3] sm:$0xff] %v1501
      %1505 = vst [vmem:[#allocation4] sm:$0xff] %v1499
      %1506 = vst [vmem:[%s5] sm:$0xff] %v1501
      %1507 = vst [vmem:[%s6] sm:$0xff] %v1499
      %s1508 = smul.u32 4, %s18
      %p1509 = scmp.lt.s32.totalorder %s1508, 7
      %s1510 = scalar_select %p1509, %s1508, 7
      %s1511 = smul.addr %s1510, 8
      %s1512 = scalar_lea.vmem %s4, %s1511
      // Predicated region
      $region41: #{encoder_forward.2} parent=35 // pred_check
        %p1513 = pneg %p125
      $region42: #{encoder_forward.2} parent=35 // pred_check_branch
        %1515 = sbr.rel (%p1513) target = $region44
      $region43: #{encoder_forward.2} parent=35 // pred_region
        %s1516 = smul.u32 4, %s18
      $region44: #{encoder_forward.2} parent=35 // pred_fallthru
        _
      // Predicated region
      $region45: #{encoder_forward.2} parent=35 // pred_check
        %p1517 = pneg %p146
      $region46: #{encoder_forward.2} parent=35 // pred_check_branch
        %1519 = sbr.rel (%p1517) target = $region48
      $region47: #{encoder_forward.2} parent=35 // pred_region
        _
      $region48: #{encoder_forward.2} parent=35 // pred_fallthru
        _
      // Predicated region
      $region49: #{encoder_forward.2} parent=35 // pred_check
        %p1520 = pneg %p167
      $region50: #{encoder_forward.2} parent=35 // pred_check_branch
        %1522 = sbr.rel (%p1520) target = $region52
      $region51: #{encoder_forward.2} parent=35 // pred_region
        _
      $region52: #{encoder_forward.2} parent=35 // pred_fallthru
        _
      // Predicated region
      $region53: #{encoder_forward.2} parent=35 // pred_check
        %p1523 = pneg %p146
      $region54: #{encoder_forward.2} parent=35 // pred_check_branch
        %1525 = sbr.rel (%p1523) target = $region56
      $region55: #{encoder_forward.2} parent=35 // pred_region
        _
      $region56: #{encoder_forward.2} parent=35 // pred_fallthru
        _
      // Predicated region
      $region57: #{encoder_forward.2} parent=35 // pred_check
        %p1526 = pneg %p167
      $region58: #{encoder_forward.2} parent=35 // pred_check_branch
        %1528 = sbr.rel (%p1526) target = $region60
      $region59: #{encoder_forward.2} parent=35 // pred_region
        _
      $region60: #{encoder_forward.2} parent=35 // pred_fallthru
        _
    $region36: #{encoder_forward.2} parent=5 // pred_fallthru
      _
    %p1529 = scmp.le.s32.totalorder 2, %s13
    // Predicated region
    $region61: #{encoder_forward.2} parent=5 // pred_check
      %p1530 = pneg %p1529
    $region62: #{encoder_forward.2} parent=5 // pred_check_branch
      %1532 = sbr.rel (%p1530) target = $region64
    $region63: #{encoder_forward.2} parent=5 // pred_region
      %s1533 = ssub.s32 %s13, 2
      // Predicated region
      $region65: #{encoder_forward.2} parent=63 // pred_check
        %p1534 = pneg %p131
      $region66: #{encoder_forward.2} parent=63 // pred_check_branch
        %1536 = sbr.rel (%p1534) target = $region68
      $region67: #{encoder_forward.2} parent=63 // pred_region
        %s1537 = smul.u32 4, %s19
        %p1538 = scmp.lt.s32.totalorder %s1537, 7
        %s1539 = scalar_select %p1538, %s1537, 7
        %s1540 = smul.addr %s1539, 8
        %s1541 = scalar_lea.vmem %s4, %s1540
      $region68: #{encoder_forward.2} parent=63 // pred_fallthru
        _
    $region64: #{encoder_forward.2} parent=5 // pred_fallthru
      _
  $region6: #{encoder_forward.2} parent=0 // loop_footer
    %s17 = sadd.s32 1, %s13
  $region7: #{encoder_forward.2} parent=0 // loop_footer_branch
    %12 = sbr.rel target = $region3
  $region8: #{encoder_forward.2} parent=0 // loop_exit
    _

</llo_original>
